<compile_context>
chip_gen: v6e
topology: v6e:2x2x1
jax: 0.10.0
libtpu: 0.0.40
codegen_flags: <defaults>
</compile_context>

<pallas_src>
import jax
import jax.numpy as jnp
from jax.experimental import pallas as pl
from jax.experimental.pallas import tpu as pltpu

# ---------------- configuration (small, consistent with the module) ----------------
B = 2            # batch_size
S = 8            # decoder seq_length
M = 8            # memory length
UNITS = 32       # units
MEM_UNITS = 32   # mem_units (defaults to units)
HIDDEN = 64      # hidden_size of the FFN
HEADS = 4        # num_heads
HEAD_DIM = UNITS // HEADS
EPS = 1e-5       # layer_norm_eps

BS = B * S       # folded decoder rows
BM = B * M       # folded memory rows

# lane offsets inside the packed "x-side" weight slab (UNITS, 256)
_QKV_OFF = 0                       # (UNITS, 3*UNITS)   self-attn fused QKV
_PROJ_IN_OFF = 3 * UNITS           # (UNITS, UNITS)     self-attn out proj
_Q_OFF = 4 * UNITS                 # (UNITS, UNITS)     cross-attn Q
_PROJ_INTER_OFF = 5 * UNITS        # (UNITS, UNITS)     cross-attn out proj
_FFN1_OFF = 6 * UNITS              # (UNITS, HIDDEN)    FFN up-proj
_WX_COLS = 6 * UNITS + HIDDEN      # 256

# row indices inside the packed bias / LayerNorm slab (16, 128)
_B_QKV, _B_PROJ_IN, _B_Q, _B_KV, _B_PROJ_INTER, _B_FFN1, _B_FFN2 = range(7)
_LN_IN_G, _LN_IN_B, _LN_INTER_G, _LN_INTER_B, _LN_FFN_G, _LN_FFN_B = range(7, 13)
_BIAS_ROWS = 16


# ---------------- in-kernel helpers ----------------
def _layer_norm(x, g, b):
    mu = jnp.mean(x, axis=-1, keepdims=True)
    xc = x - mu
    var = jnp.mean(xc * xc, axis=-1, keepdims=True)
    return xc * jax.lax.rsqrt(var + EPS) * g + b


def _mha_proj(q_src, q_off, kv_src, k_off, v_off, mask, w_proj, b_proj):
    """Multi-head attention + output projection, batch folded into rows.

    q_src : (Nq, *) heads packed along lanes starting at q_off
    kv_src: (Nk, *) K heads start at k_off, V heads start at v_off
    mask  : (Nq, Nk) 1 = attend, 0 = masked (already block-diagonal over batch)
    w_proj: (UNITS, UNITS) output projection; head outputs are folded into it
            (sum_h O_h @ w_proj[h*HD:(h+1)*HD, :]) so no lane concatenate is needed.
    """
    n_q = q_src.shape[0]
    scale = jnp.float32(1.0 / (HEAD_DIM ** 0.5))
    neg = jnp.float32(-1e30)
    out = jnp.zeros((n_q, UNITS), jnp.float32)
    for h in range(HEADS):
        q_lo = q_off + h * HEAD_DIM
        k_lo = k_off + h * HEAD_DIM
        v_lo = v_off + h * HEAD_DIM
        qh = q_src[:, q_lo:q_lo + HEAD_DIM]
        kh = kv_src[:, k_lo:k_lo + HEAD_DIM]
        vh = kv_src[:, v_lo:v_lo + HEAD_DIM]
        # scores[t, s] = qh[t, :] . kh[s, :]   (contract last dims, no transpose)
        s = jax.lax.dot_general(qh, kh, (((1,), (1,)), ((), ())),
                                preferred_element_type=jnp.float32) * scale
        s = jnp.where(mask > 0, s, neg)
        s = s - jnp.max(s, axis=-1, keepdims=True)
        p = jnp.exp(s)
        p = p * pl.reciprocal(jnp.sum(p, axis=-1, keepdims=True), approx=True)
        oh = jnp.dot(p, vh, preferred_element_type=jnp.float32)          # (Nq, HD)
        out = out + jnp.dot(oh, w_proj[h * HEAD_DIM:(h + 1) * HEAD_DIM, :],
                            preferred_element_type=jnp.float32)          # (Nq, UNITS)
    return out + b_proj


# ---------------- the kernel: whole layer, whole batch, one grid step ----------------
def decoder_layer_kernel(x_ref, mem_ref, smask_ref, mmask_ref,
                         wx_ref, wmem_ref, wffn2_ref, bias_ref, out_ref):
    x = x_ref[...]          # (B*S, UNITS)
    mem = mem_ref[...]      # (B*M, MEM_UNITS)
    smask = smask_ref[...]  # (B*S, B*S)  block-diag causal
    mmask = mmask_ref[...]  # (B*S, B*M)  block-diag memory mask
    wx = wx_ref[...]        # (UNITS, 256) packed weights
    bias = bias_ref[...]    # (16, 128)   packed biases + LN params

    def brow(r, n):
        return bias[r:r + 1, 0:n]   # (1, n) -> broadcasts over rows

    # ---- self attention block (pre_norm=False -> post LayerNorm) ----
    residual = x
    qkv = jnp.dot(x, wx[:, _QKV_OFF:_QKV_OFF + 3 * UNITS],
                  preferred_element_type=jnp.float32) + brow(_B_QKV, 3 * UNITS)
    attn = _mha_proj(qkv, 0, qkv, UNITS, 2 * UNITS, smask,
                     wx[:, _PROJ_IN_OFF:_PROJ_IN_OFF + UNITS],
                     brow(_B_PROJ_IN, UNITS))
    x = attn + residual                         # dropout -> identity
    x = _layer_norm(x, brow(_LN_IN_G, UNITS), brow(_LN_IN_B, UNITS))

    # ---- cross (inter) attention block ----
    residual = x
    q = jnp.dot(x, wx[:, _Q_OFF:_Q_OFF + UNITS],
                preferred_element_type=jnp.float32) + brow(_B_Q, UNITS)
    kv = jnp.dot(mem, wmem_ref[...],
                 preferred_element_type=jnp.float32) + brow(_B_KV, 2 * UNITS)
    attn = _mha_proj(q, 0, kv, 0, UNITS, mmask,
                     wx[:, _PROJ_INTER_OFF:_PROJ_INTER_OFF + UNITS],
                     brow(_B_PROJ_INTER, UNITS))
    x = attn + residual                         # dropout -> identity
    x = _layer_norm(x, brow(_LN_INTER_G, UNITS), brow(_LN_INTER_B, UNITS))

    # ---- PositionwiseFFN (relu, gated_proj=False, post LayerNorm) ----
    residual = x
    h = jnp.dot(x, wx[:, _FFN1_OFF:_FFN1_OFF + HIDDEN],
                preferred_element_type=jnp.float32) + brow(_B_FFN1, HIDDEN)
    h = jnp.maximum(h, jnp.float32(0.0))
    h = jnp.dot(h, wffn2_ref[...],
                preferred_element_type=jnp.float32) + brow(_B_FFN2, UNITS)
    x = h + residual                            # dropout -> identity
    x = _layer_norm(x, brow(_LN_FFN_G, UNITS), brow(_LN_FFN_B, UNITS))

    out_ref[...] = x


# ---------------- wrapper ----------------
def _block_diag_mask(mask):
    """(B, Tq, Tk) per-batch mask -> (B*Tq, B*Tk) block-diagonal flat mask."""
    b, tq, tk = mask.shape
    eye = jnp.eye(b, dtype=mask.dtype)
    flat = mask[:, :, None, :] * eye[:, None, :, None]   # (B, Tq, B, Tk)
    return flat.reshape(b * tq, b * tk)


def _pad_row(p, width=128):
    p = p.reshape(1, -1).astype(jnp.float32)
    return jnp.pad(p, ((0, 0), (0, width - p.shape[1])))


def transformer_decoder_layer(data, mem, self_causal_mask, mem_attn_mask, params):
    # fold batch into the sublane (row) axis
    x_flat = data.reshape(BS, UNITS)
    mem_flat = mem.reshape(BM, MEM_UNITS)
    smask = _block_diag_mask(self_causal_mask.astype(jnp.float32))   # (BS, BS)
    mmask = _block_diag_mask(mem_attn_mask.astype(jnp.float32))      # (BS, BM)

    # pack weights into 3 slabs
    w_x = jnp.concatenate(
        [params["qkv_w"], params["proj_in_w"], params["q_w"],
         params["proj_inter_w"], params["ffn1_w"]], axis=1)           # (UNITS, 256)
    w_mem = jnp.concatenate([params["k_w"], params["v_w"]], axis=1)   # (MEM_UNITS, 64)
    w_ffn2 = params["ffn2_w"]                                         # (HIDDEN, UNITS)

    # pack every bias + LayerNorm gamma/beta into one (16, 128) slab
    bias_rows = [
        _pad_row(params["qkv_b"]),                                          # 0
        _pad_row(params["proj_in_b"]),                                      # 1
        _pad_row(params["q_b"]),                                            # 2
        _pad_row(jnp.concatenate([params["k_b"], params["v_b"]], axis=1)),  # 3
        _pad_row(params["proj_inter_b"]),                                   # 4
        _pad_row(params["ffn1_b"]),                                         # 5
        _pad_row(params["ffn2_b"]),                                         # 6
        _pad_row(params["ln_in_g"]), _pad_row(params["ln_in_b"]),           # 7, 8
        _pad_row(params["ln_inter_g"]), _pad_row(params["ln_inter_b"]),     # 9, 10
        _pad_row(params["ln_ffn_g"]), _pad_row(params["ln_ffn_b"]),         # 11, 12
    ]
    bias_slab = jnp.concatenate(
        bias_rows + [jnp.zeros((_BIAS_ROWS - len(bias_rows), 128), jnp.float32)], axis=0)

    inputs = [x_flat, mem_flat, smask, mmask, w_x, w_mem, w_ffn2, bias_slab]

    def full_spec(a):
        nd = a.ndim
        return pl.BlockSpec(tuple(a.shape), lambda i, _nd=nd: (0,) * _nd)

    out_flat = pl.pallas_call(
        decoder_layer_kernel,
        out_shape=jax.ShapeDtypeStruct((BS, UNITS), jnp.float32),
        grid_spec=pltpu.PrefetchScalarGridSpec(
            num_scalar_prefetch=0,
            grid=(1,),                                   # single step: batch is folded in
            in_specs=[full_spec(a) for a in inputs],
            out_specs=pl.BlockSpec((BS, UNITS), lambda i: (0, 0)),
        ),
        compiler_params=pltpu.CompilerParams(
            dimension_semantics=("arbitrary",)),
    )(*inputs)

    return out_flat.reshape(B, S, UNITS)


# ---------------- pure-JAX reference (same math) ----------------
def reference(data, mem, causal, mmask, p):
    def ln(x, g, b):
        mu = x.mean(-1, keepdims=True)
        var = ((x - mu) ** 2).mean(-1, keepdims=True)
        return (x - mu) / jnp.sqrt(var + EPS) * g + b

    def mha(q, k, v, mask):
        Bq, Tq, _ = q.shape
        Tk = k.shape[1]
        qh = q.reshape(Bq, Tq, HEADS, HEAD_DIM)
        kh = k.reshape(Bq, Tk, HEADS, HEAD_DIM)
        vh = v.reshape(Bq, Tk, HEADS, HEAD_DIM)
        sc = jnp.einsum("bqhd,bkhd->bhqk", qh, kh) / jnp.sqrt(HEAD_DIM)
        sc = jnp.where(mask[:, None] > 0, sc, -1e30)
        w = jax.nn.softmax(sc, axis=-1)
        o = jnp.einsum("bhqk,bkhd->bqhd", w, vh)
        return o.reshape(Bq, Tq, UNITS)

    x = data
    residual = x
    qkv = x @ p["qkv_w"] + p["qkv_b"]
    q, k, v = qkv[..., :UNITS], qkv[..., UNITS:2 * UNITS], qkv[..., 2 * UNITS:]
    out = mha(q, k, v, causal) @ p["proj_in_w"] + p["proj_in_b"]
    x = ln(out + residual, p["ln_in_g"], p["ln_in_b"])

    residual = x
    q = x @ p["q_w"] + p["q_b"]
    k = mem @ p["k_w"] + p["k_b"]
    v = mem @ p["v_w"] + p["v_b"]
    out = mha(q, k, v, mmask) @ p["proj_inter_w"] + p["proj_inter_b"]
    x = ln(out + residual, p["ln_inter_g"], p["ln_inter_b"])

    residual = x
    h = jnp.maximum(x @ p["ffn1_w"] + p["ffn1_b"], 0.0)
    h = h @ p["ffn2_w"] + p["ffn2_b"]
    x = ln(h + residual, p["ln_ffn_g"], p["ln_ffn_b"])
    return x


# ---------------- main ----------------
if __name__ == "__main__":
    key = jax.random.PRNGKey(0)
    keys = jax.random.split(key, 16)

    def w(k, shape, scale=0.08):
        return (scale * jax.random.normal(k, shape)).astype(jnp.float32)

    # parameters (weights stored as (in, out); biases zero per init_weights; LN gamma=1 beta=0)
    params = {
        "qkv_w": w(keys[0], (UNITS, 3 * UNITS)),
        "qkv_b": jnp.zeros((1, 3 * UNITS), jnp.float32),
        "proj_in_w": w(keys[1], (UNITS, UNITS)),
        "proj_in_b": jnp.zeros((1, UNITS), jnp.float32),
        "q_w": w(keys[2], (UNITS, UNITS)),
        "q_b": jnp.zeros((1, UNITS), jnp.float32),
        "k_w": w(keys[3], (MEM_UNITS, UNITS)),
        "k_b": jnp.zeros((1, UNITS), jnp.float32),
        "v_w": w(keys[4], (MEM_UNITS, UNITS)),
        "v_b": jnp.zeros((1, UNITS), jnp.float32),
        "proj_inter_w": w(keys[5], (UNITS, UNITS)),
        "proj_inter_b": jnp.zeros((1, UNITS), jnp.float32),
        "ln_in_g": jnp.ones((1, UNITS), jnp.float32),
        "ln_in_b": jnp.zeros((1, UNITS), jnp.float32),
        "ln_inter_g": jnp.ones((1, UNITS), jnp.float32),
        "ln_inter_b": jnp.zeros((1, UNITS), jnp.float32),
        "ffn1_w": w(keys[6], (UNITS, HIDDEN)),
        "ffn1_b": jnp.zeros((1, HIDDEN), jnp.float32),
        "ffn2_w": w(keys[7], (HIDDEN, UNITS)),
        "ffn2_b": jnp.zeros((1, UNITS), jnp.float32),
        "ln_ffn_g": jnp.ones((1, UNITS), jnp.float32),
        "ln_ffn_b": jnp.zeros((1, UNITS), jnp.float32),
    }

    # inputs (layout 'NT')
    data = jax.random.normal(keys[8], (B, S, UNITS), jnp.float32)
    mem = jax.random.normal(keys[9], (B, M, MEM_UNITS), jnp.float32)

    # causal mask: token j attends to tokens <= j
    causal = jnp.tril(jnp.ones((S, S), jnp.float32))
    self_causal_mask = jnp.broadcast_to(causal, (B, S, S)).astype(jnp.float32)

    # memory mask: per-batch valid memory lengths [M, M-2]
    mem_valid = jnp.array([M, M - 2], jnp.int32)
    mem_attn_mask = (jnp.arange(M)[None, None, :] < mem_valid[:, None, None])
    mem_attn_mask = jnp.broadcast_to(mem_attn_mask, (B, S, M)).astype(jnp.float32)

    out = transformer_decoder_layer(data, mem, self_causal_mask, mem_attn_mask, params)
    out = jax.block_until_ready(out)

    ref = reference(data, mem, self_causal_mask, mem_attn_mask, params)
    assert out.shape == (B, S, UNITS)
    # tolerance relaxed slightly vs exact-divide version: the softmax denominator
    # uses the EUP approximate reciprocal (pl.reciprocal(..., approx=True)).
    assert jnp.allclose(out, ref, atol=5e-3, rtol=5e-3), "mismatch vs reference"

    print("KERNEL_OK")
</pallas_src>

<mosaic_0001>
module attributes {stable_mosaic.version = 11 : i64} {
  func.func @decoder_layer_kernel(%arg0: i32, %arg1: memref<16x32xf32, #tpu.memory_space<vmem>>, %arg2: memref<16x32xf32, #tpu.memory_space<vmem>>, %arg3: memref<16x16xf32, #tpu.memory_space<vmem>>, %arg4: memref<16x16xf32, #tpu.memory_space<vmem>>, %arg5: memref<32x256xf32, #tpu.memory_space<vmem>>, %arg6: memref<32x64xf32, #tpu.memory_space<vmem>>, %arg7: memref<64x32xf32, #tpu.memory_space<vmem>>, %arg8: memref<16x128xf32, #tpu.memory_space<vmem>>, %arg9: memref<16x32xf32, #tpu.memory_space<vmem>>) attributes {dimension_semantics = [#tpu.dimension_semantics<arbitrary>], iteration_bounds = array<i64: 1>, scalar_prefetch = 0 : i64, scratch_operands = 0 : i64, tpu.core_type = #tpu.core_type<tc>, window_params = [{pipeline_mode = #tpu.pipeline_mode<synchronous>, transform_indices = @transform_0, window_bounds = array<i64: 16, 32>}, {pipeline_mode = #tpu.pipeline_mode<synchronous>, transform_indices = @transform_1, window_bounds = array<i64: 16, 32>}, {pipeline_mode = #tpu.pipeline_mode<synchronous>, transform_indices = @transform_2, window_bounds = array<i64: 16, 16>}, {pipeline_mode = #tpu.pipeline_mode<synchronous>, transform_indices = @transform_3, window_bounds = array<i64: 16, 16>}, {pipeline_mode = #tpu.pipeline_mode<synchronous>, transform_indices = @transform_4, window_bounds = array<i64: 32, 256>}, {pipeline_mode = #tpu.pipeline_mode<synchronous>, transform_indices = @transform_5, window_bounds = array<i64: 32, 64>}, {pipeline_mode = #tpu.pipeline_mode<synchronous>, transform_indices = @transform_6, window_bounds = array<i64: 64, 32>}, {pipeline_mode = #tpu.pipeline_mode<synchronous>, transform_indices = @transform_7, window_bounds = array<i64: 16, 128>}, {pipeline_mode = #tpu.pipeline_mode<synchronous>, transform_indices = @transform_8, window_bounds = array<i64: 16, 32>}]} {
    %c0 = arith.constant 0 : index
    %c0_0 = arith.constant 0 : index
    %0 = vector.load %arg1[%c0, %c0_0] : memref<16x32xf32, #tpu.memory_space<vmem>>, vector<16x32xf32>
    %c0_1 = arith.constant 0 : index
    %c0_2 = arith.constant 0 : index
    %1 = vector.load %arg2[%c0_1, %c0_2] : memref<16x32xf32, #tpu.memory_space<vmem>>, vector<16x32xf32>
    %c0_3 = arith.constant 0 : index
    %c0_4 = arith.constant 0 : index
    %2 = vector.load %arg3[%c0_3, %c0_4] : memref<16x16xf32, #tpu.memory_space<vmem>>, vector<16x16xf32>
    %c0_5 = arith.constant 0 : index
    %c0_6 = arith.constant 0 : index
    %3 = vector.load %arg4[%c0_5, %c0_6] : memref<16x16xf32, #tpu.memory_space<vmem>>, vector<16x16xf32>
    %c0_7 = arith.constant 0 : index
    %c0_8 = arith.constant 0 : index
    %4 = vector.load %arg5[%c0_7, %c0_8] : memref<32x256xf32, #tpu.memory_space<vmem>>, vector<32x256xf32>
    %c0_9 = arith.constant 0 : index
    %c0_10 = arith.constant 0 : index
    %5 = vector.load %arg8[%c0_9, %c0_10] : memref<16x128xf32, #tpu.memory_space<vmem>>, vector<16x128xf32>
    %6 = vector.extract_strided_slice %4 {offsets = [0, 0], sizes = [32, 96], strides = [1, 1]} : vector<32x256xf32> to vector<32x96xf32>
    %cst = arith.constant dense<0.000000e+00> : vector<16x96xf32>
    %7 = tpu.matmul %0, %6, %cst {dimension_numbers = #tpu.dot_dimension_numbers<[1], [0], [0], [1], [0, 0, 1, 1], [], []>} : vector<16x32xf32>, vector<32x96xf32>, vector<16x96xf32> -> vector<16x96xf32>
    %8 = vector.extract_strided_slice %5 {offsets = [0, 0], sizes = [1, 96], strides = [1, 1]} : vector<16x128xf32> to vector<1x96xf32>
    %9 = vector.broadcast %8 : vector<1x96xf32> to vector<16x96xf32>
    %10 = arith.addf %7, %9 : vector<16x96xf32>
    %11 = vector.extract_strided_slice %4 {offsets = [0, 96], sizes = [32, 32], strides = [1, 1]} : vector<32x256xf32> to vector<32x32xf32>
    %12 = vector.extract_strided_slice %5 {offsets = [1, 0], sizes = [1, 32], strides = [1, 1]} : vector<16x128xf32> to vector<1x32xf32>
    %cst_11 = arith.constant 0.000000e+00 : f32
    %13 = vector.broadcast %cst_11 : f32 to vector<16x32xf32>
    %14 = vector.extract_strided_slice %10 {offsets = [0, 0], sizes = [16, 8], strides = [1, 1]} : vector<16x96xf32> to vector<16x8xf32>
    %15 = vector.extract_strided_slice %10 {offsets = [0, 32], sizes = [16, 8], strides = [1, 1]} : vector<16x96xf32> to vector<16x8xf32>
    %16 = vector.extract_strided_slice %10 {offsets = [0, 64], sizes = [16, 8], strides = [1, 1]} : vector<16x96xf32> to vector<16x8xf32>
    %cst_12 = arith.constant dense<0.000000e+00> : vector<16x16xf32>
    %17 = tpu.matmul %14, %15, %cst_12 {dimension_numbers = #tpu.dot_dimension_numbers<[1], [1], [0], [0], [0, 0, 1, 0], [], []>} : vector<16x8xf32>, vector<16x8xf32>, vector<16x16xf32> -> vector<16x16xf32>
    %cst_13 = arith.constant 0.353553385 : f32
    %18 = vector.broadcast %cst_13 : f32 to vector<16x16xf32>
    %19 = arith.mulf %17, %18 : vector<16x16xf32>
    %cst_14 = arith.constant 0.000000e+00 : f32
    %20 = vector.broadcast %cst_14 : f32 to vector<16x16xf32>
    %21 = arith.cmpf ogt, %2, %20 : vector<16x16xf32>
    %cst_15 = arith.constant -1.000000e+30 : f32
    %22 = vector.broadcast %cst_15 : f32 to vector<16x16xf32>
    %23 = arith.select %21, %19, %22 : vector<16x16xi1>, vector<16x16xf32>
    %cst_16 = arith.constant dense<0xFF800000> : vector<16xf32>
    %24 = vector.multi_reduction <maximumf>, %23, %cst_16 [1] : vector<16x16xf32> to vector<16xf32>
    %25 = vector.shape_cast %24 : vector<16xf32> to vector<16x1xf32>
    %26 = vector.broadcast %25 : vector<16x1xf32> to vector<16x16xf32>
    %27 = arith.subf %23, %26 : vector<16x16xf32>
    %28 = math.exp %27 : vector<16x16xf32>
    %cst_17 = arith.constant dense<0.000000e+00> : vector<16xf32>
    %29 = vector.multi_reduction <add>, %28, %cst_17 [1] : vector<16x16xf32> to vector<16xf32>
    %30 = vector.shape_cast %29 : vector<16xf32> to vector<16x1xf32>
    %31 = tpu.reciprocal %30 {approx = true} : vector<16x1xf32> -> vector<16x1xf32>
    %32 = vector.broadcast %31 : vector<16x1xf32> to vector<16x16xf32>
    %33 = arith.mulf %28, %32 : vector<16x16xf32>
    %cst_18 = arith.constant dense<0.000000e+00> : vector<16x8xf32>
    %34 = tpu.matmul %33, %16, %cst_18 {dimension_numbers = #tpu.dot_dimension_numbers<[1], [0], [0], [1], [0, 0, 1, 1], [], []>} : vector<16x16xf32>, vector<16x8xf32>, vector<16x8xf32> -> vector<16x8xf32>
    %35 = vector.extract_strided_slice %11 {offsets = [0, 0], sizes = [8, 32], strides = [1, 1]} : vector<32x32xf32> to vector<8x32xf32>
    %cst_19 = arith.constant dense<0.000000e+00> : vector<16x32xf32>
    %36 = tpu.matmul %34, %35, %cst_19 {dimension_numbers = #tpu.dot_dimension_numbers<[1], [0], [0], [1], [0, 0, 1, 1], [], []>} : vector<16x8xf32>, vector<8x32xf32>, vector<16x32xf32> -> vector<16x32xf32>
    %37 = arith.addf %13, %36 : vector<16x32xf32>
    %38 = vector.extract_strided_slice %10 {offsets = [0, 8], sizes = [16, 8], strides = [1, 1]} : vector<16x96xf32> to vector<16x8xf32>
    %39 = vector.extract_strided_slice %10 {offsets = [0, 40], sizes = [16, 8], strides = [1, 1]} : vector<16x96xf32> to vector<16x8xf32>
    %40 = vector.extract_strided_slice %10 {offsets = [0, 72], sizes = [16, 8], strides = [1, 1]} : vector<16x96xf32> to vector<16x8xf32>
    %cst_20 = arith.constant dense<0.000000e+00> : vector<16x16xf32>
    %41 = tpu.matmul %38, %39, %cst_20 {dimension_numbers = #tpu.dot_dimension_numbers<[1], [1], [0], [0], [0, 0, 1, 0], [], []>} : vector<16x8xf32>, vector<16x8xf32>, vector<16x16xf32> -> vector<16x16xf32>
    %cst_21 = arith.constant 0.353553385 : f32
    %42 = vector.broadcast %cst_21 : f32 to vector<16x16xf32>
    %43 = arith.mulf %41, %42 : vector<16x16xf32>
    %cst_22 = arith.constant 0.000000e+00 : f32
    %44 = vector.broadcast %cst_22 : f32 to vector<16x16xf32>
    %45 = arith.cmpf ogt, %2, %44 : vector<16x16xf32>
    %cst_23 = arith.constant -1.000000e+30 : f32
    %46 = vector.broadcast %cst_23 : f32 to vector<16x16xf32>
    %47 = arith.select %45, %43, %46 : vector<16x16xi1>, vector<16x16xf32>
    %cst_24 = arith.constant dense<0xFF800000> : vector<16xf32>
    %48 = vector.multi_reduction <maximumf>, %47, %cst_24 [1] : vector<16x16xf32> to vector<16xf32>
    %49 = vector.shape_cast %48 : vector<16xf32> to vector<16x1xf32>
    %50 = vector.broadcast %49 : vector<16x1xf32> to vector<16x16xf32>
    %51 = arith.subf %47, %50 : vector<16x16xf32>
    %52 = math.exp %51 : vector<16x16xf32>
    %cst_25 = arith.constant dense<0.000000e+00> : vector<16xf32>
    %53 = vector.multi_reduction <add>, %52, %cst_25 [1] : vector<16x16xf32> to vector<16xf32>
    %54 = vector.shape_cast %53 : vector<16xf32> to vector<16x1xf32>
    %55 = tpu.reciprocal %54 {approx = true} : vector<16x1xf32> -> vector<16x1xf32>
    %56 = vector.broadcast %55 : vector<16x1xf32> to vector<16x16xf32>
    %57 = arith.mulf %52, %56 : vector<16x16xf32>
    %cst_26 = arith.constant dense<0.000000e+00> : vector<16x8xf32>
    %58 = tpu.matmul %57, %40, %cst_26 {dimension_numbers = #tpu.dot_dimension_numbers<[1], [0], [0], [1], [0, 0, 1, 1], [], []>} : vector<16x16xf32>, vector<16x8xf32>, vector<16x8xf32> -> vector<16x8xf32>
    %59 = vector.extract_strided_slice %11 {offsets = [8, 0], sizes = [8, 32], strides = [1, 1]} : vector<32x32xf32> to vector<8x32xf32>
    %cst_27 = arith.constant dense<0.000000e+00> : vector<16x32xf32>
    %60 = tpu.matmul %58, %59, %cst_27 {dimension_numbers = #tpu.dot_dimension_numbers<[1], [0], [0], [1], [0, 0, 1, 1], [], []>} : vector<16x8xf32>, vector<8x32xf32>, vector<16x32xf32> -> vector<16x32xf32>
    %61 = arith.addf %37, %60 : vector<16x32xf32>
    %62 = vector.extract_strided_slice %10 {offsets = [0, 16], sizes = [16, 8], strides = [1, 1]} : vector<16x96xf32> to vector<16x8xf32>
    %63 = vector.extract_strided_slice %10 {offsets = [0, 48], sizes = [16, 8], strides = [1, 1]} : vector<16x96xf32> to vector<16x8xf32>
    %64 = vector.extract_strided_slice %10 {offsets = [0, 80], sizes = [16, 8], strides = [1, 1]} : vector<16x96xf32> to vector<16x8xf32>
    %cst_28 = arith.constant dense<0.000000e+00> : vector<16x16xf32>
    %65 = tpu.matmul %62, %63, %cst_28 {dimension_numbers = #tpu.dot_dimension_numbers<[1], [1], [0], [0], [0, 0, 1, 0], [], []>} : vector<16x8xf32>, vector<16x8xf32>, vector<16x16xf32> -> vector<16x16xf32>
    %cst_29 = arith.constant 0.353553385 : f32
    %66 = vector.broadcast %cst_29 : f32 to vector<16x16xf32>
    %67 = arith.mulf %65, %66 : vector<16x16xf32>
    %cst_30 = arith.constant 0.000000e+00 : f32
    %68 = vector.broadcast %cst_30 : f32 to vector<16x16xf32>
    %69 = arith.cmpf ogt, %2, %68 : vector<16x16xf32>
    %cst_31 = arith.constant -1.000000e+30 : f32
    %70 = vector.broadcast %cst_31 : f32 to vector<16x16xf32>
    %71 = arith.select %69, %67, %70 : vector<16x16xi1>, vector<16x16xf32>
    %cst_32 = arith.constant dense<0xFF800000> : vector<16xf32>
    %72 = vector.multi_reduction <maximumf>, %71, %cst_32 [1] : vector<16x16xf32> to vector<16xf32>
    %73 = vector.shape_cast %72 : vector<16xf32> to vector<16x1xf32>
    %74 = vector.broadcast %73 : vector<16x1xf32> to vector<16x16xf32>
    %75 = arith.subf %71, %74 : vector<16x16xf32>
    %76 = math.exp %75 : vector<16x16xf32>
    %cst_33 = arith.constant dense<0.000000e+00> : vector<16xf32>
    %77 = vector.multi_reduction <add>, %76, %cst_33 [1] : vector<16x16xf32> to vector<16xf32>
    %78 = vector.shape_cast %77 : vector<16xf32> to vector<16x1xf32>
    %79 = tpu.reciprocal %78 {approx = true} : vector<16x1xf32> -> vector<16x1xf32>
    %80 = vector.broadcast %79 : vector<16x1xf32> to vector<16x16xf32>
    %81 = arith.mulf %76, %80 : vector<16x16xf32>
    %cst_34 = arith.constant dense<0.000000e+00> : vector<16x8xf32>
    %82 = tpu.matmul %81, %64, %cst_34 {dimension_numbers = #tpu.dot_dimension_numbers<[1], [0], [0], [1], [0, 0, 1, 1], [], []>} : vector<16x16xf32>, vector<16x8xf32>, vector<16x8xf32> -> vector<16x8xf32>
    %83 = vector.extract_strided_slice %11 {offsets = [16, 0], sizes = [8, 32], strides = [1, 1]} : vector<32x32xf32> to vector<8x32xf32>
    %cst_35 = arith.constant dense<0.000000e+00> : vector<16x32xf32>
    %84 = tpu.matmul %82, %83, %cst_35 {dimension_numbers = #tpu.dot_dimension_numbers<[1], [0], [0], [1], [0, 0, 1, 1], [], []>} : vector<16x8xf32>, vector<8x32xf32>, vector<16x32xf32> -> vector<16x32xf32>
    %85 = arith.addf %61, %84 : vector<16x32xf32>
    %86 = vector.extract_strided_slice %10 {offsets = [0, 24], sizes = [16, 8], strides = [1, 1]} : vector<16x96xf32> to vector<16x8xf32>
    %87 = vector.extract_strided_slice %10 {offsets = [0, 56], sizes = [16, 8], strides = [1, 1]} : vector<16x96xf32> to vector<16x8xf32>
    %88 = vector.extract_strided_slice %10 {offsets = [0, 88], sizes = [16, 8], strides = [1, 1]} : vector<16x96xf32> to vector<16x8xf32>
    %cst_36 = arith.constant dense<0.000000e+00> : vector<16x16xf32>
    %89 = tpu.matmul %86, %87, %cst_36 {dimension_numbers = #tpu.dot_dimension_numbers<[1], [1], [0], [0], [0, 0, 1, 0], [], []>} : vector<16x8xf32>, vector<16x8xf32>, vector<16x16xf32> -> vector<16x16xf32>
    %cst_37 = arith.constant 0.353553385 : f32
    %90 = vector.broadcast %cst_37 : f32 to vector<16x16xf32>
    %91 = arith.mulf %89, %90 : vector<16x16xf32>
    %cst_38 = arith.constant 0.000000e+00 : f32
    %92 = vector.broadcast %cst_38 : f32 to vector<16x16xf32>
    %93 = arith.cmpf ogt, %2, %92 : vector<16x16xf32>
    %cst_39 = arith.constant -1.000000e+30 : f32
    %94 = vector.broadcast %cst_39 : f32 to vector<16x16xf32>
    %95 = arith.select %93, %91, %94 : vector<16x16xi1>, vector<16x16xf32>
    %cst_40 = arith.constant dense<0xFF800000> : vector<16xf32>
    %96 = vector.multi_reduction <maximumf>, %95, %cst_40 [1] : vector<16x16xf32> to vector<16xf32>
    %97 = vector.shape_cast %96 : vector<16xf32> to vector<16x1xf32>
    %98 = vector.broadcast %97 : vector<16x1xf32> to vector<16x16xf32>
    %99 = arith.subf %95, %98 : vector<16x16xf32>
    %100 = math.exp %99 : vector<16x16xf32>
    %cst_41 = arith.constant dense<0.000000e+00> : vector<16xf32>
    %101 = vector.multi_reduction <add>, %100, %cst_41 [1] : vector<16x16xf32> to vector<16xf32>
    %102 = vector.shape_cast %101 : vector<16xf32> to vector<16x1xf32>
    %103 = tpu.reciprocal %102 {approx = true} : vector<16x1xf32> -> vector<16x1xf32>
    %104 = vector.broadcast %103 : vector<16x1xf32> to vector<16x16xf32>
    %105 = arith.mulf %100, %104 : vector<16x16xf32>
    %cst_42 = arith.constant dense<0.000000e+00> : vector<16x8xf32>
    %106 = tpu.matmul %105, %88, %cst_42 {dimension_numbers = #tpu.dot_dimension_numbers<[1], [0], [0], [1], [0, 0, 1, 1], [], []>} : vector<16x16xf32>, vector<16x8xf32>, vector<16x8xf32> -> vector<16x8xf32>
    %107 = vector.extract_strided_slice %11 {offsets = [24, 0], sizes = [8, 32], strides = [1, 1]} : vector<32x32xf32> to vector<8x32xf32>
    %cst_43 = arith.constant dense<0.000000e+00> : vector<16x32xf32>
    %108 = tpu.matmul %106, %107, %cst_43 {dimension_numbers = #tpu.dot_dimension_numbers<[1], [0], [0], [1], [0, 0, 1, 1], [], []>} : vector<16x8xf32>, vector<8x32xf32>, vector<16x32xf32> -> vector<16x32xf32>
    %109 = arith.addf %85, %108 : vector<16x32xf32>
    %110 = vector.broadcast %12 : vector<1x32xf32> to vector<16x32xf32>
    %111 = arith.addf %109, %110 : vector<16x32xf32>
    %112 = arith.addf %111, %0 : vector<16x32xf32>
    %113 = vector.extract_strided_slice %5 {offsets = [7, 0], sizes = [1, 32], strides = [1, 1]} : vector<16x128xf32> to vector<1x32xf32>
    %114 = vector.extract_strided_slice %5 {offsets = [8, 0], sizes = [1, 32], strides = [1, 1]} : vector<16x128xf32> to vector<1x32xf32>
    %cst_44 = arith.constant dense<0.000000e+00> : vector<16xf32>
    %115 = vector.multi_reduction <add>, %112, %cst_44 [1] : vector<16x32xf32> to vector<16xf32>
    %116 = vector.shape_cast %115 : vector<16xf32> to vector<16x1xf32>
    %cst_45 = arith.constant 3.200000e+01 : f32
    %117 = vector.broadcast %cst_45 : f32 to vector<16x1xf32>
    %118 = arith.divf %116, %117 : vector<16x1xf32>
    %119 = vector.broadcast %118 : vector<16x1xf32> to vector<16x32xf32>
    %120 = arith.subf %112, %119 : vector<16x32xf32>
    %121 = arith.mulf %120, %120 : vector<16x32xf32>
    %cst_46 = arith.constant dense<0.000000e+00> : vector<16xf32>
    %122 = vector.multi_reduction <add>, %121, %cst_46 [1] : vector<16x32xf32> to vector<16xf32>
    %123 = vector.shape_cast %122 : vector<16xf32> to vector<16x1xf32>
    %cst_47 = arith.constant 3.200000e+01 : f32
    %124 = vector.broadcast %cst_47 : f32 to vector<16x1xf32>
    %125 = arith.divf %123, %124 : vector<16x1xf32>
    %cst_48 = arith.constant 9.99999974E-6 : f32
    %126 = vector.broadcast %cst_48 : f32 to vector<16x1xf32>
    %127 = arith.addf %125, %126 : vector<16x1xf32>
    %128 = math.rsqrt %127 : vector<16x1xf32>
    %129 = vector.broadcast %128 : vector<16x1xf32> to vector<16x32xf32>
    %130 = arith.mulf %120, %129 : vector<16x32xf32>
    %131 = vector.broadcast %113 : vector<1x32xf32> to vector<16x32xf32>
    %132 = arith.mulf %130, %131 : vector<16x32xf32>
    %133 = vector.broadcast %114 : vector<1x32xf32> to vector<16x32xf32>
    %134 = arith.addf %132, %133 : vector<16x32xf32>
    %135 = vector.extract_strided_slice %4 {offsets = [0, 128], sizes = [32, 32], strides = [1, 1]} : vector<32x256xf32> to vector<32x32xf32>
    %cst_49 = arith.constant dense<0.000000e+00> : vector<16x32xf32>
    %136 = tpu.matmul %134, %135, %cst_49 {dimension_numbers = #tpu.dot_dimension_numbers<[1], [0], [0], [1], [0, 0, 1, 1], [], []>} : vector<16x32xf32>, vector<32x32xf32>, vector<16x32xf32> -> vector<16x32xf32>
    %137 = vector.extract_strided_slice %5 {offsets = [2, 0], sizes = [1, 32], strides = [1, 1]} : vector<16x128xf32> to vector<1x32xf32>
    %138 = vector.broadcast %137 : vector<1x32xf32> to vector<16x32xf32>
    %139 = arith.addf %136, %138 : vector<16x32xf32>
    %c0_50 = arith.constant 0 : index
    %c0_51 = arith.constant 0 : index
    %140 = vector.load %arg6[%c0_50, %c0_51] : memref<32x64xf32, #tpu.memory_space<vmem>>, vector<32x64xf32>
    %cst_52 = arith.constant dense<0.000000e+00> : vector<16x64xf32>
    %141 = tpu.matmul %1, %140, %cst_52 {dimension_numbers = #tpu.dot_dimension_numbers<[1], [0], [0], [1], [0, 0, 1, 1], [], []>} : vector<16x32xf32>, vector<32x64xf32>, vector<16x64xf32> -> vector<16x64xf32>
    %142 = vector.extract_strided_slice %5 {offsets = [3, 0], sizes = [1, 64], strides = [1, 1]} : vector<16x128xf32> to vector<1x64xf32>
    %143 = vector.broadcast %142 : vector<1x64xf32> to vector<16x64xf32>
    %144 = arith.addf %141, %143 : vector<16x64xf32>
    %145 = vector.extract_strided_slice %4 {offsets = [0, 160], sizes = [32, 32], strides = [1, 1]} : vector<32x256xf32> to vector<32x32xf32>
    %146 = vector.extract_strided_slice %5 {offsets = [4, 0], sizes = [1, 32], strides = [1, 1]} : vector<16x128xf32> to vector<1x32xf32>
    %cst_53 = arith.constant 0.000000e+00 : f32
    %147 = vector.broadcast %cst_53 : f32 to vector<16x32xf32>
    %148 = vector.extract_strided_slice %139 {offsets = [0, 0], sizes = [16, 8], strides = [1, 1]} : vector<16x32xf32> to vector<16x8xf32>
    %149 = vector.extract_strided_slice %144 {offsets = [0, 0], sizes = [16, 8], strides = [1, 1]} : vector<16x64xf32> to vector<16x8xf32>
    %150 = vector.extract_strided_slice %144 {offsets = [0, 32], sizes = [16, 8], strides = [1, 1]} : vector<16x64xf32> to vector<16x8xf32>
    %cst_54 = arith.constant dense<0.000000e+00> : vector<16x16xf32>
    %151 = tpu.matmul %148, %149, %cst_54 {dimension_numbers = #tpu.dot_dimension_numbers<[1], [1], [0], [0], [0, 0, 1, 0], [], []>} : vector<16x8xf32>, vector<16x8xf32>, vector<16x16xf32> -> vector<16x16xf32>
    %cst_55 = arith.constant 0.353553385 : f32
    %152 = vector.broadcast %cst_55 : f32 to vector<16x16xf32>
    %153 = arith.mulf %151, %152 : vector<16x16xf32>
    %cst_56 = arith.constant 0.000000e+00 : f32
    %154 = vector.broadcast %cst_56 : f32 to vector<16x16xf32>
    %155 = arith.cmpf ogt, %3, %154 : vector<16x16xf32>
    %cst_57 = arith.constant -1.000000e+30 : f32
    %156 = vector.broadcast %cst_57 : f32 to vector<16x16xf32>
    %157 = arith.select %155, %153, %156 : vector<16x16xi1>, vector<16x16xf32>
    %cst_58 = arith.constant dense<0xFF800000> : vector<16xf32>
    %158 = vector.multi_reduction <maximumf>, %157, %cst_58 [1] : vector<16x16xf32> to vector<16xf32>
    %159 = vector.shape_cast %158 : vector<16xf32> to vector<16x1xf32>
    %160 = vector.broadcast %159 : vector<16x1xf32> to vector<16x16xf32>
    %161 = arith.subf %157, %160 : vector<16x16xf32>
    %162 = math.exp %161 : vector<16x16xf32>
    %cst_59 = arith.constant dense<0.000000e+00> : vector<16xf32>
    %163 = vector.multi_reduction <add>, %162, %cst_59 [1] : vector<16x16xf32> to vector<16xf32>
    %164 = vector.shape_cast %163 : vector<16xf32> to vector<16x1xf32>
    %165 = tpu.reciprocal %164 {approx = true} : vector<16x1xf32> -> vector<16x1xf32>
    %166 = vector.broadcast %165 : vector<16x1xf32> to vector<16x16xf32>
    %167 = arith.mulf %162, %166 : vector<16x16xf32>
    %cst_60 = arith.constant dense<0.000000e+00> : vector<16x8xf32>
    %168 = tpu.matmul %167, %150, %cst_60 {dimension_numbers = #tpu.dot_dimension_numbers<[1], [0], [0], [1], [0, 0, 1, 1], [], []>} : vector<16x16xf32>, vector<16x8xf32>, vector<16x8xf32> -> vector<16x8xf32>
    %169 = vector.extract_strided_slice %145 {offsets = [0, 0], sizes = [8, 32], strides = [1, 1]} : vector<32x32xf32> to vector<8x32xf32>
    %cst_61 = arith.constant dense<0.000000e+00> : vector<16x32xf32>
    %170 = tpu.matmul %168, %169, %cst_61 {dimension_numbers = #tpu.dot_dimension_numbers<[1], [0], [0], [1], [0, 0, 1, 1], [], []>} : vector<16x8xf32>, vector<8x32xf32>, vector<16x32xf32> -> vector<16x32xf32>
    %171 = arith.addf %147, %170 : vector<16x32xf32>
    %172 = vector.extract_strided_slice %139 {offsets = [0, 8], sizes = [16, 8], strides = [1, 1]} : vector<16x32xf32> to vector<16x8xf32>
    %173 = vector.extract_strided_slice %144 {offsets = [0, 8], sizes = [16, 8], strides = [1, 1]} : vector<16x64xf32> to vector<16x8xf32>
    %174 = vector.extract_strided_slice %144 {offsets = [0, 40], sizes = [16, 8], strides = [1, 1]} : vector<16x64xf32> to vector<16x8xf32>
    %cst_62 = arith.constant dense<0.000000e+00> : vector<16x16xf32>
    %175 = tpu.matmul %172, %173, %cst_62 {dimension_numbers = #tpu.dot_dimension_numbers<[1], [1], [0], [0], [0, 0, 1, 0], [], []>} : vector<16x8xf32>, vector<16x8xf32>, vector<16x16xf32> -> vector<16x16xf32>
    %cst_63 = arith.constant 0.353553385 : f32
    %176 = vector.broadcast %cst_63 : f32 to vector<16x16xf32>
    %177 = arith.mulf %175, %176 : vector<16x16xf32>
    %cst_64 = arith.constant 0.000000e+00 : f32
    %178 = vector.broadcast %cst_64 : f32 to vector<16x16xf32>
    %179 = arith.cmpf ogt, %3, %178 : vector<16x16xf32>
    %cst_65 = arith.constant -1.000000e+30 : f32
    %180 = vector.broadcast %cst_65 : f32 to vector<16x16xf32>
    %181 = arith.select %179, %177, %180 : vector<16x16xi1>, vector<16x16xf32>
    %cst_66 = arith.constant dense<0xFF800000> : vector<16xf32>
    %182 = vector.multi_reduction <maximumf>, %181, %cst_66 [1] : vector<16x16xf32> to vector<16xf32>
    %183 = vector.shape_cast %182 : vector<16xf32> to vector<16x1xf32>
    %184 = vector.broadcast %183 : vector<16x1xf32> to vector<16x16xf32>
    %185 = arith.subf %181, %184 : vector<16x16xf32>
    %186 = math.exp %185 : vector<16x16xf32>
    %cst_67 = arith.constant dense<0.000000e+00> : vector<16xf32>
    %187 = vector.multi_reduction <add>, %186, %cst_67 [1] : vector<16x16xf32> to vector<16xf32>
    %188 = vector.shape_cast %187 : vector<16xf32> to vector<16x1xf32>
    %189 = tpu.reciprocal %188 {approx = true} : vector<16x1xf32> -> vector<16x1xf32>
    %190 = vector.broadcast %189 : vector<16x1xf32> to vector<16x16xf32>
    %191 = arith.mulf %186, %190 : vector<16x16xf32>
    %cst_68 = arith.constant dense<0.000000e+00> : vector<16x8xf32>
    %192 = tpu.matmul %191, %174, %cst_68 {dimension_numbers = #tpu.dot_dimension_numbers<[1], [0], [0], [1], [0, 0, 1, 1], [], []>} : vector<16x16xf32>, vector<16x8xf32>, vector<16x8xf32> -> vector<16x8xf32>
    %193 = vector.extract_strided_slice %145 {offsets = [8, 0], sizes = [8, 32], strides = [1, 1]} : vector<32x32xf32> to vector<8x32xf32>
    %cst_69 = arith.constant dense<0.000000e+00> : vector<16x32xf32>
    %194 = tpu.matmul %192, %193, %cst_69 {dimension_numbers = #tpu.dot_dimension_numbers<[1], [0], [0], [1], [0, 0, 1, 1], [], []>} : vector<16x8xf32>, vector<8x32xf32>, vector<16x32xf32> -> vector<16x32xf32>
    %195 = arith.addf %171, %194 : vector<16x32xf32>
    %196 = vector.extract_strided_slice %139 {offsets = [0, 16], sizes = [16, 8], strides = [1, 1]} : vector<16x32xf32> to vector<16x8xf32>
    %197 = vector.extract_strided_slice %144 {offsets = [0, 16], sizes = [16, 8], strides = [1, 1]} : vector<16x64xf32> to vector<16x8xf32>
    %198 = vector.extract_strided_slice %144 {offsets = [0, 48], sizes = [16, 8], strides = [1, 1]} : vector<16x64xf32> to vector<16x8xf32>
    %cst_70 = arith.constant dense<0.000000e+00> : vector<16x16xf32>
    %199 = tpu.matmul %196, %197, %cst_70 {dimension_numbers = #tpu.dot_dimension_numbers<[1], [1], [0], [0], [0, 0, 1, 0], [], []>} : vector<16x8xf32>, vector<16x8xf32>, vector<16x16xf32> -> vector<16x16xf32>
    %cst_71 = arith.constant 0.353553385 : f32
    %200 = vector.broadcast %cst_71 : f32 to vector<16x16xf32>
    %201 = arith.mulf %199, %200 : vector<16x16xf32>
    %cst_72 = arith.constant 0.000000e+00 : f32
    %202 = vector.broadcast %cst_72 : f32 to vector<16x16xf32>
    %203 = arith.cmpf ogt, %3, %202 : vector<16x16xf32>
    %cst_73 = arith.constant -1.000000e+30 : f32
    %204 = vector.broadcast %cst_73 : f32 to vector<16x16xf32>
    %205 = arith.select %203, %201, %204 : vector<16x16xi1>, vector<16x16xf32>
    %cst_74 = arith.constant dense<0xFF800000> : vector<16xf32>
    %206 = vector.multi_reduction <maximumf>, %205, %cst_74 [1] : vector<16x16xf32> to vector<16xf32>
    %207 = vector.shape_cast %206 : vector<16xf32> to vector<16x1xf32>
    %208 = vector.broadcast %207 : vector<16x1xf32> to vector<16x16xf32>
    %209 = arith.subf %205, %208 : vector<16x16xf32>
    %210 = math.exp %209 : vector<16x16xf32>
    %cst_75 = arith.constant dense<0.000000e+00> : vector<16xf32>
    %211 = vector.multi_reduction <add>, %210, %cst_75 [1] : vector<16x16xf32> to vector<16xf32>
    %212 = vector.shape_cast %211 : vector<16xf32> to vector<16x1xf32>
    %213 = tpu.reciprocal %212 {approx = true} : vector<16x1xf32> -> vector<16x1xf32>
    %214 = vector.broadcast %213 : vector<16x1xf32> to vector<16x16xf32>
    %215 = arith.mulf %210, %214 : vector<16x16xf32>
    %cst_76 = arith.constant dense<0.000000e+00> : vector<16x8xf32>
    %216 = tpu.matmul %215, %198, %cst_76 {dimension_numbers = #tpu.dot_dimension_numbers<[1], [0], [0], [1], [0, 0, 1, 1], [], []>} : vector<16x16xf32>, vector<16x8xf32>, vector<16x8xf32> -> vector<16x8xf32>
    %217 = vector.extract_strided_slice %145 {offsets = [16, 0], sizes = [8, 32], strides = [1, 1]} : vector<32x32xf32> to vector<8x32xf32>
    %cst_77 = arith.constant dense<0.000000e+00> : vector<16x32xf32>
    %218 = tpu.matmul %216, %217, %cst_77 {dimension_numbers = #tpu.dot_dimension_numbers<[1], [0], [0], [1], [0, 0, 1, 1], [], []>} : vector<16x8xf32>, vector<8x32xf32>, vector<16x32xf32> -> vector<16x32xf32>
    %219 = arith.addf %195, %218 : vector<16x32xf32>
    %220 = vector.extract_strided_slice %139 {offsets = [0, 24], sizes = [16, 8], strides = [1, 1]} : vector<16x32xf32> to vector<16x8xf32>
    %221 = vector.extract_strided_slice %144 {offsets = [0, 24], sizes = [16, 8], strides = [1, 1]} : vector<16x64xf32> to vector<16x8xf32>
    %222 = vector.extract_strided_slice %144 {offsets = [0, 56], sizes = [16, 8], strides = [1, 1]} : vector<16x64xf32> to vector<16x8xf32>
    %cst_78 = arith.constant dense<0.000000e+00> : vector<16x16xf32>
    %223 = tpu.matmul %220, %221, %cst_78 {dimension_numbers = #tpu.dot_dimension_numbers<[1], [1], [0], [0], [0, 0, 1, 0], [], []>} : vector<16x8xf32>, vector<16x8xf32>, vector<16x16xf32> -> vector<16x16xf32>
    %cst_79 = arith.constant 0.353553385 : f32
    %224 = vector.broadcast %cst_79 : f32 to vector<16x16xf32>
    %225 = arith.mulf %223, %224 : vector<16x16xf32>
    %cst_80 = arith.constant 0.000000e+00 : f32
    %226 = vector.broadcast %cst_80 : f32 to vector<16x16xf32>
    %227 = arith.cmpf ogt, %3, %226 : vector<16x16xf32>
    %cst_81 = arith.constant -1.000000e+30 : f32
    %228 = vector.broadcast %cst_81 : f32 to vector<16x16xf32>
    %229 = arith.select %227, %225, %228 : vector<16x16xi1>, vector<16x16xf32>
    %cst_82 = arith.constant dense<0xFF800000> : vector<16xf32>
    %230 = vector.multi_reduction <maximumf>, %229, %cst_82 [1] : vector<16x16xf32> to vector<16xf32>
    %231 = vector.shape_cast %230 : vector<16xf32> to vector<16x1xf32>
    %232 = vector.broadcast %231 : vector<16x1xf32> to vector<16x16xf32>
    %233 = arith.subf %229, %232 : vector<16x16xf32>
    %234 = math.exp %233 : vector<16x16xf32>
    %cst_83 = arith.constant dense<0.000000e+00> : vector<16xf32>
    %235 = vector.multi_reduction <add>, %234, %cst_83 [1] : vector<16x16xf32> to vector<16xf32>
    %236 = vector.shape_cast %235 : vector<16xf32> to vector<16x1xf32>
    %237 = tpu.reciprocal %236 {approx = true} : vector<16x1xf32> -> vector<16x1xf32>
    %238 = vector.broadcast %237 : vector<16x1xf32> to vector<16x16xf32>
    %239 = arith.mulf %234, %238 : vector<16x16xf32>
    %cst_84 = arith.constant dense<0.000000e+00> : vector<16x8xf32>
    %240 = tpu.matmul %239, %222, %cst_84 {dimension_numbers = #tpu.dot_dimension_numbers<[1], [0], [0], [1], [0, 0, 1, 1], [], []>} : vector<16x16xf32>, vector<16x8xf32>, vector<16x8xf32> -> vector<16x8xf32>
    %241 = vector.extract_strided_slice %145 {offsets = [24, 0], sizes = [8, 32], strides = [1, 1]} : vector<32x32xf32> to vector<8x32xf32>
    %cst_85 = arith.constant dense<0.000000e+00> : vector<16x32xf32>
    %242 = tpu.matmul %240, %241, %cst_85 {dimension_numbers = #tpu.dot_dimension_numbers<[1], [0], [0], [1], [0, 0, 1, 1], [], []>} : vector<16x8xf32>, vector<8x32xf32>, vector<16x32xf32> -> vector<16x32xf32>
    %243 = arith.addf %219, %242 : vector<16x32xf32>
    %244 = vector.broadcast %146 : vector<1x32xf32> to vector<16x32xf32>
    %245 = arith.addf %243, %244 : vector<16x32xf32>
    %246 = arith.addf %245, %134 : vector<16x32xf32>
    %247 = vector.extract_strided_slice %5 {offsets = [9, 0], sizes = [1, 32], strides = [1, 1]} : vector<16x128xf32> to vector<1x32xf32>
    %248 = vector.extract_strided_slice %5 {offsets = [10, 0], sizes = [1, 32], strides = [1, 1]} : vector<16x128xf32> to vector<1x32xf32>
    %cst_86 = arith.constant dense<0.000000e+00> : vector<16xf32>
    %249 = vector.multi_reduction <add>, %246, %cst_86 [1] : vector<16x32xf32> to vector<16xf32>
    %250 = vector.shape_cast %249 : vector<16xf32> to vector<16x1xf32>
    %cst_87 = arith.constant 3.200000e+01 : f32
    %251 = vector.broadcast %cst_87 : f32 to vector<16x1xf32>
    %252 = arith.divf %250, %251 : vector<16x1xf32>
    %253 = vector.broadcast %252 : vector<16x1xf32> to vector<16x32xf32>
    %254 = arith.subf %246, %253 : vector<16x32xf32>
    %255 = arith.mulf %254, %254 : vector<16x32xf32>
    %cst_88 = arith.constant dense<0.000000e+00> : vector<16xf32>
    %256 = vector.multi_reduction <add>, %255, %cst_88 [1] : vector<16x32xf32> to vector<16xf32>
    %257 = vector.shape_cast %256 : vector<16xf32> to vector<16x1xf32>
    %cst_89 = arith.constant 3.200000e+01 : f32
    %258 = vector.broadcast %cst_89 : f32 to vector<16x1xf32>
    %259 = arith.divf %257, %258 : vector<16x1xf32>
    %cst_90 = arith.constant 9.99999974E-6 : f32
    %260 = vector.broadcast %cst_90 : f32 to vector<16x1xf32>
    %261 = arith.addf %259, %260 : vector<16x1xf32>
    %262 = math.rsqrt %261 : vector<16x1xf32>
    %263 = vector.broadcast %262 : vector<16x1xf32> to vector<16x32xf32>
    %264 = arith.mulf %254, %263 : vector<16x32xf32>
    %265 = vector.broadcast %247 : vector<1x32xf32> to vector<16x32xf32>
    %266 = arith.mulf %264, %265 : vector<16x32xf32>
    %267 = vector.broadcast %248 : vector<1x32xf32> to vector<16x32xf32>
    %268 = arith.addf %266, %267 : vector<16x32xf32>
    %269 = vector.extract_strided_slice %4 {offsets = [0, 192], sizes = [32, 64], strides = [1, 1]} : vector<32x256xf32> to vector<32x64xf32>
    %cst_91 = arith.constant dense<0.000000e+00> : vector<16x64xf32>
    %270 = tpu.matmul %268, %269, %cst_91 {dimension_numbers = #tpu.dot_dimension_numbers<[1], [0], [0], [1], [0, 0, 1, 1], [], []>} : vector<16x32xf32>, vector<32x64xf32>, vector<16x64xf32> -> vector<16x64xf32>
    %271 = vector.extract_strided_slice %5 {offsets = [5, 0], sizes = [1, 64], strides = [1, 1]} : vector<16x128xf32> to vector<1x64xf32>
    %272 = vector.broadcast %271 : vector<1x64xf32> to vector<16x64xf32>
    %273 = arith.addf %270, %272 : vector<16x64xf32>
    %cst_92 = arith.constant 0.000000e+00 : f32
    %274 = vector.broadcast %cst_92 : f32 to vector<16x64xf32>
    %275 = arith.maximumf %273, %274 : vector<16x64xf32>
    %c0_93 = arith.constant 0 : index
    %c0_94 = arith.constant 0 : index
    %276 = vector.load %arg7[%c0_93, %c0_94] : memref<64x32xf32, #tpu.memory_space<vmem>>, vector<64x32xf32>
    %cst_95 = arith.constant dense<0.000000e+00> : vector<16x32xf32>
    %277 = tpu.matmul %275, %276, %cst_95 {dimension_numbers = #tpu.dot_dimension_numbers<[1], [0], [0], [1], [0, 0, 1, 1], [], []>} : vector<16x64xf32>, vector<64x32xf32>, vector<16x32xf32> -> vector<16x32xf32>
    %278 = vector.extract_strided_slice %5 {offsets = [6, 0], sizes = [1, 32], strides = [1, 1]} : vector<16x128xf32> to vector<1x32xf32>
    %279 = vector.broadcast %278 : vector<1x32xf32> to vector<16x32xf32>
    %280 = arith.addf %277, %279 : vector<16x32xf32>
    %281 = arith.addf %280, %268 : vector<16x32xf32>
    %282 = vector.extract_strided_slice %5 {offsets = [11, 0], sizes = [1, 32], strides = [1, 1]} : vector<16x128xf32> to vector<1x32xf32>
    %283 = vector.extract_strided_slice %5 {offsets = [12, 0], sizes = [1, 32], strides = [1, 1]} : vector<16x128xf32> to vector<1x32xf32>
    %cst_96 = arith.constant dense<0.000000e+00> : vector<16xf32>
    %284 = vector.multi_reduction <add>, %281, %cst_96 [1] : vector<16x32xf32> to vector<16xf32>
    %285 = vector.shape_cast %284 : vector<16xf32> to vector<16x1xf32>
    %cst_97 = arith.constant 3.200000e+01 : f32
    %286 = vector.broadcast %cst_97 : f32 to vector<16x1xf32>
    %287 = arith.divf %285, %286 : vector<16x1xf32>
    %288 = vector.broadcast %287 : vector<16x1xf32> to vector<16x32xf32>
    %289 = arith.subf %281, %288 : vector<16x32xf32>
    %290 = arith.mulf %289, %289 : vector<16x32xf32>
    %cst_98 = arith.constant dense<0.000000e+00> : vector<16xf32>
    %291 = vector.multi_reduction <add>, %290, %cst_98 [1] : vector<16x32xf32> to vector<16xf32>
    %292 = vector.shape_cast %291 : vector<16xf32> to vector<16x1xf32>
    %cst_99 = arith.constant 3.200000e+01 : f32
    %293 = vector.broadcast %cst_99 : f32 to vector<16x1xf32>
    %294 = arith.divf %292, %293 : vector<16x1xf32>
    %cst_100 = arith.constant 9.99999974E-6 : f32
    %295 = vector.broadcast %cst_100 : f32 to vector<16x1xf32>
    %296 = arith.addf %294, %295 : vector<16x1xf32>
    %297 = math.rsqrt %296 : vector<16x1xf32>
    %298 = vector.broadcast %297 : vector<16x1xf32> to vector<16x32xf32>
    %299 = arith.mulf %289, %298 : vector<16x32xf32>
    %300 = vector.broadcast %282 : vector<1x32xf32> to vector<16x32xf32>
    %301 = arith.mulf %299, %300 : vector<16x32xf32>
    %302 = vector.broadcast %283 : vector<1x32xf32> to vector<16x32xf32>
    %303 = arith.addf %301, %302 : vector<16x32xf32>
    %c0_101 = arith.constant 0 : index
    %c0_102 = arith.constant 0 : index
    %304 = vector.load %arg9[%c0_101, %c0_102] : memref<16x32xf32, #tpu.memory_space<vmem>>, vector<16x32xf32>
    tpu.vector_store %arg9[%c0_101, %c0_102], %303 {strides = array<i32>} : memref<16x32xf32, #tpu.memory_space<vmem>>, vector<16x32xf32>,
    return
  }
  func.func @transform_0(%arg0: i32) -> (i32, i32) {
    %c0_i32 = arith.constant 0 : i32
    %c0_i32_0 = arith.constant 0 : i32
    %c0_i32_1 = arith.constant 0 : i32
    return %c0_i32, %c0_i32_0 : i32, i32
  }
  func.func @transform_1(%arg0: i32) -> (i32, i32) {
    %c0_i32 = arith.constant 0 : i32
    %c0_i32_0 = arith.constant 0 : i32
    %c0_i32_1 = arith.constant 0 : i32
    return %c0_i32, %c0_i32_0 : i32, i32
  }
  func.func @transform_2(%arg0: i32) -> (i32, i32) {
    %c0_i32 = arith.constant 0 : i32
    %c0_i32_0 = arith.constant 0 : i32
    %c0_i32_1 = arith.constant 0 : i32
    return %c0_i32, %c0_i32_0 : i32, i32
  }
  func.func @transform_3(%arg0: i32) -> (i32, i32) {
    %c0_i32 = arith.constant 0 : i32
    %c0_i32_0 = arith.constant 0 : i32
    %c0_i32_1 = arith.constant 0 : i32
    return %c0_i32, %c0_i32_0 : i32, i32
  }
  func.func @transform_4(%arg0: i32) -> (i32, i32) {
    %c0_i32 = arith.constant 0 : i32
    %c0_i32_0 = arith.constant 0 : i32
    %c0_i32_1 = arith.constant 0 : i32
    return %c0_i32, %c0_i32_0 : i32, i32
  }
  func.func @transform_5(%arg0: i32) -> (i32, i32) {
    %c0_i32 = arith.constant 0 : i32
    %c0_i32_0 = arith.constant 0 : i32
    %c0_i32_1 = arith.constant 0 : i32
    return %c0_i32, %c0_i32_0 : i32, i32
  }
  func.func @transform_6(%arg0: i32) -> (i32, i32) {
    %c0_i32 = arith.constant 0 : i32
    %c0_i32_0 = arith.constant 0 : i32
    %c0_i32_1 = arith.constant 0 : i32
    return %c0_i32, %c0_i32_0 : i32, i32
  }
  func.func @transform_7(%arg0: i32) -> (i32, i32) {
    %c0_i32 = arith.constant 0 : i32
    %c0_i32_0 = arith.constant 0 : i32
    %c0_i32_1 = arith.constant 0 : i32
    return %c0_i32, %c0_i32_0 : i32, i32
  }
  func.func @transform_8(%arg0: i32) -> (i32, i32) {
    %c0_i32 = arith.constant 0 : i32
    %c0_i32_0 = arith.constant 0 : i32
    %c0_i32_1 = arith.constant 0 : i32
    return %c0_i32, %c0_i32_0 : i32, i32
  }
}

</mosaic_0001>

<llo_original>
// kernel: tpu_custom_call.1
$region0: #{tpu_custom_call.1}
  #allocation0 [shape = 'u32[]', space=smem, size = 0x4, offset = 0x4, fixed_abs, tag = 'smem constant byte address 0x4 - core index']
  #allocation1 [shape = 'u32[144,128]{1,0:T(1,128)}', space=vmem, size = 0x12000, scoped, tag = 'internal scratch']
  %s0 = inlined_call_operand.hbm [shape: f32[16,32], index: 0, kind: input, shape index: {}]
  %s1 = inlined_call_operand.hbm [shape: f32[16,32], index: 1, kind: input, shape index: {}]
  %s2 = inlined_call_operand.hbm [shape: f32[16,16], index: 2, kind: input, shape index: {}]
  %s3 = inlined_call_operand.hbm [shape: f32[16,16], index: 3, kind: input, shape index: {}]
  %s4 = inlined_call_operand.vmem [shape: f32[32,256], index: 4, kind: input, shape index: {}]
  %s5 = inlined_call_operand.vmem [shape: f32[32,64], index: 5, kind: input, shape index: {}]
  %s6 = inlined_call_operand.vmem [shape: f32[64,32], index: 6, kind: input, shape index: {}]
  %s7 = inlined_call_operand.hbm [shape: f32[16,128], index: 7, kind: input, shape index: {}]
  %s8 = inlined_call_operand.hbm [shape: f32[16,32], index: 8, kind: output, shape index: {}]
  %s9 = sld [smem:[#allocation0]]
  $region62: #{tpu_custom_call.1} parent=0
    _
  %s11 = ssub.s32 1, %s9
  %s12 = scalar_select 0, %s11, %s9
  $region1: #{tpu_custom_call.1} parent=0
    #allocation2 [shape = 'u8[8192]{0}', space=vmem, size = 0x2000, scoped, tag = 'input window, operand 0, single buffered']
    #allocation3 [shape = 's32[1]{0}', space=sflag, size = 0x4, scoped, tag = 'scoped memory for tpu_custom_call.1']
    #allocation4 [shape = 's32[1]{0}', space=sflag, size = 0x4, scoped, tag = 'scoped memory for tpu_custom_call.1']
    #allocation5 [shape = 'u8[8192]{0}', space=vmem, size = 0x2000, scoped, tag = 'input window, operand 1, single buffered']
    #allocation6 [shape = 's32[1]{0}', space=sflag, size = 0x4, scoped, tag = 'scoped memory for tpu_custom_call.1']
    #allocation7 [shape = 'u8[8192]{0}', space=vmem, size = 0x2000, scoped, tag = 'input window, operand 2, single buffered']
    #allocation8 [shape = 'u8[8192]{0}', space=vmem, size = 0x2000, scoped, tag = 'input window, operand 3, single buffered']
    #allocation9 [shape = 's32[1]{0}', space=sflag, size = 0x4, scoped, tag = 'scoped memory for tpu_custom_call.1']
    #allocation10 [shape = 'u8[8192]{0}', space=vmem, size = 0x2000, scoped, tag = 'input window, operand 7, single buffered']
    #allocation11 [shape = 'u8[8192]{0}', space=vmem, size = 0x2000, scoped, tag = 'output window, operand 0, single buffered']
    %13 = vsyncpa [#allocation3], 0
    %14 = vsyncpa [#allocation6], 0
    %15 = vsyncpa [#allocation9], 0
    %16 = vsyncpa [#allocation4], 0
    // Predicated region
    $region2: #{tpu_custom_call.1} parent=1 // pred_check
      _
    $region3: #{tpu_custom_call.1} parent=1 // pred_check_branch
      %18 = sbr.rel (0) target = $region5
    $region4: #{tpu_custom_call.1} parent=1 // pred_region
      %s20 = ssub.s32 256, 256
      %21 = vsyncadd [#allocation3], %s20
      %s22 = sshll.u32 [#allocation2], 4
      %s23 = int_to_ptr.vmem [resolvable:$true] %s22
      %28 = dma.hbm_to_vmem [thread:$0]  %s0, 256, %s23, [#allocation3], 128, 128, 8
    $region5: #{tpu_custom_call.1} parent=1 // pred_fallthru
      _
    // Predicated region
    $region6: #{tpu_custom_call.1} parent=1 // pred_check
      _
    $region7: #{tpu_custom_call.1} parent=1 // pred_check_branch
      %30 = sbr.rel (0) target = $region9
    $region8: #{tpu_custom_call.1} parent=1 // pred_region
      %s32 = ssub.s32 256, 256
      %33 = vsyncadd [#allocation6], %s32
      %s34 = sshll.u32 [#allocation5], 4
      %s35 = int_to_ptr.vmem [resolvable:$true] %s34
      %40 = dma.hbm_to_vmem [thread:$0]  %s1, 256, %s35, [#allocation6], 128, 128, 8
    $region9: #{tpu_custom_call.1} parent=1 // pred_fallthru
      _
    // Predicated region
    $region10: #{tpu_custom_call.1} parent=1 // pred_check
      _
    $region11: #{tpu_custom_call.1} parent=1 // pred_check_branch
      %42 = sbr.rel (0) target = $region13
    $region12: #{tpu_custom_call.1} parent=1 // pred_region
      %s44 = ssub.s32 256, 256
      %45 = vsyncadd [#allocation6], %s44
      %s46 = sshll.u32 [#allocation7], 4
      %s47 = int_to_ptr.vmem [resolvable:$true] %s46
      %52 = dma.hbm_to_vmem [thread:$0]  %s2, 256, %s47, [#allocation6], 128, 128, 8
    $region13: #{tpu_custom_call.1} parent=1 // pred_fallthru
      _
    // Predicated region
    $region14: #{tpu_custom_call.1} parent=1 // pred_check
      _
    $region15: #{tpu_custom_call.1} parent=1 // pred_check_branch
      %54 = sbr.rel (0) target = $region17
    $region16: #{tpu_custom_call.1} parent=1 // pred_region
      %s56 = ssub.s32 256, 256
      %57 = vsyncadd [#allocation9], %s56
      %s58 = sshll.u32 [#allocation8], 4
      %s59 = int_to_ptr.vmem [resolvable:$true] %s58
      %64 = dma.hbm_to_vmem [thread:$0]  %s3, 256, %s59, [#allocation9], 128, 128, 8
    $region17: #{tpu_custom_call.1} parent=1 // pred_fallthru
      _
    // Predicated region
    $region18: #{tpu_custom_call.1} parent=1 // pred_check
      _
    $region19: #{tpu_custom_call.1} parent=1 // pred_check_branch
      %66 = sbr.rel (0) target = $region21
    $region20: #{tpu_custom_call.1} parent=1 // pred_region
      _
    $region21: #{tpu_custom_call.1} parent=1 // pred_fallthru
      _
    // Predicated region
    $region22: #{tpu_custom_call.1} parent=1 // pred_check
      _
    $region23: #{tpu_custom_call.1} parent=1 // pred_check_branch
      %68 = sbr.rel (0) target = $region25
    $region24: #{tpu_custom_call.1} parent=1 // pred_region
      _
    $region25: #{tpu_custom_call.1} parent=1 // pred_fallthru
      _
    // Predicated region
    $region26: #{tpu_custom_call.1} parent=1 // pred_check
      _
    $region27: #{tpu_custom_call.1} parent=1 // pred_check_branch
      %70 = sbr.rel (0) target = $region29
    $region28: #{tpu_custom_call.1} parent=1 // pred_region
      _
    $region29: #{tpu_custom_call.1} parent=1 // pred_fallthru
      _
    // Predicated region
    $region30: #{tpu_custom_call.1} parent=1 // pred_check
      _
    $region31: #{tpu_custom_call.1} parent=1 // pred_check_branch
      %72 = sbr.rel (0) target = $region33
    $region32: #{tpu_custom_call.1} parent=1 // pred_region
      %s74 = ssub.s32 256, 256
      %75 = vsyncadd [#allocation9], %s74
      %s76 = sshll.u32 [#allocation10], 4
      %s77 = int_to_ptr.vmem [resolvable:$true] %s76
      %82 = dma.hbm_to_vmem [thread:$0]  %s7, 256, %s77, [#allocation9], 128, 128, 8
    $region33: #{tpu_custom_call.1} parent=1 // pred_fallthru
      _
    // Predicated region
    $region34: #{tpu_custom_call.1} parent=1 // pred_check
      _
    $region35: #{tpu_custom_call.1} parent=1 // pred_check_branch
      %84 = sbr.rel (0) target = $region37
    $region36: #{tpu_custom_call.1} parent=1 // pred_region
      %85 = dma.done [#allocation3], 256
    $region37: #{tpu_custom_call.1} parent=1 // pred_fallthru
      _
    // Predicated region
    $region38: #{tpu_custom_call.1} parent=1 // pred_check
      _
    $region39: #{tpu_custom_call.1} parent=1 // pred_check_branch
      %87 = sbr.rel (0) target = $region41
    $region40: #{tpu_custom_call.1} parent=1 // pred_region
      %88 = dma.done [#allocation6], 256
    $region41: #{tpu_custom_call.1} parent=1 // pred_fallthru
      _
    // Predicated region
    $region42: #{tpu_custom_call.1} parent=1 // pred_check
      _
    $region43: #{tpu_custom_call.1} parent=1 // pred_check_branch
      %90 = sbr.rel (0) target = $region45
    $region44: #{tpu_custom_call.1} parent=1 // pred_region
      %91 = dma.done [#allocation6], 256
    $region45: #{tpu_custom_call.1} parent=1 // pred_fallthru
      _
    // Predicated region
    $region46: #{tpu_custom_call.1} parent=1 // pred_check
      _
    $region47: #{tpu_custom_call.1} parent=1 // pred_check_branch
      %93 = sbr.rel (0) target = $region49
    $region48: #{tpu_custom_call.1} parent=1 // pred_region
      %94 = dma.done [#allocation9], 256
    $region49: #{tpu_custom_call.1} parent=1 // pred_fallthru
      _
    // Predicated region
    $region50: #{tpu_custom_call.1} parent=1 // pred_check
      _
    $region51: #{tpu_custom_call.1} parent=1 // pred_check_branch
      %96 = sbr.rel (0) target = $region53
    $region52: #{tpu_custom_call.1} parent=1 // pred_region
      %97 = dma.done [#allocation9], 256
    $region53: #{tpu_custom_call.1} parent=1 // pred_fallthru
      _
    %v98 = vld [vmem:[#allocation2] sm:$0xff]
    %v99 = vld [vmem:[#allocation2 + $0x8] sm:$0xff]
    %v100 = vld [vmem:[#allocation5] sm:$0xff]
    %v101 = vld [vmem:[#allocation5 + $0x8] sm:$0xff]
    %v102 = vld [vmem:[#allocation7] sm:$0xff]
    %v103 = vld [vmem:[#allocation7 + $0x8] sm:$0xff]
    %v104 = vld [vmem:[#allocation8] sm:$0xff]
    %v105 = vld [vmem:[#allocation8 + $0x8] sm:$0xff]
    %v106 = vld [vmem:[%s4] sm:$0xff]
    %v107 = vld [vmem:[%s4 + $0x8] sm:$0xff]
    %v108 = vld [vmem:[%s4 + $0x10] sm:$0xff]
    %v109 = vld [vmem:[%s4 + $0x18] sm:$0xff]
    %v110 = vld [vmem:[%s4 + $0x20] sm:$0xff]
    %v111 = vld [vmem:[%s4 + $0x28] sm:$0xff]
    %v112 = vld [vmem:[%s4 + $0x30] sm:$0xff]
    %v113 = vld [vmem:[%s4 + $0x38] sm:$0xff]
    %v114 = vld [vmem:[#allocation10] sm:$0xff]
    %v115 = vld [vmem:[#allocation10 + $0x8] sm:$0xff]
    %v116 = vlaneseq
    %v117 = vshrl.u32 %v116, 7
    %v118 = vsub.s32 0, %v117
    %v119 = vrot.slane %v114, %v118
    %vm120 = vcmask 261120
    %v122 = vsel %vm120, %v98, 0
    %v125 = vsel %vm120, %v99, 0
    %127 = vmatprep.subr.mxu0 0.0
    %128 = vmatpush1.msra.mxu0 0.0
    %129 = vmatprep.subr.mxu0 0.0
    %130 = vmatpush1.msra.mxu0 0.0
    %131 = vmatprep.subr.mxu0 0.0
    %132 = vmatpush1.msra.mxu0 0.0
    %133 = vmatprep.subr.mxu0 0.0
    %134 = vmatpush1.msra.mxu0 0.0
    %135 = vmatprep.subr.mxu0 0.0
    %136 = vmatpush1.msra.mxu0 0.0
    %137 = vmatprep.subr.mxu0 0.0
    %138 = vmatpush1.msra.mxu0 0.0
    %139 = vmatprep.subr.mxu0 0.0
    %140 = vmatpush1.msra.mxu0 0.0
    %141 = vmatprep.subr.mxu0 0.0
    %142 = vmatpush1.msra.mxu0 0.0
    %143 = vmatprep.subr.mxu0 0.0
    %144 = vmatpush1.msra.mxu0 0.0
    %145 = vmatprep.subr.mxu0 0.0
    %146 = vmatpush1.msra.mxu0 0.0
    %147 = vmatprep.subr.mxu0 0.0
    %148 = vmatpush1.msra.mxu0 0.0
    %149 = vmatprep.subr.mxu0 0.0
    %150 = vmatpush1.msra.mxu0 0.0
    %151 = vmatprep.subr.mxu0 0.0
    %152 = vmatpush1.msra.mxu0 %v112
    %153 = vmatprep.subr.mxu0 0.0
    %154 = vmatpush1.msra.mxu0 %v110
    %155 = vmatprep.subr.mxu0 0.0
    %156 = vmatpush1.msra.mxu0 %v108
    %157 = vmatprep.subr.mxu0 0.0
    %158 = vmatpush1.msra.mxu0 %v106
    %159 = vmatprep.subr.mxu0 0.0
    %160 = vmatpush2.msra.mxu0 0.0
    %161 = vmatprep.subr.mxu0 0.0
    %162 = vmatpush2.msra.mxu0 0.0
    %163 = vmatprep.subr.mxu0 0.0
    %164 = vmatpush2.msra.mxu0 0.0
    %165 = vmatprep.subr.mxu0 0.0
    %166 = vmatpush2.msra.mxu0 0.0
    %167 = vmatprep.subr.mxu0 0.0
    %168 = vmatpush2.msra.mxu0 0.0
    %169 = vmatprep.subr.mxu0 0.0
    %170 = vmatpush2.msra.mxu0 0.0
    %171 = vmatprep.subr.mxu0 0.0
    %172 = vmatpush2.msra.mxu0 0.0
    %173 = vmatprep.subr.mxu0 0.0
    %174 = vmatpush2.msra.mxu0 0.0
    %175 = vmatprep.subr.mxu0 0.0
    %176 = vmatpush2.msra.mxu0 0.0
    %177 = vmatprep.subr.mxu0 0.0
    %178 = vmatpush2.msra.mxu0 0.0
    %179 = vmatprep.subr.mxu0 0.0
    %180 = vmatpush2.msra.mxu0 0.0
    %181 = vmatprep.subr.mxu0 0.0
    %182 = vmatpush2.msra.mxu0 0.0
    %183 = vmatprep.subr.mxu0 0.0
    %184 = vmatpush2.msra.mxu0 0.0
    %185 = vmatprep.subr.mxu0 0.0
    %186 = vmatpush2.msra.mxu0 0.0
    %187 = vmatprep.subr.mxu0 0.0
    %188 = vmatpush2.msra.mxu0 0.0
    %189 = vmatprep.subr.mxu0 0.0
    %190 = vmatpush2.msra.mxu0 0.0
    %191 = vmatprep.mubr.f32.mxu0 0.0
    %192 = vmatmul.mubr.f32.gmra.mxu0 %v122
    %v193 = vpop.f32.mrf.mxu0
    %v194 = vadd.f32 %v119, %v193
    %v195 = vpop.f32.mrf.mxu0
    %196 = vmatprep.mubr.f32.mxu0 0.0
    %197 = vmatmul.mubr.f32.gmra.mxu0 %v125
    %v198 = vpop.f32.mrf.mxu0
    %v199 = vadd.f32 %v119, %v198
    %v200 = vpop.f32.mrf.mxu0
    %201 = vdwg.mxu0
    %204 = vrot.lane.b32.xlu0 %v194, 96
    %v205 = vpop.permute.xlu0 %204
    %206 = vrot.lane.b32.xlu0 %v199, 96
    %v207 = vpop.permute.xlu0 %206
    %vm208 = vcmask 64512
    %v209 = vsel %vm208, %v194, 0
    %v211 = vsel %vm208, %v199, 0
    %v213 = vsel %vm208, %v205, 0
    %v215 = vsel %vm208, %v207, 0
    %217 = vmatprep.subr.mxu0 0.0
    %218 = vmatpush1.xpose.msra.mxu0 0.0
    %219 = vmatprep.subr.mxu0 0.0
    %220 = vmatpush1.xpose.msra.mxu0 0.0
    %221 = vmatprep.subr.mxu0 0.0
    %222 = vmatpush1.xpose.msra.mxu0 0.0
    %223 = vmatprep.subr.mxu0 0.0
    %224 = vmatpush1.xpose.msra.mxu0 0.0
    %225 = vmatprep.subr.mxu0 0.0
    %226 = vmatpush1.xpose.msra.mxu0 0.0
    %227 = vmatprep.subr.mxu0 0.0
    %228 = vmatpush1.xpose.msra.mxu0 0.0
    %229 = vmatprep.subr.mxu0 0.0
    %230 = vmatpush1.xpose.msra.mxu0 0.0
    %231 = vmatprep.subr.mxu0 0.0
    %232 = vmatpush1.xpose.msra.mxu0 0.0
    %233 = vmatprep.subr.mxu0 0.0
    %234 = vmatpush1.xpose.msra.mxu0 0.0
    %235 = vmatprep.subr.mxu0 0.0
    %236 = vmatpush1.xpose.msra.mxu0 0.0
    %237 = vmatprep.subr.mxu0 0.0
    %238 = vmatpush1.xpose.msra.mxu0 0.0
    %239 = vmatprep.subr.mxu0 0.0
    %240 = vmatpush1.xpose.msra.mxu0 0.0
    %241 = vmatprep.subr.mxu0 0.0
    %242 = vmatpush1.xpose.msra.mxu0 0.0
    %243 = vmatprep.subr.mxu0 0.0
    %244 = vmatpush1.xpose.msra.mxu0 0.0
    %245 = vmatprep.subr.mxu0 0.0
    %246 = vmatpush1.xpose.msra.mxu0 %v215
    %247 = vmatprep.subr.mxu0 0.0
    %248 = vmatpush1.xpose.msra.mxu0 %v213
    %249 = vmatprep.subr.mxu0 0.0
    %250 = vmatpush2.xpose.msra.mxu0 0.0
    %251 = vmatprep.subr.mxu0 0.0
    %252 = vmatpush2.xpose.msra.mxu0 0.0
    %253 = vmatprep.subr.mxu0 0.0
    %254 = vmatpush2.xpose.msra.mxu0 0.0
    %255 = vmatprep.subr.mxu0 0.0
    %256 = vmatpush2.xpose.msra.mxu0 0.0
    %257 = vmatprep.subr.mxu0 0.0
    %258 = vmatpush2.xpose.msra.mxu0 0.0
    %259 = vmatprep.subr.mxu0 0.0
    %260 = vmatpush2.xpose.msra.mxu0 0.0
    %261 = vmatprep.subr.mxu0 0.0
    %262 = vmatpush2.xpose.msra.mxu0 0.0
    %263 = vmatprep.subr.mxu0 0.0
    %264 = vmatpush2.xpose.msra.mxu0 0.0
    %265 = vmatprep.subr.mxu0 0.0
    %266 = vmatpush2.xpose.msra.mxu0 0.0
    %267 = vmatprep.subr.mxu0 0.0
    %268 = vmatpush2.xpose.msra.mxu0 0.0
    %269 = vmatprep.subr.mxu0 0.0
    %270 = vmatpush2.xpose.msra.mxu0 0.0
    %271 = vmatprep.subr.mxu0 0.0
    %272 = vmatpush2.xpose.msra.mxu0 0.0
    %273 = vmatprep.subr.mxu0 0.0
    %274 = vmatpush2.xpose.msra.mxu0 0.0
    %275 = vmatprep.subr.mxu0 0.0
    %276 = vmatpush2.xpose.msra.mxu0 0.0
    %277 = vmatprep.subr.mxu0 0.0
    %278 = vmatpush2.xpose.msra.mxu0 0.0
    %279 = vmatprep.subr.mxu0 0.0
    %280 = vmatpush2.xpose.msra.mxu0 0.0
    %281 = vmatprep.mubr.f32.mxu0 0.0
    %282 = vmatmul.mubr.f32.gmra.mxu0 %v209
    %v283 = vpop.f32.mrf.mxu0
    %v284 = vadd.f32 0.0, %v283
    %v285 = vpop.f32.mrf.mxu0
    %286 = vmatprep.mubr.f32.mxu0 0.0
    %287 = vmatmul.mubr.f32.gmra.mxu0 %v211
    %v288 = vpop.f32.mrf.mxu0
    %v289 = vadd.f32 0.0, %v288
    %v290 = vpop.f32.mrf.mxu0
    %291 = vdwg.mxu0
    %v292 = vmul.f32 %v284, 0.35355338
    %v293 = vmul.f32 %v289, 0.35355338
    %vm294 = vcmp.gt.f32.partialorder %v102, 0.0
    %vm295 = vcmp.gt.f32.partialorder %v103, 0.0
    %v296 = vsel %vm294, %v292, -1e+30
    %v297 = vsel %vm295, %v293, -1e+30
    %vm298 = vcmask 130048
    %v299 = vsel %vm298, %v296, -inf
    %300 = vmax.xlane.f32.xlu0 %v299
    %v301 = vpop.xlane.xlu0 %300
    %v302 = vsel %vm298, %v297, -inf
    %303 = vmax.xlane.f32.xlu0 %v302
    %v304 = vpop.xlane.xlu0 %303
    %v305 = vsub.f32 %v296, %v301
    %v306 = vsub.f32 %v297, %v304
    %v307 = vmul.f32 %v305, 1.442695
    %v308 = vpow.pop %v307
    %v309 = vmul.f32 %v306, 1.442695
    %v310 = vpow.pop %v309
    %v311 = vsel %vm298, %v308, 0.0
    %312 = vadd.xlane.f32.xlu0 %v311
    %v313 = vpop.xlane.xlu0 %312
    %v314 = vsel %vm298, %v310, 0.0
    %315 = vadd.xlane.f32.xlu0 %v314
    %v316 = vpop.xlane.xlu0 %315
    %v317 = vrcp.pop %v313
    %v318 = vrcp.pop %v316
    %v319 = vmul.f32 %v308, %v317
    %v320 = vmul.f32 %v310, %v318
    %321 = vrot.lane.b32.xlu0 %v194, 64
    %v322 = vpop.permute.xlu0 %321
    %323 = vrot.lane.b32.xlu0 %v199, 64
    %v324 = vpop.permute.xlu0 %323
    %v328 = vsel %vm298, %v319, 0
    %v331 = vsel %vm298, %v320, 0
    %333 = vmatprep.subr.mxu0 0.0
    %334 = vmatpush1.msra.mxu0 0.0
    %335 = vmatprep.subr.mxu0 0.0
    %336 = vmatpush1.msra.mxu0 0.0
    %337 = vmatprep.subr.mxu0 0.0
    %338 = vmatpush1.msra.mxu0 0.0
    %339 = vmatprep.subr.mxu0 0.0
    %340 = vmatpush1.msra.mxu0 0.0
    %341 = vmatprep.subr.mxu0 0.0
    %342 = vmatpush1.msra.mxu0 0.0
    %343 = vmatprep.subr.mxu0 0.0
    %344 = vmatpush1.msra.mxu0 0.0
    %345 = vmatprep.subr.mxu0 0.0
    %346 = vmatpush1.msra.mxu0 0.0
    %347 = vmatprep.subr.mxu0 0.0
    %348 = vmatpush1.msra.mxu0 0.0
    %349 = vmatprep.subr.mxu0 0.0
    %350 = vmatpush1.msra.mxu0 0.0
    %351 = vmatprep.subr.mxu0 0.0
    %352 = vmatpush1.msra.mxu0 0.0
    %353 = vmatprep.subr.mxu0 0.0
    %354 = vmatpush1.msra.mxu0 0.0
    %355 = vmatprep.subr.mxu0 0.0
    %356 = vmatpush1.msra.mxu0 0.0
    %357 = vmatprep.subr.mxu0 0.0
    %358 = vmatpush1.msra.mxu0 0.0
    %359 = vmatprep.subr.mxu0 0.0
    %360 = vmatpush1.msra.mxu0 0.0
    %361 = vmatprep.subr.mxu0 0.0
    %362 = vmatpush1.msra.mxu0 %v324
    %363 = vmatprep.subr.mxu0 0.0
    %364 = vmatpush1.msra.mxu0 %v322
    %365 = vmatprep.subr.mxu0 0.0
    %366 = vmatpush2.msra.mxu0 0.0
    %367 = vmatprep.subr.mxu0 0.0
    %368 = vmatpush2.msra.mxu0 0.0
    %369 = vmatprep.subr.mxu0 0.0
    %370 = vmatpush2.msra.mxu0 0.0
    %371 = vmatprep.subr.mxu0 0.0
    %372 = vmatpush2.msra.mxu0 0.0
    %373 = vmatprep.subr.mxu0 0.0
    %374 = vmatpush2.msra.mxu0 0.0
    %375 = vmatprep.subr.mxu0 0.0
    %376 = vmatpush2.msra.mxu0 0.0
    %377 = vmatprep.subr.mxu0 0.0
    %378 = vmatpush2.msra.mxu0 0.0
    %379 = vmatprep.subr.mxu0 0.0
    %380 = vmatpush2.msra.mxu0 0.0
    %381 = vmatprep.subr.mxu0 0.0
    %382 = vmatpush2.msra.mxu0 0.0
    %383 = vmatprep.subr.mxu0 0.0
    %384 = vmatpush2.msra.mxu0 0.0
    %385 = vmatprep.subr.mxu0 0.0
    %386 = vmatpush2.msra.mxu0 0.0
    %387 = vmatprep.subr.mxu0 0.0
    %388 = vmatpush2.msra.mxu0 0.0
    %389 = vmatprep.subr.mxu0 0.0
    %390 = vmatpush2.msra.mxu0 0.0
    %391 = vmatprep.subr.mxu0 0.0
    %392 = vmatpush2.msra.mxu0 0.0
    %393 = vmatprep.subr.mxu0 0.0
    %394 = vmatpush2.msra.mxu0 0.0
    %395 = vmatprep.subr.mxu0 0.0
    %396 = vmatpush2.msra.mxu0 0.0
    %397 = vmatprep.mubr.f32.mxu0 0.0
    %398 = vmatmul.mubr.f32.gmra.mxu0 %v328
    %v399 = vpop.f32.mrf.mxu0
    %v400 = vadd.f32 0.0, %v399
    %v401 = vpop.f32.mrf.mxu0
    %402 = vmatprep.mubr.f32.mxu0 0.0
    %403 = vmatmul.mubr.f32.gmra.mxu0 %v331
    %v404 = vpop.f32.mrf.mxu0
    %v405 = vadd.f32 0.0, %v404
    %v406 = vpop.f32.mrf.mxu0
    %407 = vdwg.mxu0
    %408 = vrot.lane.b32.xlu0 %v194, 120
    %v409 = vpop.permute.xlu0 %408
    %410 = vrot.lane.b32.xlu0 %v199, 120
    %v411 = vpop.permute.xlu0 %410
    %412 = vrot.lane.b32.xlu0 %v194, 88
    %v413 = vpop.permute.xlu0 %412
    %414 = vrot.lane.b32.xlu0 %v199, 88
    %v415 = vpop.permute.xlu0 %414
    %v416 = vsel %vm208, %v409, 0
    %v418 = vsel %vm208, %v411, 0
    %v420 = vsel %vm208, %v413, 0
    %v422 = vsel %vm208, %v415, 0
    %424 = vmatprep.subr.mxu0 0.0
    %425 = vmatpush1.xpose.msra.mxu0 0.0
    %426 = vmatprep.subr.mxu0 0.0
    %427 = vmatpush1.xpose.msra.mxu0 0.0
    %428 = vmatprep.subr.mxu0 0.0
    %429 = vmatpush1.xpose.msra.mxu0 0.0
    %430 = vmatprep.subr.mxu0 0.0
    %431 = vmatpush1.xpose.msra.mxu0 0.0
    %432 = vmatprep.subr.mxu0 0.0
    %433 = vmatpush1.xpose.msra.mxu0 0.0
    %434 = vmatprep.subr.mxu0 0.0
    %435 = vmatpush1.xpose.msra.mxu0 0.0
    %436 = vmatprep.subr.mxu0 0.0
    %437 = vmatpush1.xpose.msra.mxu0 0.0
    %438 = vmatprep.subr.mxu0 0.0
    %439 = vmatpush1.xpose.msra.mxu0 0.0
    %440 = vmatprep.subr.mxu0 0.0
    %441 = vmatpush1.xpose.msra.mxu0 0.0
    %442 = vmatprep.subr.mxu0 0.0
    %443 = vmatpush1.xpose.msra.mxu0 0.0
    %444 = vmatprep.subr.mxu0 0.0
    %445 = vmatpush1.xpose.msra.mxu0 0.0
    %446 = vmatprep.subr.mxu0 0.0
    %447 = vmatpush1.xpose.msra.mxu0 0.0
    %448 = vmatprep.subr.mxu0 0.0
    %449 = vmatpush1.xpose.msra.mxu0 0.0
    %450 = vmatprep.subr.mxu0 0.0
    %451 = vmatpush1.xpose.msra.mxu0 0.0
    %452 = vmatprep.subr.mxu0 0.0
    %453 = vmatpush1.xpose.msra.mxu0 %v422
    %454 = vmatprep.subr.mxu0 0.0
    %455 = vmatpush1.xpose.msra.mxu0 %v420
    %456 = vmatprep.subr.mxu0 0.0
    %457 = vmatpush2.xpose.msra.mxu0 0.0
    %458 = vmatprep.subr.mxu0 0.0
    %459 = vmatpush2.xpose.msra.mxu0 0.0
    %460 = vmatprep.subr.mxu0 0.0
    %461 = vmatpush2.xpose.msra.mxu0 0.0
    %462 = vmatprep.subr.mxu0 0.0
    %463 = vmatpush2.xpose.msra.mxu0 0.0
    %464 = vmatprep.subr.mxu0 0.0
    %465 = vmatpush2.xpose.msra.mxu0 0.0
    %466 = vmatprep.subr.mxu0 0.0
    %467 = vmatpush2.xpose.msra.mxu0 0.0
    %468 = vmatprep.subr.mxu0 0.0
    %469 = vmatpush2.xpose.msra.mxu0 0.0
    %470 = vmatprep.subr.mxu0 0.0
    %471 = vmatpush2.xpose.msra.mxu0 0.0
    %472 = vmatprep.subr.mxu0 0.0
    %473 = vmatpush2.xpose.msra.mxu0 0.0
    %474 = vmatprep.subr.mxu0 0.0
    %475 = vmatpush2.xpose.msra.mxu0 0.0
    %476 = vmatprep.subr.mxu0 0.0
    %477 = vmatpush2.xpose.msra.mxu0 0.0
    %478 = vmatprep.subr.mxu0 0.0
    %479 = vmatpush2.xpose.msra.mxu0 0.0
    %480 = vmatprep.subr.mxu0 0.0
    %481 = vmatpush2.xpose.msra.mxu0 0.0
    %482 = vmatprep.subr.mxu0 0.0
    %483 = vmatpush2.xpose.msra.mxu0 0.0
    %484 = vmatprep.subr.mxu0 0.0
    %485 = vmatpush2.xpose.msra.mxu0 0.0
    %486 = vmatprep.subr.mxu0 0.0
    %487 = vmatpush2.xpose.msra.mxu0 0.0
    %488 = vmatprep.mubr.f32.mxu0 0.0
    %489 = vmatmul.mubr.f32.gmra.mxu0 %v416
    %v490 = vpop.f32.mrf.mxu0
    %v491 = vadd.f32 0.0, %v490
    %v492 = vpop.f32.mrf.mxu0
    %493 = vmatprep.mubr.f32.mxu0 0.0
    %494 = vmatmul.mubr.f32.gmra.mxu0 %v418
    %v495 = vpop.f32.mrf.mxu0
    %v496 = vadd.f32 0.0, %v495
    %v497 = vpop.f32.mrf.mxu0
    %498 = vdwg.mxu0
    %v499 = vmul.f32 %v491, 0.35355338
    %v500 = vmul.f32 %v496, 0.35355338
    %v501 = vsel %vm294, %v499, -1e+30
    %v502 = vsel %vm295, %v500, -1e+30
    %v503 = vsel %vm298, %v501, -inf
    %504 = vmax.xlane.f32.xlu0 %v503
    %v505 = vpop.xlane.xlu0 %504
    %v506 = vsel %vm298, %v502, -inf
    %507 = vmax.xlane.f32.xlu0 %v506
    %v508 = vpop.xlane.xlu0 %507
    %v509 = vsub.f32 %v501, %v505
    %v510 = vsub.f32 %v502, %v508
    %v511 = vmul.f32 %v509, 1.442695
    %v512 = vpow.pop %v511
    %v513 = vmul.f32 %v510, 1.442695
    %v514 = vpow.pop %v513
    %v515 = vsel %vm298, %v512, 0.0
    %516 = vadd.xlane.f32.xlu0 %v515
    %v517 = vpop.xlane.xlu0 %516
    %v518 = vsel %vm298, %v514, 0.0
    %519 = vadd.xlane.f32.xlu0 %v518
    %v520 = vpop.xlane.xlu0 %519
    %v521 = vrcp.pop %v517
    %v522 = vrcp.pop %v520
    %v523 = vmul.f32 %v512, %v521
    %v524 = vmul.f32 %v514, %v522
    %525 = vrot.lane.b32.xlu0 %v194, 56
    %v526 = vpop.permute.xlu0 %525
    %527 = vrot.lane.b32.xlu0 %v199, 56
    %v528 = vpop.permute.xlu0 %527
    %v532 = vsel %vm298, %v523, 0
    %v535 = vsel %vm298, %v524, 0
    %537 = vmatprep.subr.mxu0 0.0
    %538 = vmatpush1.msra.mxu0 0.0
    %539 = vmatprep.subr.mxu0 0.0
    %540 = vmatpush1.msra.mxu0 0.0
    %541 = vmatprep.subr.mxu0 0.0
    %542 = vmatpush1.msra.mxu0 0.0
    %543 = vmatprep.subr.mxu0 0.0
    %544 = vmatpush1.msra.mxu0 0.0
    %545 = vmatprep.subr.mxu0 0.0
    %546 = vmatpush1.msra.mxu0 0.0
    %547 = vmatprep.subr.mxu0 0.0
    %548 = vmatpush1.msra.mxu0 0.0
    %549 = vmatprep.subr.mxu0 0.0
    %550 = vmatpush1.msra.mxu0 0.0
    %551 = vmatprep.subr.mxu0 0.0
    %552 = vmatpush1.msra.mxu0 0.0
    %553 = vmatprep.subr.mxu0 0.0
    %554 = vmatpush1.msra.mxu0 0.0
    %555 = vmatprep.subr.mxu0 0.0
    %556 = vmatpush1.msra.mxu0 0.0
    %557 = vmatprep.subr.mxu0 0.0
    %558 = vmatpush1.msra.mxu0 0.0
    %559 = vmatprep.subr.mxu0 0.0
    %560 = vmatpush1.msra.mxu0 0.0
    %561 = vmatprep.subr.mxu0 0.0
    %562 = vmatpush1.msra.mxu0 0.0
    %563 = vmatprep.subr.mxu0 0.0
    %564 = vmatpush1.msra.mxu0 0.0
    %565 = vmatprep.subr.mxu0 0.0
    %566 = vmatpush1.msra.mxu0 %v528
    %567 = vmatprep.subr.mxu0 0.0
    %568 = vmatpush1.msra.mxu0 %v526
    %569 = vmatprep.subr.mxu0 0.0
    %570 = vmatpush2.msra.mxu0 0.0
    %571 = vmatprep.subr.mxu0 0.0
    %572 = vmatpush2.msra.mxu0 0.0
    %573 = vmatprep.subr.mxu0 0.0
    %574 = vmatpush2.msra.mxu0 0.0
    %575 = vmatprep.subr.mxu0 0.0
    %576 = vmatpush2.msra.mxu0 0.0
    %577 = vmatprep.subr.mxu0 0.0
    %578 = vmatpush2.msra.mxu0 0.0
    %579 = vmatprep.subr.mxu0 0.0
    %580 = vmatpush2.msra.mxu0 0.0
    %581 = vmatprep.subr.mxu0 0.0
    %582 = vmatpush2.msra.mxu0 0.0
    %583 = vmatprep.subr.mxu0 0.0
    %584 = vmatpush2.msra.mxu0 0.0
    %585 = vmatprep.subr.mxu0 0.0
    %586 = vmatpush2.msra.mxu0 0.0
    %587 = vmatprep.subr.mxu0 0.0
    %588 = vmatpush2.msra.mxu0 0.0
    %589 = vmatprep.subr.mxu0 0.0
    %590 = vmatpush2.msra.mxu0 0.0
    %591 = vmatprep.subr.mxu0 0.0
    %592 = vmatpush2.msra.mxu0 0.0
    %593 = vmatprep.subr.mxu0 0.0
    %594 = vmatpush2.msra.mxu0 0.0
    %595 = vmatprep.subr.mxu0 0.0
    %596 = vmatpush2.msra.mxu0 0.0
    %597 = vmatprep.subr.mxu0 0.0
    %598 = vmatpush2.msra.mxu0 0.0
    %599 = vmatprep.subr.mxu0 0.0
    %600 = vmatpush2.msra.mxu0 0.0
    %601 = vmatprep.mubr.f32.mxu0 0.0
    %602 = vmatmul.mubr.f32.gmra.mxu0 %v532
    %v603 = vpop.f32.mrf.mxu0
    %v604 = vadd.f32 0.0, %v603
    %v605 = vpop.f32.mrf.mxu0
    %606 = vmatprep.mubr.f32.mxu0 0.0
    %607 = vmatmul.mubr.f32.gmra.mxu0 %v535
    %v608 = vpop.f32.mrf.mxu0
    %v609 = vadd.f32 0.0, %v608
    %v610 = vpop.f32.mrf.mxu0
    %611 = vdwg.mxu0
    %613 = vrot.lane.b32.xlu0 %v108, 32
    %v614 = vpop.permute.xlu0 %613
    %v617 = vsel %vm208, %v604, 0
    %v620 = vsel %vm208, %v609, 0
    %622 = vmatprep.subr.mxu0 0.0
    %623 = vmatpush1.msra.mxu0 0.0
    %624 = vmatprep.subr.mxu0 0.0
    %625 = vmatpush1.msra.mxu0 0.0
    %626 = vmatprep.subr.mxu0 0.0
    %627 = vmatpush1.msra.mxu0 0.0
    %628 = vmatprep.subr.mxu0 0.0
    %629 = vmatpush1.msra.mxu0 0.0
    %630 = vmatprep.subr.mxu0 0.0
    %631 = vmatpush1.msra.mxu0 0.0
    %632 = vmatprep.subr.mxu0 0.0
    %633 = vmatpush1.msra.mxu0 0.0
    %634 = vmatprep.subr.mxu0 0.0
    %635 = vmatpush1.msra.mxu0 0.0
    %636 = vmatprep.subr.mxu0 0.0
    %637 = vmatpush1.msra.mxu0 0.0
    %638 = vmatprep.subr.mxu0 0.0
    %639 = vmatpush1.msra.mxu0 0.0
    %640 = vmatprep.subr.mxu0 0.0
    %641 = vmatpush1.msra.mxu0 0.0
    %642 = vmatprep.subr.mxu0 0.0
    %643 = vmatpush1.msra.mxu0 0.0
    %644 = vmatprep.subr.mxu0 0.0
    %645 = vmatpush1.msra.mxu0 0.0
    %646 = vmatprep.subr.mxu0 0.0
    %647 = vmatpush1.msra.mxu0 0.0
    %648 = vmatprep.subr.mxu0 0.0
    %649 = vmatpush1.msra.mxu0 0.0
    %650 = vmatprep.subr.mxu0 0.0
    %651 = vmatpush1.msra.mxu0 0.0
    %652 = vmatprep.subr.mxu0 0.0
    %653 = vmatpush1.msra.mxu0 %v614
    %654 = vmatprep.subr.mxu0 0.0
    %655 = vmatpush2.msra.mxu0 0.0
    %656 = vmatprep.subr.mxu0 0.0
    %657 = vmatpush2.msra.mxu0 0.0
    %658 = vmatprep.subr.mxu0 0.0
    %659 = vmatpush2.msra.mxu0 0.0
    %660 = vmatprep.subr.mxu0 0.0
    %661 = vmatpush2.msra.mxu0 0.0
    %662 = vmatprep.subr.mxu0 0.0
    %663 = vmatpush2.msra.mxu0 0.0
    %664 = vmatprep.subr.mxu0 0.0
    %665 = vmatpush2.msra.mxu0 0.0
    %666 = vmatprep.subr.mxu0 0.0
    %667 = vmatpush2.msra.mxu0 0.0
    %668 = vmatprep.subr.mxu0 0.0
    %669 = vmatpush2.msra.mxu0 0.0
    %670 = vmatprep.subr.mxu0 0.0
    %671 = vmatpush2.msra.mxu0 0.0
    %672 = vmatprep.subr.mxu0 0.0
    %673 = vmatpush2.msra.mxu0 0.0
    %674 = vmatprep.subr.mxu0 0.0
    %675 = vmatpush2.msra.mxu0 0.0
    %676 = vmatprep.subr.mxu0 0.0
    %677 = vmatpush2.msra.mxu0 0.0
    %678 = vmatprep.subr.mxu0 0.0
    %679 = vmatpush2.msra.mxu0 0.0
    %680 = vmatprep.subr.mxu0 0.0
    %681 = vmatpush2.msra.mxu0 0.0
    %682 = vmatprep.subr.mxu0 0.0
    %683 = vmatpush2.msra.mxu0 0.0
    %684 = vmatprep.subr.mxu0 0.0
    %685 = vmatpush2.msra.mxu0 0.0
    %686 = vmatprep.mubr.f32.mxu0 0.0
    %687 = vmatmul.mubr.f32.gmra.mxu0 %v617
    %v688 = vpop.f32.mrf.mxu0
    %v689 = vadd.f32 0.0, %v688
    %v690 = vpop.f32.mrf.mxu0
    %691 = vmatprep.mubr.f32.mxu0 0.0
    %692 = vmatmul.mubr.f32.gmra.mxu0 %v620
    %v693 = vpop.f32.mrf.mxu0
    %v694 = vadd.f32 0.0, %v693
    %v695 = vpop.f32.mrf.mxu0
    %696 = vdwg.mxu0
    %698 = vrot.lane.b32.xlu0 %v106, 32
    %v699 = vpop.permute.xlu0 %698
    %v702 = vsel %vm208, %v400, 0
    %v705 = vsel %vm208, %v405, 0
    %707 = vmatprep.subr.mxu0 0.0
    %708 = vmatpush1.msra.mxu0 0.0
    %709 = vmatprep.subr.mxu0 0.0
    %710 = vmatpush1.msra.mxu0 0.0
    %711 = vmatprep.subr.mxu0 0.0
    %712 = vmatpush1.msra.mxu0 0.0
    %713 = vmatprep.subr.mxu0 0.0
    %714 = vmatpush1.msra.mxu0 0.0
    %715 = vmatprep.subr.mxu0 0.0
    %716 = vmatpush1.msra.mxu0 0.0
    %717 = vmatprep.subr.mxu0 0.0
    %718 = vmatpush1.msra.mxu0 0.0
    %719 = vmatprep.subr.mxu0 0.0
    %720 = vmatpush1.msra.mxu0 0.0
    %721 = vmatprep.subr.mxu0 0.0
    %722 = vmatpush1.msra.mxu0 0.0
    %723 = vmatprep.subr.mxu0 0.0
    %724 = vmatpush1.msra.mxu0 0.0
    %725 = vmatprep.subr.mxu0 0.0
    %726 = vmatpush1.msra.mxu0 0.0
    %727 = vmatprep.subr.mxu0 0.0
    %728 = vmatpush1.msra.mxu0 0.0
    %729 = vmatprep.subr.mxu0 0.0
    %730 = vmatpush1.msra.mxu0 0.0
    %731 = vmatprep.subr.mxu0 0.0
    %732 = vmatpush1.msra.mxu0 0.0
    %733 = vmatprep.subr.mxu0 0.0
    %734 = vmatpush1.msra.mxu0 0.0
    %735 = vmatprep.subr.mxu0 0.0
    %736 = vmatpush1.msra.mxu0 0.0
    %737 = vmatprep.subr.mxu0 0.0
    %738 = vmatpush1.msra.mxu0 %v699
    %739 = vmatprep.subr.mxu0 0.0
    %740 = vmatpush2.msra.mxu0 0.0
    %741 = vmatprep.subr.mxu0 0.0
    %742 = vmatpush2.msra.mxu0 0.0
    %743 = vmatprep.subr.mxu0 0.0
    %744 = vmatpush2.msra.mxu0 0.0
    %745 = vmatprep.subr.mxu0 0.0
    %746 = vmatpush2.msra.mxu0 0.0
    %747 = vmatprep.subr.mxu0 0.0
    %748 = vmatpush2.msra.mxu0 0.0
    %749 = vmatprep.subr.mxu0 0.0
    %750 = vmatpush2.msra.mxu0 0.0
    %751 = vmatprep.subr.mxu0 0.0
    %752 = vmatpush2.msra.mxu0 0.0
    %753 = vmatprep.subr.mxu0 0.0
    %754 = vmatpush2.msra.mxu0 0.0
    %755 = vmatprep.subr.mxu0 0.0
    %756 = vmatpush2.msra.mxu0 0.0
    %757 = vmatprep.subr.mxu0 0.0
    %758 = vmatpush2.msra.mxu0 0.0
    %759 = vmatprep.subr.mxu0 0.0
    %760 = vmatpush2.msra.mxu0 0.0
    %761 = vmatprep.subr.mxu0 0.0
    %762 = vmatpush2.msra.mxu0 0.0
    %763 = vmatprep.subr.mxu0 0.0
    %764 = vmatpush2.msra.mxu0 0.0
    %765 = vmatprep.subr.mxu0 0.0
    %766 = vmatpush2.msra.mxu0 0.0
    %767 = vmatprep.subr.mxu0 0.0
    %768 = vmatpush2.msra.mxu0 0.0
    %769 = vmatprep.subr.mxu0 0.0
    %770 = vmatpush2.msra.mxu0 0.0
    %771 = vmatprep.mubr.f32.mxu0 0.0
    %772 = vmatmul.mubr.f32.gmra.mxu0 %v702
    %v773 = vpop.f32.mrf.mxu0
    %v774 = vadd.f32 %v689, %v773
    %v775 = vpop.f32.mrf.mxu0
    %776 = vmatprep.mubr.f32.mxu0 0.0
    %777 = vmatmul.mubr.f32.gmra.mxu0 %v705
    %v778 = vpop.f32.mrf.mxu0
    %v779 = vadd.f32 %v694, %v778
    %v780 = vpop.f32.mrf.mxu0
    %781 = vdwg.mxu0
    %782 = vrot.lane.b32.xlu0 %v194, 112
    %v783 = vpop.permute.xlu0 %782
    %784 = vrot.lane.b32.xlu0 %v199, 112
    %v785 = vpop.permute.xlu0 %784
    %786 = vrot.lane.b32.xlu0 %v194, 80
    %v787 = vpop.permute.xlu0 %786
    %788 = vrot.lane.b32.xlu0 %v199, 80
    %v789 = vpop.permute.xlu0 %788
    %v790 = vsel %vm208, %v783, 0
    %v792 = vsel %vm208, %v785, 0
    %v794 = vsel %vm208, %v787, 0
    %v796 = vsel %vm208, %v789, 0
    %798 = vmatprep.subr.mxu0 0.0
    %799 = vmatpush1.xpose.msra.mxu0 0.0
    %800 = vmatprep.subr.mxu0 0.0
    %801 = vmatpush1.xpose.msra.mxu0 0.0
    %802 = vmatprep.subr.mxu0 0.0
    %803 = vmatpush1.xpose.msra.mxu0 0.0
    %804 = vmatprep.subr.mxu0 0.0
    %805 = vmatpush1.xpose.msra.mxu0 0.0
    %806 = vmatprep.subr.mxu0 0.0
    %807 = vmatpush1.xpose.msra.mxu0 0.0
    %808 = vmatprep.subr.mxu0 0.0
    %809 = vmatpush1.xpose.msra.mxu0 0.0
    %810 = vmatprep.subr.mxu0 0.0
    %811 = vmatpush1.xpose.msra.mxu0 0.0
    %812 = vmatprep.subr.mxu0 0.0
    %813 = vmatpush1.xpose.msra.mxu0 0.0
    %814 = vmatprep.subr.mxu0 0.0
    %815 = vmatpush1.xpose.msra.mxu0 0.0
    %816 = vmatprep.subr.mxu0 0.0
    %817 = vmatpush1.xpose.msra.mxu0 0.0
    %818 = vmatprep.subr.mxu0 0.0
    %819 = vmatpush1.xpose.msra.mxu0 0.0
    %820 = vmatprep.subr.mxu0 0.0
    %821 = vmatpush1.xpose.msra.mxu0 0.0
    %822 = vmatprep.subr.mxu0 0.0
    %823 = vmatpush1.xpose.msra.mxu0 0.0
    %824 = vmatprep.subr.mxu0 0.0
    %825 = vmatpush1.xpose.msra.mxu0 0.0
    %826 = vmatprep.subr.mxu0 0.0
    %827 = vmatpush1.xpose.msra.mxu0 %v796
    %828 = vmatprep.subr.mxu0 0.0
    %829 = vmatpush1.xpose.msra.mxu0 %v794
    %830 = vmatprep.subr.mxu0 0.0
    %831 = vmatpush2.xpose.msra.mxu0 0.0
    %832 = vmatprep.subr.mxu0 0.0
    %833 = vmatpush2.xpose.msra.mxu0 0.0
    %834 = vmatprep.subr.mxu0 0.0
    %835 = vmatpush2.xpose.msra.mxu0 0.0
    %836 = vmatprep.subr.mxu0 0.0
    %837 = vmatpush2.xpose.msra.mxu0 0.0
    %838 = vmatprep.subr.mxu0 0.0
    %839 = vmatpush2.xpose.msra.mxu0 0.0
    %840 = vmatprep.subr.mxu0 0.0
    %841 = vmatpush2.xpose.msra.mxu0 0.0
    %842 = vmatprep.subr.mxu0 0.0
    %843 = vmatpush2.xpose.msra.mxu0 0.0
    %844 = vmatprep.subr.mxu0 0.0
    %845 = vmatpush2.xpose.msra.mxu0 0.0
    %846 = vmatprep.subr.mxu0 0.0
    %847 = vmatpush2.xpose.msra.mxu0 0.0
    %848 = vmatprep.subr.mxu0 0.0
    %849 = vmatpush2.xpose.msra.mxu0 0.0
    %850 = vmatprep.subr.mxu0 0.0
    %851 = vmatpush2.xpose.msra.mxu0 0.0
    %852 = vmatprep.subr.mxu0 0.0
    %853 = vmatpush2.xpose.msra.mxu0 0.0
    %854 = vmatprep.subr.mxu0 0.0
    %855 = vmatpush2.xpose.msra.mxu0 0.0
    %856 = vmatprep.subr.mxu0 0.0
    %857 = vmatpush2.xpose.msra.mxu0 0.0
    %858 = vmatprep.subr.mxu0 0.0
    %859 = vmatpush2.xpose.msra.mxu0 0.0
    %860 = vmatprep.subr.mxu0 0.0
    %861 = vmatpush2.xpose.msra.mxu0 0.0
    %862 = vmatprep.mubr.f32.mxu0 0.0
    %863 = vmatmul.mubr.f32.gmra.mxu0 %v790
    %v864 = vpop.f32.mrf.mxu0
    %v865 = vadd.f32 0.0, %v864
    %v866 = vpop.f32.mrf.mxu0
    %867 = vmatprep.mubr.f32.mxu0 0.0
    %868 = vmatmul.mubr.f32.gmra.mxu0 %v792
    %v869 = vpop.f32.mrf.mxu0
    %v870 = vadd.f32 0.0, %v869
    %v871 = vpop.f32.mrf.mxu0
    %872 = vdwg.mxu0
    %v873 = vmul.f32 %v865, 0.35355338
    %v874 = vmul.f32 %v870, 0.35355338
    %v875 = vsel %vm294, %v873, -1e+30
    %v876 = vsel %vm295, %v874, -1e+30
    %v877 = vsel %vm298, %v875, -inf
    %878 = vmax.xlane.f32.xlu0 %v877
    %v879 = vpop.xlane.xlu0 %878
    %v880 = vsel %vm298, %v876, -inf
    %881 = vmax.xlane.f32.xlu0 %v880
    %v882 = vpop.xlane.xlu0 %881
    %v883 = vsub.f32 %v875, %v879
    %v884 = vsub.f32 %v876, %v882
    %v885 = vmul.f32 %v883, 1.442695
    %v886 = vpow.pop %v885
    %v887 = vmul.f32 %v884, 1.442695
    %v888 = vpow.pop %v887
    %v889 = vsel %vm298, %v886, 0.0
    %890 = vadd.xlane.f32.xlu0 %v889
    %v891 = vpop.xlane.xlu0 %890
    %v892 = vsel %vm298, %v888, 0.0
    %893 = vadd.xlane.f32.xlu0 %v892
    %v894 = vpop.xlane.xlu0 %893
    %v895 = vrcp.pop %v891
    %v896 = vrcp.pop %v894
    %v897 = vmul.f32 %v886, %v895
    %v898 = vmul.f32 %v888, %v896
    %899 = vrot.lane.b32.xlu0 %v194, 48
    %v900 = vpop.permute.xlu0 %899
    %901 = vrot.lane.b32.xlu0 %v199, 48
    %v902 = vpop.permute.xlu0 %901
    %v906 = vsel %vm298, %v897, 0
    %v909 = vsel %vm298, %v898, 0
    %911 = vmatprep.subr.mxu0 0.0
    %912 = vmatpush1.msra.mxu0 0.0
    %913 = vmatprep.subr.mxu0 0.0
    %914 = vmatpush1.msra.mxu0 0.0
    %915 = vmatprep.subr.mxu0 0.0
    %916 = vmatpush1.msra.mxu0 0.0
    %917 = vmatprep.subr.mxu0 0.0
    %918 = vmatpush1.msra.mxu0 0.0
    %919 = vmatprep.subr.mxu0 0.0
    %920 = vmatpush1.msra.mxu0 0.0
    %921 = vmatprep.subr.mxu0 0.0
    %922 = vmatpush1.msra.mxu0 0.0
    %923 = vmatprep.subr.mxu0 0.0
    %924 = vmatpush1.msra.mxu0 0.0
    %925 = vmatprep.subr.mxu0 0.0
    %926 = vmatpush1.msra.mxu0 0.0
    %927 = vmatprep.subr.mxu0 0.0
    %928 = vmatpush1.msra.mxu0 0.0
    %929 = vmatprep.subr.mxu0 0.0
    %930 = vmatpush1.msra.mxu0 0.0
    %931 = vmatprep.subr.mxu0 0.0
    %932 = vmatpush1.msra.mxu0 0.0
    %933 = vmatprep.subr.mxu0 0.0
    %934 = vmatpush1.msra.mxu0 0.0
    %935 = vmatprep.subr.mxu0 0.0
    %936 = vmatpush1.msra.mxu0 0.0
    %937 = vmatprep.subr.mxu0 0.0
    %938 = vmatpush1.msra.mxu0 0.0
    %939 = vmatprep.subr.mxu0 0.0
    %940 = vmatpush1.msra.mxu0 %v902
    %941 = vmatprep.subr.mxu0 0.0
    %942 = vmatpush1.msra.mxu0 %v900
    %943 = vmatprep.subr.mxu0 0.0
    %944 = vmatpush2.msra.mxu0 0.0
    %945 = vmatprep.subr.mxu0 0.0
    %946 = vmatpush2.msra.mxu0 0.0
    %947 = vmatprep.subr.mxu0 0.0
    %948 = vmatpush2.msra.mxu0 0.0
    %949 = vmatprep.subr.mxu0 0.0
    %950 = vmatpush2.msra.mxu0 0.0
    %951 = vmatprep.subr.mxu0 0.0
    %952 = vmatpush2.msra.mxu0 0.0
    %953 = vmatprep.subr.mxu0 0.0
    %954 = vmatpush2.msra.mxu0 0.0
    %955 = vmatprep.subr.mxu0 0.0
    %956 = vmatpush2.msra.mxu0 0.0
    %957 = vmatprep.subr.mxu0 0.0
    %958 = vmatpush2.msra.mxu0 0.0
    %959 = vmatprep.subr.mxu0 0.0
    %960 = vmatpush2.msra.mxu0 0.0
    %961 = vmatprep.subr.mxu0 0.0
    %962 = vmatpush2.msra.mxu0 0.0
    %963 = vmatprep.subr.mxu0 0.0
    %964 = vmatpush2.msra.mxu0 0.0
    %965 = vmatprep.subr.mxu0 0.0
    %966 = vmatpush2.msra.mxu0 0.0
    %967 = vmatprep.subr.mxu0 0.0
    %968 = vmatpush2.msra.mxu0 0.0
    %969 = vmatprep.subr.mxu0 0.0
    %970 = vmatpush2.msra.mxu0 0.0
    %971 = vmatprep.subr.mxu0 0.0
    %972 = vmatpush2.msra.mxu0 0.0
    %973 = vmatprep.subr.mxu0 0.0
    %974 = vmatpush2.msra.mxu0 0.0
    %975 = vmatprep.mubr.f32.mxu0 0.0
    %976 = vmatmul.mubr.f32.gmra.mxu0 %v906
    %v977 = vpop.f32.mrf.mxu0
    %v978 = vadd.f32 0.0, %v977
    %v979 = vpop.f32.mrf.mxu0
    %980 = vmatprep.mubr.f32.mxu0 0.0
    %981 = vmatmul.mubr.f32.gmra.mxu0 %v909
    %v982 = vpop.f32.mrf.mxu0
    %v983 = vadd.f32 0.0, %v982
    %v984 = vpop.f32.mrf.mxu0
    %985 = vdwg.mxu0
    %987 = vrot.lane.b32.xlu0 %v110, 32
    %v988 = vpop.permute.xlu0 %987
    %v991 = vsel %vm208, %v978, 0
    %v994 = vsel %vm208, %v983, 0
    %996 = vmatprep.subr.mxu0 0.0
    %997 = vmatpush1.msra.mxu0 0.0
    %998 = vmatprep.subr.mxu0 0.0
    %999 = vmatpush1.msra.mxu0 0.0
    %1000 = vmatprep.subr.mxu0 0.0
    %1001 = vmatpush1.msra.mxu0 0.0
    %1002 = vmatprep.subr.mxu0 0.0
    %1003 = vmatpush1.msra.mxu0 0.0
    %1004 = vmatprep.subr.mxu0 0.0
    %1005 = vmatpush1.msra.mxu0 0.0
    %1006 = vmatprep.subr.mxu0 0.0
    %1007 = vmatpush1.msra.mxu0 0.0
    %1008 = vmatprep.subr.mxu0 0.0
    %1009 = vmatpush1.msra.mxu0 0.0
    %1010 = vmatprep.subr.mxu0 0.0
    %1011 = vmatpush1.msra.mxu0 0.0
    %1012 = vmatprep.subr.mxu0 0.0
    %1013 = vmatpush1.msra.mxu0 0.0
    %1014 = vmatprep.subr.mxu0 0.0
    %1015 = vmatpush1.msra.mxu0 0.0
    %1016 = vmatprep.subr.mxu0 0.0
    %1017 = vmatpush1.msra.mxu0 0.0
    %1018 = vmatprep.subr.mxu0 0.0
    %1019 = vmatpush1.msra.mxu0 0.0
    %1020 = vmatprep.subr.mxu0 0.0
    %1021 = vmatpush1.msra.mxu0 0.0
    %1022 = vmatprep.subr.mxu0 0.0
    %1023 = vmatpush1.msra.mxu0 0.0
    %1024 = vmatprep.subr.mxu0 0.0
    %1025 = vmatpush1.msra.mxu0 0.0
    %1026 = vmatprep.subr.mxu0 0.0
    %1027 = vmatpush1.msra.mxu0 %v988
    %1028 = vmatprep.subr.mxu0 0.0
    %1029 = vmatpush2.msra.mxu0 0.0
    %1030 = vmatprep.subr.mxu0 0.0
    %1031 = vmatpush2.msra.mxu0 0.0
    %1032 = vmatprep.subr.mxu0 0.0
    %1033 = vmatpush2.msra.mxu0 0.0
    %1034 = vmatprep.subr.mxu0 0.0
    %1035 = vmatpush2.msra.mxu0 0.0
    %1036 = vmatprep.subr.mxu0 0.0
    %1037 = vmatpush2.msra.mxu0 0.0
    %1038 = vmatprep.subr.mxu0 0.0
    %1039 = vmatpush2.msra.mxu0 0.0
    %1040 = vmatprep.subr.mxu0 0.0
    %1041 = vmatpush2.msra.mxu0 0.0
    %1042 = vmatprep.subr.mxu0 0.0
    %1043 = vmatpush2.msra.mxu0 0.0
    %1044 = vmatprep.subr.mxu0 0.0
    %1045 = vmatpush2.msra.mxu0 0.0
    %1046 = vmatprep.subr.mxu0 0.0
    %1047 = vmatpush2.msra.mxu0 0.0
    %1048 = vmatprep.subr.mxu0 0.0
    %1049 = vmatpush2.msra.mxu0 0.0
    %1050 = vmatprep.subr.mxu0 0.0
    %1051 = vmatpush2.msra.mxu0 0.0
    %1052 = vmatprep.subr.mxu0 0.0
    %1053 = vmatpush2.msra.mxu0 0.0
    %1054 = vmatprep.subr.mxu0 0.0
    %1055 = vmatpush2.msra.mxu0 0.0
    %1056 = vmatprep.subr.mxu0 0.0
    %1057 = vmatpush2.msra.mxu0 0.0
    %1058 = vmatprep.subr.mxu0 0.0
    %1059 = vmatpush2.msra.mxu0 0.0
    %1060 = vmatprep.mubr.f32.mxu0 0.0
    %1061 = vmatmul.mubr.f32.gmra.mxu0 %v991
    %v1062 = vpop.f32.mrf.mxu0
    %v1063 = vadd.f32 0.0, %v1062
    %v1064 = vpop.f32.mrf.mxu0
    %1065 = vmatprep.mubr.f32.mxu0 0.0
    %1066 = vmatmul.mubr.f32.gmra.mxu0 %v994
    %v1067 = vpop.f32.mrf.mxu0
    %v1068 = vadd.f32 0.0, %v1067
    %v1069 = vpop.f32.mrf.mxu0
    %1070 = vdwg.mxu0
    %v1071 = vadd.f32 %v774, %v1063
    %v1072 = vadd.f32 %v779, %v1068
    %1073 = vrot.lane.b32.xlu0 %v194, 104
    %v1074 = vpop.permute.xlu0 %1073
    %1075 = vrot.lane.b32.xlu0 %v199, 104
    %v1076 = vpop.permute.xlu0 %1075
    %1077 = vrot.lane.b32.xlu0 %v194, 72
    %v1078 = vpop.permute.xlu0 %1077
    %1079 = vrot.lane.b32.xlu0 %v199, 72
    %v1080 = vpop.permute.xlu0 %1079
    %v1081 = vsel %vm208, %v1074, 0
    %v1083 = vsel %vm208, %v1076, 0
    %v1085 = vsel %vm208, %v1078, 0
    %v1087 = vsel %vm208, %v1080, 0
    %1089 = vmatprep.subr.mxu0 0.0
    %1090 = vmatpush1.xpose.msra.mxu0 0.0
    %1091 = vmatprep.subr.mxu0 0.0
    %1092 = vmatpush1.xpose.msra.mxu0 0.0
    %1093 = vmatprep.subr.mxu0 0.0
    %1094 = vmatpush1.xpose.msra.mxu0 0.0
    %1095 = vmatprep.subr.mxu0 0.0
    %1096 = vmatpush1.xpose.msra.mxu0 0.0
    %1097 = vmatprep.subr.mxu0 0.0
    %1098 = vmatpush1.xpose.msra.mxu0 0.0
    %1099 = vmatprep.subr.mxu0 0.0
    %1100 = vmatpush1.xpose.msra.mxu0 0.0
    %1101 = vmatprep.subr.mxu0 0.0
    %1102 = vmatpush1.xpose.msra.mxu0 0.0
    %1103 = vmatprep.subr.mxu0 0.0
    %1104 = vmatpush1.xpose.msra.mxu0 0.0
    %1105 = vmatprep.subr.mxu0 0.0
    %1106 = vmatpush1.xpose.msra.mxu0 0.0
    %1107 = vmatprep.subr.mxu0 0.0
    %1108 = vmatpush1.xpose.msra.mxu0 0.0
    %1109 = vmatprep.subr.mxu0 0.0
    %1110 = vmatpush1.xpose.msra.mxu0 0.0
    %1111 = vmatprep.subr.mxu0 0.0
    %1112 = vmatpush1.xpose.msra.mxu0 0.0
    %1113 = vmatprep.subr.mxu0 0.0
    %1114 = vmatpush1.xpose.msra.mxu0 0.0
    %1115 = vmatprep.subr.mxu0 0.0
    %1116 = vmatpush1.xpose.msra.mxu0 0.0
    %1117 = vmatprep.subr.mxu0 0.0
    %1118 = vmatpush1.xpose.msra.mxu0 %v1087
    %1119 = vmatprep.subr.mxu0 0.0
    %1120 = vmatpush1.xpose.msra.mxu0 %v1085
    %1121 = vmatprep.subr.mxu0 0.0
    %1122 = vmatpush2.xpose.msra.mxu0 0.0
    %1123 = vmatprep.subr.mxu0 0.0
    %1124 = vmatpush2.xpose.msra.mxu0 0.0
    %1125 = vmatprep.subr.mxu0 0.0
    %1126 = vmatpush2.xpose.msra.mxu0 0.0
    %1127 = vmatprep.subr.mxu0 0.0
    %1128 = vmatpush2.xpose.msra.mxu0 0.0
    %1129 = vmatprep.subr.mxu0 0.0
    %1130 = vmatpush2.xpose.msra.mxu0 0.0
    %1131 = vmatprep.subr.mxu0 0.0
    %1132 = vmatpush2.xpose.msra.mxu0 0.0
    %1133 = vmatprep.subr.mxu0 0.0
    %1134 = vmatpush2.xpose.msra.mxu0 0.0
    %1135 = vmatprep.subr.mxu0 0.0
    %1136 = vmatpush2.xpose.msra.mxu0 0.0
    %1137 = vmatprep.subr.mxu0 0.0
    %1138 = vmatpush2.xpose.msra.mxu0 0.0
    %1139 = vmatprep.subr.mxu0 0.0
    %1140 = vmatpush2.xpose.msra.mxu0 0.0
    %1141 = vmatprep.subr.mxu0 0.0
    %1142 = vmatpush2.xpose.msra.mxu0 0.0
    %1143 = vmatprep.subr.mxu0 0.0
    %1144 = vmatpush2.xpose.msra.mxu0 0.0
    %1145 = vmatprep.subr.mxu0 0.0
    %1146 = vmatpush2.xpose.msra.mxu0 0.0
    %1147 = vmatprep.subr.mxu0 0.0
    %1148 = vmatpush2.xpose.msra.mxu0 0.0
    %1149 = vmatprep.subr.mxu0 0.0
    %1150 = vmatpush2.xpose.msra.mxu0 0.0
    %1151 = vmatprep.subr.mxu0 0.0
    %1152 = vmatpush2.xpose.msra.mxu0 0.0
    %1153 = vmatprep.mubr.f32.mxu0 0.0
    %1154 = vmatmul.mubr.f32.gmra.mxu0 %v1081
    %v1155 = vpop.f32.mrf.mxu0
    %v1156 = vadd.f32 0.0, %v1155
    %v1157 = vpop.f32.mrf.mxu0
    %1158 = vmatprep.mubr.f32.mxu0 0.0
    %1159 = vmatmul.mubr.f32.gmra.mxu0 %v1083
    %v1160 = vpop.f32.mrf.mxu0
    %v1161 = vadd.f32 0.0, %v1160
    %v1162 = vpop.f32.mrf.mxu0
    %1163 = vdwg.mxu0
    %v1164 = vmul.f32 %v1156, 0.35355338
    %v1165 = vmul.f32 %v1161, 0.35355338
    %v1166 = vsel %vm294, %v1164, -1e+30
    %v1167 = vsel %vm295, %v1165, -1e+30
    %v1168 = vsel %vm298, %v1166, -inf
    %1169 = vmax.xlane.f32.xlu0 %v1168
    %v1170 = vpop.xlane.xlu0 %1169
    %v1171 = vsel %vm298, %v1167, -inf
    %1172 = vmax.xlane.f32.xlu0 %v1171
    %v1173 = vpop.xlane.xlu0 %1172
    %v1174 = vsub.f32 %v1166, %v1170
    %v1175 = vsub.f32 %v1167, %v1173
    %v1176 = vmul.f32 %v1174, 1.442695
    %v1177 = vpow.pop %v1176
    %v1178 = vmul.f32 %v1175, 1.442695
    %v1179 = vpow.pop %v1178
    %v1180 = vsel %vm298, %v1177, 0.0
    %1181 = vadd.xlane.f32.xlu0 %v1180
    %v1182 = vpop.xlane.xlu0 %1181
    %v1183 = vsel %vm298, %v1179, 0.0
    %1184 = vadd.xlane.f32.xlu0 %v1183
    %v1185 = vpop.xlane.xlu0 %1184
    %v1186 = vrcp.pop %v1182
    %v1187 = vrcp.pop %v1185
    %v1188 = vmul.f32 %v1177, %v1186
    %v1189 = vmul.f32 %v1179, %v1187
    %1190 = vrot.lane.b32.xlu0 %v194, 40
    %v1191 = vpop.permute.xlu0 %1190
    %1192 = vrot.lane.b32.xlu0 %v199, 40
    %v1193 = vpop.permute.xlu0 %1192
    %v1197 = vsel %vm298, %v1188, 0
    %v1200 = vsel %vm298, %v1189, 0
    %1202 = vmatprep.subr.mxu0 0.0
    %1203 = vmatpush1.msra.mxu0 0.0
    %1204 = vmatprep.subr.mxu0 0.0
    %1205 = vmatpush1.msra.mxu0 0.0
    %1206 = vmatprep.subr.mxu0 0.0
    %1207 = vmatpush1.msra.mxu0 0.0
    %1208 = vmatprep.subr.mxu0 0.0
    %1209 = vmatpush1.msra.mxu0 0.0
    %1210 = vmatprep.subr.mxu0 0.0
    %1211 = vmatpush1.msra.mxu0 0.0
    %1212 = vmatprep.subr.mxu0 0.0
    %1213 = vmatpush1.msra.mxu0 0.0
    %1214 = vmatprep.subr.mxu0 0.0
    %1215 = vmatpush1.msra.mxu0 0.0
    %1216 = vmatprep.subr.mxu0 0.0
    %1217 = vmatpush1.msra.mxu0 0.0
    %1218 = vmatprep.subr.mxu0 0.0
    %1219 = vmatpush1.msra.mxu0 0.0
    %1220 = vmatprep.subr.mxu0 0.0
    %1221 = vmatpush1.msra.mxu0 0.0
    %1222 = vmatprep.subr.mxu0 0.0
    %1223 = vmatpush1.msra.mxu0 0.0
    %1224 = vmatprep.subr.mxu0 0.0
    %1225 = vmatpush1.msra.mxu0 0.0
    %1226 = vmatprep.subr.mxu0 0.0
    %1227 = vmatpush1.msra.mxu0 0.0
    %1228 = vmatprep.subr.mxu0 0.0
    %1229 = vmatpush1.msra.mxu0 0.0
    %1230 = vmatprep.subr.mxu0 0.0
    %1231 = vmatpush1.msra.mxu0 %v1193
    %1232 = vmatprep.subr.mxu0 0.0
    %1233 = vmatpush1.msra.mxu0 %v1191
    %1234 = vmatprep.subr.mxu0 0.0
    %1235 = vmatpush2.msra.mxu0 0.0
    %1236 = vmatprep.subr.mxu0 0.0
    %1237 = vmatpush2.msra.mxu0 0.0
    %1238 = vmatprep.subr.mxu0 0.0
    %1239 = vmatpush2.msra.mxu0 0.0
    %1240 = vmatprep.subr.mxu0 0.0
    %1241 = vmatpush2.msra.mxu0 0.0
    %1242 = vmatprep.subr.mxu0 0.0
    %1243 = vmatpush2.msra.mxu0 0.0
    %1244 = vmatprep.subr.mxu0 0.0
    %1245 = vmatpush2.msra.mxu0 0.0
    %1246 = vmatprep.subr.mxu0 0.0
    %1247 = vmatpush2.msra.mxu0 0.0
    %1248 = vmatprep.subr.mxu0 0.0
    %1249 = vmatpush2.msra.mxu0 0.0
    %1250 = vmatprep.subr.mxu0 0.0
    %1251 = vmatpush2.msra.mxu0 0.0
    %1252 = vmatprep.subr.mxu0 0.0
    %1253 = vmatpush2.msra.mxu0 0.0
    %1254 = vmatprep.subr.mxu0 0.0
    %1255 = vmatpush2.msra.mxu0 0.0
    %1256 = vmatprep.subr.mxu0 0.0
    %1257 = vmatpush2.msra.mxu0 0.0
    %1258 = vmatprep.subr.mxu0 0.0
    %1259 = vmatpush2.msra.mxu0 0.0
    %1260 = vmatprep.subr.mxu0 0.0
    %1261 = vmatpush2.msra.mxu0 0.0
    %1262 = vmatprep.subr.mxu0 0.0
    %1263 = vmatpush2.msra.mxu0 0.0
    %1264 = vmatprep.subr.mxu0 0.0
    %1265 = vmatpush2.msra.mxu0 0.0
    %1266 = vmatprep.mubr.f32.mxu0 0.0
    %1267 = vmatmul.mubr.f32.gmra.mxu0 %v1197
    %v1268 = vpop.f32.mrf.mxu0
    %v1269 = vadd.f32 0.0, %v1268
    %v1270 = vpop.f32.mrf.mxu0
    %1271 = vmatprep.mubr.f32.mxu0 0.0
    %1272 = vmatmul.mubr.f32.gmra.mxu0 %v1200
    %v1273 = vpop.f32.mrf.mxu0
    %v1274 = vadd.f32 0.0, %v1273
    %v1275 = vpop.f32.mrf.mxu0
    %1276 = vdwg.mxu0
    %1278 = vrot.lane.b32.xlu0 %v112, 32
    %v1279 = vpop.permute.xlu0 %1278
    %v1282 = vsel %vm208, %v1269, 0
    %v1285 = vsel %vm208, %v1274, 0
    %1287 = vmatprep.subr.mxu0 0.0
    %1288 = vmatpush1.msra.mxu0 0.0
    %1289 = vmatprep.subr.mxu0 0.0
    %1290 = vmatpush1.msra.mxu0 0.0
    %1291 = vmatprep.subr.mxu0 0.0
    %1292 = vmatpush1.msra.mxu0 0.0
    %1293 = vmatprep.subr.mxu0 0.0
    %1294 = vmatpush1.msra.mxu0 0.0
    %1295 = vmatprep.subr.mxu0 0.0
    %1296 = vmatpush1.msra.mxu0 0.0
    %1297 = vmatprep.subr.mxu0 0.0
    %1298 = vmatpush1.msra.mxu0 0.0
    %1299 = vmatprep.subr.mxu0 0.0
    %1300 = vmatpush1.msra.mxu0 0.0
    %1301 = vmatprep.subr.mxu0 0.0
    %1302 = vmatpush1.msra.mxu0 0.0
    %1303 = vmatprep.subr.mxu0 0.0
    %1304 = vmatpush1.msra.mxu0 0.0
    %1305 = vmatprep.subr.mxu0 0.0
    %1306 = vmatpush1.msra.mxu0 0.0
    %1307 = vmatprep.subr.mxu0 0.0
    %1308 = vmatpush1.msra.mxu0 0.0
    %1309 = vmatprep.subr.mxu0 0.0
    %1310 = vmatpush1.msra.mxu0 0.0
    %1311 = vmatprep.subr.mxu0 0.0
    %1312 = vmatpush1.msra.mxu0 0.0
    %1313 = vmatprep.subr.mxu0 0.0
    %1314 = vmatpush1.msra.mxu0 0.0
    %1315 = vmatprep.subr.mxu0 0.0
    %1316 = vmatpush1.msra.mxu0 0.0
    %1317 = vmatprep.subr.mxu0 0.0
    %1318 = vmatpush1.msra.mxu0 %v1279
    %1319 = vmatprep.subr.mxu0 0.0
    %1320 = vmatpush2.msra.mxu0 0.0
    %1321 = vmatprep.subr.mxu0 0.0
    %1322 = vmatpush2.msra.mxu0 0.0
    %1323 = vmatprep.subr.mxu0 0.0
    %1324 = vmatpush2.msra.mxu0 0.0
    %1325 = vmatprep.subr.mxu0 0.0
    %1326 = vmatpush2.msra.mxu0 0.0
    %1327 = vmatprep.subr.mxu0 0.0
    %1328 = vmatpush2.msra.mxu0 0.0
    %1329 = vmatprep.subr.mxu0 0.0
    %1330 = vmatpush2.msra.mxu0 0.0
    %1331 = vmatprep.subr.mxu0 0.0
    %1332 = vmatpush2.msra.mxu0 0.0
    %1333 = vmatprep.subr.mxu0 0.0
    %1334 = vmatpush2.msra.mxu0 0.0
    %1335 = vmatprep.subr.mxu0 0.0
    %1336 = vmatpush2.msra.mxu0 0.0
    %1337 = vmatprep.subr.mxu0 0.0
    %1338 = vmatpush2.msra.mxu0 0.0
    %1339 = vmatprep.subr.mxu0 0.0
    %1340 = vmatpush2.msra.mxu0 0.0
    %1341 = vmatprep.subr.mxu0 0.0
    %1342 = vmatpush2.msra.mxu0 0.0
    %1343 = vmatprep.subr.mxu0 0.0
    %1344 = vmatpush2.msra.mxu0 0.0
    %1345 = vmatprep.subr.mxu0 0.0
    %1346 = vmatpush2.msra.mxu0 0.0
    %1347 = vmatprep.subr.mxu0 0.0
    %1348 = vmatpush2.msra.mxu0 0.0
    %1349 = vmatprep.subr.mxu0 0.0
    %1350 = vmatpush2.msra.mxu0 0.0
    %1351 = vmatprep.mubr.f32.mxu0 0.0
    %1352 = vmatmul.mubr.f32.gmra.mxu0 %v1282
    %v1353 = vpop.f32.mrf.mxu0
    %v1354 = vadd.f32 0.0, %v1353
    %v1355 = vpop.f32.mrf.mxu0
    %1356 = vmatprep.mubr.f32.mxu0 0.0
    %1357 = vmatmul.mubr.f32.gmra.mxu0 %v1285
    %v1358 = vpop.f32.mrf.mxu0
    %v1359 = vadd.f32 0.0, %v1358
    %v1360 = vpop.f32.mrf.mxu0
    %1361 = vdwg.mxu0
    %v1362 = vadd.f32 %v1071, %v1354
    %v1363 = vadd.f32 %v1072, %v1359
    %v1364 = vlaneseq
    %v1365 = vshrl.u32 %v1364, 7
    %v1366 = vsub.s32 1, %v1365
    %v1367 = vrot.slane %v114, %v1366
    %v1368 = vadd.f32 %v1362, %v1367
    %v1369 = vadd.f32 %v1363, %v1367
    %v1370 = vadd.f32 %v1368, %v98
    %v1371 = vadd.f32 %v1369, %v99
    %v1372 = vsel %vm120, %v1370, 0.0
    %1373 = vadd.xlane.f32.xlu0 %v1372
    %v1374 = vpop.xlane.xlu0 %1373
    %v1375 = vsel %vm120, %v1371, 0.0
    %1376 = vadd.xlane.f32.xlu0 %v1375
    %v1377 = vpop.xlane.xlu0 %1376
    %v1378 = vrcp.pop 32.0
    %v1379 = vmul.f32 %v1374, %v1378
    %v1380 = vmul.f32 %v1377, %v1378
    %v1381 = vsub.f32 %v1370, %v1379
    %v1382 = vsub.f32 %v1371, %v1380
    %v1383 = vmul.f32 %v1381, %v1381
    %v1384 = vmul.f32 %v1382, %v1382
    %v1385 = vsel %vm120, %v1383, 0.0
    %1386 = vadd.xlane.f32.xlu0 %v1385
    %v1387 = vpop.xlane.xlu0 %1386
    %v1388 = vsel %vm120, %v1384, 0.0
    %1389 = vadd.xlane.f32.xlu0 %v1388
    %v1390 = vpop.xlane.xlu0 %1389
    %v1391 = vmul.f32 %v1387, %v1378
    %v1392 = vmul.f32 %v1390, %v1378
    %v1393 = vadd.f32 %v1391, 1e-05
    %v1394 = vadd.f32 %v1392, 1e-05
    %v1395 = vrsqrt.pop %v1393
    %v1396 = vrsqrt.pop %v1394
    %v1397 = vmul.f32 %v1381, %v1395
    %v1398 = vmul.f32 %v1382, %v1396
    %v1399 = vlaneseq
    %v1400 = vshrl.u32 %v1399, 7
    %v1401 = vsub.s32 7, %v1400
    %v1402 = vrot.slane %v114, %v1401
    %v1403 = vmul.f32 %v1397, %v1402
    %v1404 = vmul.f32 %v1398, %v1402
    %v1405 = vlaneseq
    %v1406 = vshrl.u32 %v1405, 7
    %v1407 = vsub.s32 0, %v1406
    %v1408 = vrot.slane %v115, %v1407
    %v1409 = vadd.f32 %v1403, %v1408
    %v1410 = vadd.f32 %v1404, %v1408
    %v1411 = vlaneseq
    %v1412 = vshrl.u32 %v1411, 7
    %v1413 = vsub.s32 2, %v1412
    %v1414 = vrot.slane %v114, %v1413
    %v1416 = vsel %vm120, %v1409, 0
    %v1419 = vsel %vm120, %v1410, 0
    %1421 = vmatprep.subr.mxu0 0.0
    %1422 = vmatpush1.msra.mxu0 0.0
    %1423 = vmatprep.subr.mxu0 0.0
    %1424 = vmatpush1.msra.mxu0 0.0
    %1425 = vmatprep.subr.mxu0 0.0
    %1426 = vmatpush1.msra.mxu0 0.0
    %1427 = vmatprep.subr.mxu0 0.0
    %1428 = vmatpush1.msra.mxu0 0.0
    %1429 = vmatprep.subr.mxu0 0.0
    %1430 = vmatpush1.msra.mxu0 0.0
    %1431 = vmatprep.subr.mxu0 0.0
    %1432 = vmatpush1.msra.mxu0 0.0
    %1433 = vmatprep.subr.mxu0 0.0
    %1434 = vmatpush1.msra.mxu0 0.0
    %1435 = vmatprep.subr.mxu0 0.0
    %1436 = vmatpush1.msra.mxu0 0.0
    %1437 = vmatprep.subr.mxu0 0.0
    %1438 = vmatpush1.msra.mxu0 0.0
    %1439 = vmatprep.subr.mxu0 0.0
    %1440 = vmatpush1.msra.mxu0 0.0
    %1441 = vmatprep.subr.mxu0 0.0
    %1442 = vmatpush1.msra.mxu0 0.0
    %1443 = vmatprep.subr.mxu0 0.0
    %1444 = vmatpush1.msra.mxu0 0.0
    %1445 = vmatprep.subr.mxu0 0.0
    %1446 = vmatpush1.msra.mxu0 %v113
    %1447 = vmatprep.subr.mxu0 0.0
    %1448 = vmatpush1.msra.mxu0 %v111
    %1449 = vmatprep.subr.mxu0 0.0
    %1450 = vmatpush1.msra.mxu0 %v109
    %1451 = vmatprep.subr.mxu0 0.0
    %1452 = vmatpush1.msra.mxu0 %v107
    %1453 = vmatprep.subr.mxu0 0.0
    %1454 = vmatpush2.msra.mxu0 0.0
    %1455 = vmatprep.subr.mxu0 0.0
    %1456 = vmatpush2.msra.mxu0 0.0
    %1457 = vmatprep.subr.mxu0 0.0
    %1458 = vmatpush2.msra.mxu0 0.0
    %1459 = vmatprep.subr.mxu0 0.0
    %1460 = vmatpush2.msra.mxu0 0.0
    %1461 = vmatprep.subr.mxu0 0.0
    %1462 = vmatpush2.msra.mxu0 0.0
    %1463 = vmatprep.subr.mxu0 0.0
    %1464 = vmatpush2.msra.mxu0 0.0
    %1465 = vmatprep.subr.mxu0 0.0
    %1466 = vmatpush2.msra.mxu0 0.0
    %1467 = vmatprep.subr.mxu0 0.0
    %1468 = vmatpush2.msra.mxu0 0.0
    %1469 = vmatprep.subr.mxu0 0.0
    %1470 = vmatpush2.msra.mxu0 0.0
    %1471 = vmatprep.subr.mxu0 0.0
    %1472 = vmatpush2.msra.mxu0 0.0
    %1473 = vmatprep.subr.mxu0 0.0
    %1474 = vmatpush2.msra.mxu0 0.0
    %1475 = vmatprep.subr.mxu0 0.0
    %1476 = vmatpush2.msra.mxu0 0.0
    %1477 = vmatprep.subr.mxu0 0.0
    %1478 = vmatpush2.msra.mxu0 0.0
    %1479 = vmatprep.subr.mxu0 0.0
    %1480 = vmatpush2.msra.mxu0 0.0
    %1481 = vmatprep.subr.mxu0 0.0
    %1482 = vmatpush2.msra.mxu0 0.0
    %1483 = vmatprep.subr.mxu0 0.0
    %1484 = vmatpush2.msra.mxu0 0.0
    %1485 = vmatprep.mubr.f32.mxu0 0.0
    %1486 = vmatmul.mubr.f32.gmra.mxu0 %v1416
    %v1487 = vpop.f32.mrf.mxu0
    %v1488 = vadd.f32 %v1414, %v1487
    %v1489 = vpop.f32.mrf.mxu0
    %1490 = vmatprep.mubr.f32.mxu0 0.0
    %1491 = vmatmul.mubr.f32.gmra.mxu0 %v1419
    %v1492 = vpop.f32.mrf.mxu0
    %v1493 = vadd.f32 %v1414, %v1492
    %v1494 = vpop.f32.mrf.mxu0
    %1495 = vdwg.mxu0
    %v1496 = vld [vmem:[%s5] sm:$0xff]
    %v1497 = vld [vmem:[%s5 + $0x8] sm:$0xff]
    %v1498 = vld [vmem:[%s5 + $0x10] sm:$0xff]
    %v1499 = vld [vmem:[%s5 + $0x18] sm:$0xff]
    %v1500 = vlaneseq
    %v1501 = vshrl.u32 %v1500, 7
    %v1502 = vsub.s32 3, %v1501
    %v1503 = vrot.slane %v114, %v1502
    %v1505 = vsel %vm120, %v100, 0
    %v1508 = vsel %vm120, %v101, 0
    %1510 = vmatprep.subr.mxu0 0.0
    %1511 = vmatpush1.msra.mxu0 0.0
    %1512 = vmatprep.subr.mxu0 0.0
    %1513 = vmatpush1.msra.mxu0 0.0
    %1514 = vmatprep.subr.mxu0 0.0
    %1515 = vmatpush1.msra.mxu0 0.0
    %1516 = vmatprep.subr.mxu0 0.0
    %1517 = vmatpush1.msra.mxu0 0.0
    %1518 = vmatprep.subr.mxu0 0.0
    %1519 = vmatpush1.msra.mxu0 0.0
    %1520 = vmatprep.subr.mxu0 0.0
    %1521 = vmatpush1.msra.mxu0 0.0
    %1522 = vmatprep.subr.mxu0 0.0
    %1523 = vmatpush1.msra.mxu0 0.0
    %1524 = vmatprep.subr.mxu0 0.0
    %1525 = vmatpush1.msra.mxu0 0.0
    %1526 = vmatprep.subr.mxu0 0.0
    %1527 = vmatpush1.msra.mxu0 0.0
    %1528 = vmatprep.subr.mxu0 0.0
    %1529 = vmatpush1.msra.mxu0 0.0
    %1530 = vmatprep.subr.mxu0 0.0
    %1531 = vmatpush1.msra.mxu0 0.0
    %1532 = vmatprep.subr.mxu0 0.0
    %1533 = vmatpush1.msra.mxu0 0.0
    %1534 = vmatprep.subr.mxu0 0.0
    %1535 = vmatpush1.msra.mxu0 %v1499
    %1536 = vmatprep.subr.mxu0 0.0
    %1537 = vmatpush1.msra.mxu0 %v1498
    %1538 = vmatprep.subr.mxu0 0.0
    %1539 = vmatpush1.msra.mxu0 %v1497
    %1540 = vmatprep.subr.mxu0 0.0
    %1541 = vmatpush1.msra.mxu0 %v1496
    %1542 = vmatprep.subr.mxu0 0.0
    %1543 = vmatpush2.msra.mxu0 0.0
    %1544 = vmatprep.subr.mxu0 0.0
    %1545 = vmatpush2.msra.mxu0 0.0
    %1546 = vmatprep.subr.mxu0 0.0
    %1547 = vmatpush2.msra.mxu0 0.0
    %1548 = vmatprep.subr.mxu0 0.0
    %1549 = vmatpush2.msra.mxu0 0.0
    %1550 = vmatprep.subr.mxu0 0.0
    %1551 = vmatpush2.msra.mxu0 0.0
    %1552 = vmatprep.subr.mxu0 0.0
    %1553 = vmatpush2.msra.mxu0 0.0
    %1554 = vmatprep.subr.mxu0 0.0
    %1555 = vmatpush2.msra.mxu0 0.0
    %1556 = vmatprep.subr.mxu0 0.0
    %1557 = vmatpush2.msra.mxu0 0.0
    %1558 = vmatprep.subr.mxu0 0.0
    %1559 = vmatpush2.msra.mxu0 0.0
    %1560 = vmatprep.subr.mxu0 0.0
    %1561 = vmatpush2.msra.mxu0 0.0
    %1562 = vmatprep.subr.mxu0 0.0
    %1563 = vmatpush2.msra.mxu0 0.0
    %1564 = vmatprep.subr.mxu0 0.0
    %1565 = vmatpush2.msra.mxu0 0.0
    %1566 = vmatprep.subr.mxu0 0.0
    %1567 = vmatpush2.msra.mxu0 0.0
    %1568 = vmatprep.subr.mxu0 0.0
    %1569 = vmatpush2.msra.mxu0 0.0
    %1570 = vmatprep.subr.mxu0 0.0
    %1571 = vmatpush2.msra.mxu0 0.0
    %1572 = vmatprep.subr.mxu0 0.0
    %1573 = vmatpush2.msra.mxu0 0.0
    %1574 = vmatprep.mubr.f32.mxu0 0.0
    %1575 = vmatmul.mubr.f32.gmra.mxu0 %v1505
    %v1576 = vpop.f32.mrf.mxu0
    %v1577 = vadd.f32 %v1503, %v1576
    %v1578 = vpop.f32.mrf.mxu0
    %1579 = vmatprep.mubr.f32.mxu0 0.0
    %1580 = vmatmul.mubr.f32.gmra.mxu0 %v1508
    %v1581 = vpop.f32.mrf.mxu0
    %v1582 = vadd.f32 %v1503, %v1581
    %v1583 = vpop.f32.mrf.mxu0
    %1584 = vdwg.mxu0
    %v1586 = vsel %vm208, %v1488, 0
    %v1589 = vsel %vm208, %v1493, 0
    %v1592 = vsel %vm208, %v1577, 0
    %v1595 = vsel %vm208, %v1582, 0
    %1597 = vmatprep.subr.mxu0 0.0
    %1598 = vmatpush1.xpose.msra.mxu0 0.0
    %1599 = vmatprep.subr.mxu0 0.0
    %1600 = vmatpush1.xpose.msra.mxu0 0.0
    %1601 = vmatprep.subr.mxu0 0.0
    %1602 = vmatpush1.xpose.msra.mxu0 0.0
    %1603 = vmatprep.subr.mxu0 0.0
    %1604 = vmatpush1.xpose.msra.mxu0 0.0
    %1605 = vmatprep.subr.mxu0 0.0
    %1606 = vmatpush1.xpose.msra.mxu0 0.0
    %1607 = vmatprep.subr.mxu0 0.0
    %1608 = vmatpush1.xpose.msra.mxu0 0.0
    %1609 = vmatprep.subr.mxu0 0.0
    %1610 = vmatpush1.xpose.msra.mxu0 0.0
    %1611 = vmatprep.subr.mxu0 0.0
    %1612 = vmatpush1.xpose.msra.mxu0 0.0
    %1613 = vmatprep.subr.mxu0 0.0
    %1614 = vmatpush1.xpose.msra.mxu0 0.0
    %1615 = vmatprep.subr.mxu0 0.0
    %1616 = vmatpush1.xpose.msra.mxu0 0.0
    %1617 = vmatprep.subr.mxu0 0.0
    %1618 = vmatpush1.xpose.msra.mxu0 0.0
    %1619 = vmatprep.subr.mxu0 0.0
    %1620 = vmatpush1.xpose.msra.mxu0 0.0
    %1621 = vmatprep.subr.mxu0 0.0
    %1622 = vmatpush1.xpose.msra.mxu0 0.0
    %1623 = vmatprep.subr.mxu0 0.0
    %1624 = vmatpush1.xpose.msra.mxu0 0.0
    %1625 = vmatprep.subr.mxu0 0.0
    %1626 = vmatpush1.xpose.msra.mxu0 %v1595
    %1627 = vmatprep.subr.mxu0 0.0
    %1628 = vmatpush1.xpose.msra.mxu0 %v1592
    %1629 = vmatprep.subr.mxu0 0.0
    %1630 = vmatpush2.xpose.msra.mxu0 0.0
    %1631 = vmatprep.subr.mxu0 0.0
    %1632 = vmatpush2.xpose.msra.mxu0 0.0
    %1633 = vmatprep.subr.mxu0 0.0
    %1634 = vmatpush2.xpose.msra.mxu0 0.0
    %1635 = vmatprep.subr.mxu0 0.0
    %1636 = vmatpush2.xpose.msra.mxu0 0.0
    %1637 = vmatprep.subr.mxu0 0.0
    %1638 = vmatpush2.xpose.msra.mxu0 0.0
    %1639 = vmatprep.subr.mxu0 0.0
    %1640 = vmatpush2.xpose.msra.mxu0 0.0
    %1641 = vmatprep.subr.mxu0 0.0
    %1642 = vmatpush2.xpose.msra.mxu0 0.0
    %1643 = vmatprep.subr.mxu0 0.0
    %1644 = vmatpush2.xpose.msra.mxu0 0.0
    %1645 = vmatprep.subr.mxu0 0.0
    %1646 = vmatpush2.xpose.msra.mxu0 0.0
    %1647 = vmatprep.subr.mxu0 0.0
    %1648 = vmatpush2.xpose.msra.mxu0 0.0
    %1649 = vmatprep.subr.mxu0 0.0
    %1650 = vmatpush2.xpose.msra.mxu0 0.0
    %1651 = vmatprep.subr.mxu0 0.0
    %1652 = vmatpush2.xpose.msra.mxu0 0.0
    %1653 = vmatprep.subr.mxu0 0.0
    %1654 = vmatpush2.xpose.msra.mxu0 0.0
    %1655 = vmatprep.subr.mxu0 0.0
    %1656 = vmatpush2.xpose.msra.mxu0 0.0
    %1657 = vmatprep.subr.mxu0 0.0
    %1658 = vmatpush2.xpose.msra.mxu0 0.0
    %1659 = vmatprep.subr.mxu0 0.0
    %1660 = vmatpush2.xpose.msra.mxu0 0.0
    %1661 = vmatprep.mubr.f32.mxu0 0.0
    %1662 = vmatmul.mubr.f32.gmra.mxu0 %v1586
    %v1663 = vpop.f32.mrf.mxu0
    %v1664 = vadd.f32 0.0, %v1663
    %v1665 = vpop.f32.mrf.mxu0
    %1666 = vmatprep.mubr.f32.mxu0 0.0
    %1667 = vmatmul.mubr.f32.gmra.mxu0 %v1589
    %v1668 = vpop.f32.mrf.mxu0
    %v1669 = vadd.f32 0.0, %v1668
    %v1670 = vpop.f32.mrf.mxu0
    %1671 = vdwg.mxu0
    %v1672 = vmul.f32 %v1664, 0.35355338
    %v1673 = vmul.f32 %v1669, 0.35355338
    %vm1674 = vcmp.gt.f32.partialorder %v104, 0.0
    %vm1675 = vcmp.gt.f32.partialorder %v105, 0.0
    %v1676 = vsel %vm1674, %v1672, -1e+30
    %v1677 = vsel %vm1675, %v1673, -1e+30
    %v1678 = vsel %vm298, %v1676, -inf
    %1679 = vmax.xlane.f32.xlu0 %v1678
    %v1680 = vpop.xlane.xlu0 %1679
    %v1681 = vsel %vm298, %v1677, -inf
    %1682 = vmax.xlane.f32.xlu0 %v1681
    %v1683 = vpop.xlane.xlu0 %1682
    %v1684 = vsub.f32 %v1676, %v1680
    %v1685 = vsub.f32 %v1677, %v1683
    %v1686 = vmul.f32 %v1684, 1.442695
    %v1687 = vpow.pop %v1686
    %v1688 = vmul.f32 %v1685, 1.442695
    %v1689 = vpow.pop %v1688
    %v1690 = vsel %vm298, %v1687, 0.0
    %1691 = vadd.xlane.f32.xlu0 %v1690
    %v1692 = vpop.xlane.xlu0 %1691
    %v1693 = vsel %vm298, %v1689, 0.0
    %1694 = vadd.xlane.f32.xlu0 %v1693
    %v1695 = vpop.xlane.xlu0 %1694
    %v1696 = vrcp.pop %v1692
    %v1697 = vrcp.pop %v1695
    %v1698 = vmul.f32 %v1687, %v1696
    %v1699 = vmul.f32 %v1689, %v1697
    %1700 = vrot.lane.b32.xlu0 %v1577, 96
    %v1701 = vpop.permute.xlu0 %1700
    %1702 = vrot.lane.b32.xlu0 %v1582, 96
    %v1703 = vpop.permute.xlu0 %1702
    %v1707 = vsel %vm298, %v1698, 0
    %v1710 = vsel %vm298, %v1699, 0
    %1712 = vmatprep.subr.mxu0 0.0
    %1713 = vmatpush1.msra.mxu0 0.0
    %1714 = vmatprep.subr.mxu0 0.0
    %1715 = vmatpush1.msra.mxu0 0.0
    %1716 = vmatprep.subr.mxu0 0.0
    %1717 = vmatpush1.msra.mxu0 0.0
    %1718 = vmatprep.subr.mxu0 0.0
    %1719 = vmatpush1.msra.mxu0 0.0
    %1720 = vmatprep.subr.mxu0 0.0
    %1721 = vmatpush1.msra.mxu0 0.0
    %1722 = vmatprep.subr.mxu0 0.0
    %1723 = vmatpush1.msra.mxu0 0.0
    %1724 = vmatprep.subr.mxu0 0.0
    %1725 = vmatpush1.msra.mxu0 0.0
    %1726 = vmatprep.subr.mxu0 0.0
    %1727 = vmatpush1.msra.mxu0 0.0
    %1728 = vmatprep.subr.mxu0 0.0
    %1729 = vmatpush1.msra.mxu0 0.0
    %1730 = vmatprep.subr.mxu0 0.0
    %1731 = vmatpush1.msra.mxu0 0.0
    %1732 = vmatprep.subr.mxu0 0.0
    %1733 = vmatpush1.msra.mxu0 0.0
    %1734 = vmatprep.subr.mxu0 0.0
    %1735 = vmatpush1.msra.mxu0 0.0
    %1736 = vmatprep.subr.mxu0 0.0
    %1737 = vmatpush1.msra.mxu0 0.0
    %1738 = vmatprep.subr.mxu0 0.0
    %1739 = vmatpush1.msra.mxu0 0.0
    %1740 = vmatprep.subr.mxu0 0.0
    %1741 = vmatpush1.msra.mxu0 %v1703
    %1742 = vmatprep.subr.mxu0 0.0
    %1743 = vmatpush1.msra.mxu0 %v1701
    %1744 = vmatprep.subr.mxu0 0.0
    %1745 = vmatpush2.msra.mxu0 0.0
    %1746 = vmatprep.subr.mxu0 0.0
    %1747 = vmatpush2.msra.mxu0 0.0
    %1748 = vmatprep.subr.mxu0 0.0
    %1749 = vmatpush2.msra.mxu0 0.0
    %1750 = vmatprep.subr.mxu0 0.0
    %1751 = vmatpush2.msra.mxu0 0.0
    %1752 = vmatprep.subr.mxu0 0.0
    %1753 = vmatpush2.msra.mxu0 0.0
    %1754 = vmatprep.subr.mxu0 0.0
    %1755 = vmatpush2.msra.mxu0 0.0
    %1756 = vmatprep.subr.mxu0 0.0
    %1757 = vmatpush2.msra.mxu0 0.0
    %1758 = vmatprep.subr.mxu0 0.0
    %1759 = vmatpush2.msra.mxu0 0.0
    %1760 = vmatprep.subr.mxu0 0.0
    %1761 = vmatpush2.msra.mxu0 0.0
    %1762 = vmatprep.subr.mxu0 0.0
    %1763 = vmatpush2.msra.mxu0 0.0
    %1764 = vmatprep.subr.mxu0 0.0
    %1765 = vmatpush2.msra.mxu0 0.0
    %1766 = vmatprep.subr.mxu0 0.0
    %1767 = vmatpush2.msra.mxu0 0.0
    %1768 = vmatprep.subr.mxu0 0.0
    %1769 = vmatpush2.msra.mxu0 0.0
    %1770 = vmatprep.subr.mxu0 0.0
    %1771 = vmatpush2.msra.mxu0 0.0
    %1772 = vmatprep.subr.mxu0 0.0
    %1773 = vmatpush2.msra.mxu0 0.0
    %1774 = vmatprep.subr.mxu0 0.0
    %1775 = vmatpush2.msra.mxu0 0.0
    %1776 = vmatprep.mubr.f32.mxu0 0.0
    %1777 = vmatmul.mubr.f32.gmra.mxu0 %v1707
    %v1778 = vpop.f32.mrf.mxu0
    %v1779 = vadd.f32 0.0, %v1778
    %v1780 = vpop.f32.mrf.mxu0
    %1781 = vmatprep.mubr.f32.mxu0 0.0
    %1782 = vmatmul.mubr.f32.gmra.mxu0 %v1710
    %v1783 = vpop.f32.mrf.mxu0
    %v1784 = vadd.f32 0.0, %v1783
    %v1785 = vpop.f32.mrf.mxu0
    %1786 = vdwg.mxu0
    %1787 = vrot.lane.b32.xlu0 %v1488, 120
    %v1788 = vpop.permute.xlu0 %1787
    %1789 = vrot.lane.b32.xlu0 %v1493, 120
    %v1790 = vpop.permute.xlu0 %1789
    %1791 = vrot.lane.b32.xlu0 %v1577, 120
    %v1792 = vpop.permute.xlu0 %1791
    %1793 = vrot.lane.b32.xlu0 %v1582, 120
    %v1794 = vpop.permute.xlu0 %1793
    %v1795 = vsel %vm208, %v1788, 0
    %v1797 = vsel %vm208, %v1790, 0
    %v1799 = vsel %vm208, %v1792, 0
    %v1801 = vsel %vm208, %v1794, 0
    %1803 = vmatprep.subr.mxu0 0.0
    %1804 = vmatpush1.xpose.msra.mxu0 0.0
    %1805 = vmatprep.subr.mxu0 0.0
    %1806 = vmatpush1.xpose.msra.mxu0 0.0
    %1807 = vmatprep.subr.mxu0 0.0
    %1808 = vmatpush1.xpose.msra.mxu0 0.0
    %1809 = vmatprep.subr.mxu0 0.0
    %1810 = vmatpush1.xpose.msra.mxu0 0.0
    %1811 = vmatprep.subr.mxu0 0.0
    %1812 = vmatpush1.xpose.msra.mxu0 0.0
    %1813 = vmatprep.subr.mxu0 0.0
    %1814 = vmatpush1.xpose.msra.mxu0 0.0
    %1815 = vmatprep.subr.mxu0 0.0
    %1816 = vmatpush1.xpose.msra.mxu0 0.0
    %1817 = vmatprep.subr.mxu0 0.0
    %1818 = vmatpush1.xpose.msra.mxu0 0.0
    %1819 = vmatprep.subr.mxu0 0.0
    %1820 = vmatpush1.xpose.msra.mxu0 0.0
    %1821 = vmatprep.subr.mxu0 0.0
    %1822 = vmatpush1.xpose.msra.mxu0 0.0
    %1823 = vmatprep.subr.mxu0 0.0
    %1824 = vmatpush1.xpose.msra.mxu0 0.0
    %1825 = vmatprep.subr.mxu0 0.0
    %1826 = vmatpush1.xpose.msra.mxu0 0.0
    %1827 = vmatprep.subr.mxu0 0.0
    %1828 = vmatpush1.xpose.msra.mxu0 0.0
    %1829 = vmatprep.subr.mxu0 0.0
    %1830 = vmatpush1.xpose.msra.mxu0 0.0
    %1831 = vmatprep.subr.mxu0 0.0
    %1832 = vmatpush1.xpose.msra.mxu0 %v1801
    %1833 = vmatprep.subr.mxu0 0.0
    %1834 = vmatpush1.xpose.msra.mxu0 %v1799
    %1835 = vmatprep.subr.mxu0 0.0
    %1836 = vmatpush2.xpose.msra.mxu0 0.0
    %1837 = vmatprep.subr.mxu0 0.0
    %1838 = vmatpush2.xpose.msra.mxu0 0.0
    %1839 = vmatprep.subr.mxu0 0.0
    %1840 = vmatpush2.xpose.msra.mxu0 0.0
    %1841 = vmatprep.subr.mxu0 0.0
    %1842 = vmatpush2.xpose.msra.mxu0 0.0
    %1843 = vmatprep.subr.mxu0 0.0
    %1844 = vmatpush2.xpose.msra.mxu0 0.0
    %1845 = vmatprep.subr.mxu0 0.0
    %1846 = vmatpush2.xpose.msra.mxu0 0.0
    %1847 = vmatprep.subr.mxu0 0.0
    %1848 = vmatpush2.xpose.msra.mxu0 0.0
    %1849 = vmatprep.subr.mxu0 0.0
    %1850 = vmatpush2.xpose.msra.mxu0 0.0
    %1851 = vmatprep.subr.mxu0 0.0
    %1852 = vmatpush2.xpose.msra.mxu0 0.0
    %1853 = vmatprep.subr.mxu0 0.0
    %1854 = vmatpush2.xpose.msra.mxu0 0.0
    %1855 = vmatprep.subr.mxu0 0.0
    %1856 = vmatpush2.xpose.msra.mxu0 0.0
    %1857 = vmatprep.subr.mxu0 0.0
    %1858 = vmatpush2.xpose.msra.mxu0 0.0
    %1859 = vmatprep.subr.mxu0 0.0
    %1860 = vmatpush2.xpose.msra.mxu0 0.0
    %1861 = vmatprep.subr.mxu0 0.0
    %1862 = vmatpush2.xpose.msra.mxu0 0.0
    %1863 = vmatprep.subr.mxu0 0.0
    %1864 = vmatpush2.xpose.msra.mxu0 0.0
    %1865 = vmatprep.subr.mxu0 0.0
    %1866 = vmatpush2.xpose.msra.mxu0 0.0
    %1867 = vmatprep.mubr.f32.mxu0 0.0
    %1868 = vmatmul.mubr.f32.gmra.mxu0 %v1795
    %v1869 = vpop.f32.mrf.mxu0
    %v1870 = vadd.f32 0.0, %v1869
    %v1871 = vpop.f32.mrf.mxu0
    %1872 = vmatprep.mubr.f32.mxu0 0.0
    %1873 = vmatmul.mubr.f32.gmra.mxu0 %v1797
    %v1874 = vpop.f32.mrf.mxu0
    %v1875 = vadd.f32 0.0, %v1874
    %v1876 = vpop.f32.mrf.mxu0
    %1877 = vdwg.mxu0
    %v1878 = vmul.f32 %v1870, 0.35355338
    %v1879 = vmul.f32 %v1875, 0.35355338
    %v1880 = vsel %vm1674, %v1878, -1e+30
    %v1881 = vsel %vm1675, %v1879, -1e+30
    %v1882 = vsel %vm298, %v1880, -inf
    %1883 = vmax.xlane.f32.xlu0 %v1882
    %v1884 = vpop.xlane.xlu0 %1883
    %v1885 = vsel %vm298, %v1881, -inf
    %1886 = vmax.xlane.f32.xlu0 %v1885
    %v1887 = vpop.xlane.xlu0 %1886
    %v1888 = vsub.f32 %v1880, %v1884
    %v1889 = vsub.f32 %v1881, %v1887
    %v1890 = vmul.f32 %v1888, 1.442695
    %v1891 = vpow.pop %v1890
    %v1892 = vmul.f32 %v1889, 1.442695
    %v1893 = vpow.pop %v1892
    %v1894 = vsel %vm298, %v1891, 0.0
    %1895 = vadd.xlane.f32.xlu0 %v1894
    %v1896 = vpop.xlane.xlu0 %1895
    %v1897 = vsel %vm298, %v1893, 0.0
    %1898 = vadd.xlane.f32.xlu0 %v1897
    %v1899 = vpop.xlane.xlu0 %1898
    %v1900 = vrcp.pop %v1896
    %v1901 = vrcp.pop %v1899
    %v1902 = vmul.f32 %v1891, %v1900
    %v1903 = vmul.f32 %v1893, %v1901
    %1904 = vrot.lane.b32.xlu0 %v1577, 88
    %v1905 = vpop.permute.xlu0 %1904
    %1906 = vrot.lane.b32.xlu0 %v1582, 88
    %v1907 = vpop.permute.xlu0 %1906
    %v1911 = vsel %vm298, %v1902, 0
    %v1914 = vsel %vm298, %v1903, 0
    %1916 = vmatprep.subr.mxu0 0.0
    %1917 = vmatpush1.msra.mxu0 0.0
    %1918 = vmatprep.subr.mxu0 0.0
    %1919 = vmatpush1.msra.mxu0 0.0
    %1920 = vmatprep.subr.mxu0 0.0
    %1921 = vmatpush1.msra.mxu0 0.0
    %1922 = vmatprep.subr.mxu0 0.0
    %1923 = vmatpush1.msra.mxu0 0.0
    %1924 = vmatprep.subr.mxu0 0.0
    %1925 = vmatpush1.msra.mxu0 0.0
    %1926 = vmatprep.subr.mxu0 0.0
    %1927 = vmatpush1.msra.mxu0 0.0
    %1928 = vmatprep.subr.mxu0 0.0
    %1929 = vmatpush1.msra.mxu0 0.0
    %1930 = vmatprep.subr.mxu0 0.0
    %1931 = vmatpush1.msra.mxu0 0.0
    %1932 = vmatprep.subr.mxu0 0.0
    %1933 = vmatpush1.msra.mxu0 0.0
    %1934 = vmatprep.subr.mxu0 0.0
    %1935 = vmatpush1.msra.mxu0 0.0
    %1936 = vmatprep.subr.mxu0 0.0
    %1937 = vmatpush1.msra.mxu0 0.0
    %1938 = vmatprep.subr.mxu0 0.0
    %1939 = vmatpush1.msra.mxu0 0.0
    %1940 = vmatprep.subr.mxu0 0.0
    %1941 = vmatpush1.msra.mxu0 0.0
    %1942 = vmatprep.subr.mxu0 0.0
    %1943 = vmatpush1.msra.mxu0 0.0
    %1944 = vmatprep.subr.mxu0 0.0
    %1945 = vmatpush1.msra.mxu0 %v1907
    %1946 = vmatprep.subr.mxu0 0.0
    %1947 = vmatpush1.msra.mxu0 %v1905
    %1948 = vmatprep.subr.mxu0 0.0
    %1949 = vmatpush2.msra.mxu0 0.0
    %1950 = vmatprep.subr.mxu0 0.0
    %1951 = vmatpush2.msra.mxu0 0.0
    %1952 = vmatprep.subr.mxu0 0.0
    %1953 = vmatpush2.msra.mxu0 0.0
    %1954 = vmatprep.subr.mxu0 0.0
    %1955 = vmatpush2.msra.mxu0 0.0
    %1956 = vmatprep.subr.mxu0 0.0
    %1957 = vmatpush2.msra.mxu0 0.0
    %1958 = vmatprep.subr.mxu0 0.0
    %1959 = vmatpush2.msra.mxu0 0.0
    %1960 = vmatprep.subr.mxu0 0.0
    %1961 = vmatpush2.msra.mxu0 0.0
    %1962 = vmatprep.subr.mxu0 0.0
    %1963 = vmatpush2.msra.mxu0 0.0
    %1964 = vmatprep.subr.mxu0 0.0
    %1965 = vmatpush2.msra.mxu0 0.0
    %1966 = vmatprep.subr.mxu0 0.0
    %1967 = vmatpush2.msra.mxu0 0.0
    %1968 = vmatprep.subr.mxu0 0.0
    %1969 = vmatpush2.msra.mxu0 0.0
    %1970 = vmatprep.subr.mxu0 0.0
    %1971 = vmatpush2.msra.mxu0 0.0
    %1972 = vmatprep.subr.mxu0 0.0
    %1973 = vmatpush2.msra.mxu0 0.0
    %1974 = vmatprep.subr.mxu0 0.0
    %1975 = vmatpush2.msra.mxu0 0.0
    %1976 = vmatprep.subr.mxu0 0.0
    %1977 = vmatpush2.msra.mxu0 0.0
    %1978 = vmatprep.subr.mxu0 0.0
    %1979 = vmatpush2.msra.mxu0 0.0
    %1980 = vmatprep.mubr.f32.mxu0 0.0
    %1981 = vmatmul.mubr.f32.gmra.mxu0 %v1911
    %v1982 = vpop.f32.mrf.mxu0
    %v1983 = vadd.f32 0.0, %v1982
    %v1984 = vpop.f32.mrf.mxu0
    %1985 = vmatprep.mubr.f32.mxu0 0.0
    %1986 = vmatmul.mubr.f32.gmra.mxu0 %v1914
    %v1987 = vpop.f32.mrf.mxu0
    %v1988 = vadd.f32 0.0, %v1987
    %v1989 = vpop.f32.mrf.mxu0
    %1990 = vdwg.mxu0
    %1992 = vrot.lane.b32.xlu0 %v109, 96
    %v1993 = vpop.permute.xlu0 %1992
    %v1996 = vsel %vm208, %v1983, 0
    %v1999 = vsel %vm208, %v1988, 0
    %2001 = vmatprep.subr.mxu0 0.0
    %2002 = vmatpush1.msra.mxu0 0.0
    %2003 = vmatprep.subr.mxu0 0.0
    %2004 = vmatpush1.msra.mxu0 0.0
    %2005 = vmatprep.subr.mxu0 0.0
    %2006 = vmatpush1.msra.mxu0 0.0
    %2007 = vmatprep.subr.mxu0 0.0
    %2008 = vmatpush1.msra.mxu0 0.0
    %2009 = vmatprep.subr.mxu0 0.0
    %2010 = vmatpush1.msra.mxu0 0.0
    %2011 = vmatprep.subr.mxu0 0.0
    %2012 = vmatpush1.msra.mxu0 0.0
    %2013 = vmatprep.subr.mxu0 0.0
    %2014 = vmatpush1.msra.mxu0 0.0
    %2015 = vmatprep.subr.mxu0 0.0
    %2016 = vmatpush1.msra.mxu0 0.0
    %2017 = vmatprep.subr.mxu0 0.0
    %2018 = vmatpush1.msra.mxu0 0.0
    %2019 = vmatprep.subr.mxu0 0.0
    %2020 = vmatpush1.msra.mxu0 0.0
    %2021 = vmatprep.subr.mxu0 0.0
    %2022 = vmatpush1.msra.mxu0 0.0
    %2023 = vmatprep.subr.mxu0 0.0
    %2024 = vmatpush1.msra.mxu0 0.0
    %2025 = vmatprep.subr.mxu0 0.0
    %2026 = vmatpush1.msra.mxu0 0.0
    %2027 = vmatprep.subr.mxu0 0.0
    %2028 = vmatpush1.msra.mxu0 0.0
    %2029 = vmatprep.subr.mxu0 0.0
    %2030 = vmatpush1.msra.mxu0 0.0
    %2031 = vmatprep.subr.mxu0 0.0
    %2032 = vmatpush1.msra.mxu0 %v1993
    %2033 = vmatprep.subr.mxu0 0.0
    %2034 = vmatpush2.msra.mxu0 0.0
    %2035 = vmatprep.subr.mxu0 0.0
    %2036 = vmatpush2.msra.mxu0 0.0
    %2037 = vmatprep.subr.mxu0 0.0
    %2038 = vmatpush2.msra.mxu0 0.0
    %2039 = vmatprep.subr.mxu0 0.0
    %2040 = vmatpush2.msra.mxu0 0.0
    %2041 = vmatprep.subr.mxu0 0.0
    %2042 = vmatpush2.msra.mxu0 0.0
    %2043 = vmatprep.subr.mxu0 0.0
    %2044 = vmatpush2.msra.mxu0 0.0
    %2045 = vmatprep.subr.mxu0 0.0
    %2046 = vmatpush2.msra.mxu0 0.0
    %2047 = vmatprep.subr.mxu0 0.0
    %2048 = vmatpush2.msra.mxu0 0.0
    %2049 = vmatprep.subr.mxu0 0.0
    %2050 = vmatpush2.msra.mxu0 0.0
    %2051 = vmatprep.subr.mxu0 0.0
    %2052 = vmatpush2.msra.mxu0 0.0
    %2053 = vmatprep.subr.mxu0 0.0
    %2054 = vmatpush2.msra.mxu0 0.0
    %2055 = vmatprep.subr.mxu0 0.0
    %2056 = vmatpush2.msra.mxu0 0.0
    %2057 = vmatprep.subr.mxu0 0.0
    %2058 = vmatpush2.msra.mxu0 0.0
    %2059 = vmatprep.subr.mxu0 0.0
    %2060 = vmatpush2.msra.mxu0 0.0
    %2061 = vmatprep.subr.mxu0 0.0
    %2062 = vmatpush2.msra.mxu0 0.0
    %2063 = vmatprep.subr.mxu0 0.0
    %2064 = vmatpush2.msra.mxu0 0.0
    %2065 = vmatprep.mubr.f32.mxu0 0.0
    %2066 = vmatmul.mubr.f32.gmra.mxu0 %v1996
    %v2067 = vpop.f32.mrf.mxu0
    %v2068 = vadd.f32 0.0, %v2067
    %v2069 = vpop.f32.mrf.mxu0
    %2070 = vmatprep.mubr.f32.mxu0 0.0
    %2071 = vmatmul.mubr.f32.gmra.mxu0 %v1999
    %v2072 = vpop.f32.mrf.mxu0
    %v2073 = vadd.f32 0.0, %v2072
    %v2074 = vpop.f32.mrf.mxu0
    %2075 = vdwg.mxu0
    %2077 = vrot.lane.b32.xlu0 %v107, 96
    %v2078 = vpop.permute.xlu0 %2077
    %v2081 = vsel %vm208, %v1779, 0
    %v2084 = vsel %vm208, %v1784, 0
    %2086 = vmatprep.subr.mxu0 0.0
    %2087 = vmatpush1.msra.mxu0 0.0
    %2088 = vmatprep.subr.mxu0 0.0
    %2089 = vmatpush1.msra.mxu0 0.0
    %2090 = vmatprep.subr.mxu0 0.0
    %2091 = vmatpush1.msra.mxu0 0.0
    %2092 = vmatprep.subr.mxu0 0.0
    %2093 = vmatpush1.msra.mxu0 0.0
    %2094 = vmatprep.subr.mxu0 0.0
    %2095 = vmatpush1.msra.mxu0 0.0
    %2096 = vmatprep.subr.mxu0 0.0
    %2097 = vmatpush1.msra.mxu0 0.0
    %2098 = vmatprep.subr.mxu0 0.0
    %2099 = vmatpush1.msra.mxu0 0.0
    %2100 = vmatprep.subr.mxu0 0.0
    %2101 = vmatpush1.msra.mxu0 0.0
    %2102 = vmatprep.subr.mxu0 0.0
    %2103 = vmatpush1.msra.mxu0 0.0
    %2104 = vmatprep.subr.mxu0 0.0
    %2105 = vmatpush1.msra.mxu0 0.0
    %2106 = vmatprep.subr.mxu0 0.0
    %2107 = vmatpush1.msra.mxu0 0.0
    %2108 = vmatprep.subr.mxu0 0.0
    %2109 = vmatpush1.msra.mxu0 0.0
    %2110 = vmatprep.subr.mxu0 0.0
    %2111 = vmatpush1.msra.mxu0 0.0
    %2112 = vmatprep.subr.mxu0 0.0
    %2113 = vmatpush1.msra.mxu0 0.0
    %2114 = vmatprep.subr.mxu0 0.0
    %2115 = vmatpush1.msra.mxu0 0.0
    %2116 = vmatprep.subr.mxu0 0.0
    %2117 = vmatpush1.msra.mxu0 %v2078
    %2118 = vmatprep.subr.mxu0 0.0
    %2119 = vmatpush2.msra.mxu0 0.0
    %2120 = vmatprep.subr.mxu0 0.0
    %2121 = vmatpush2.msra.mxu0 0.0
    %2122 = vmatprep.subr.mxu0 0.0
    %2123 = vmatpush2.msra.mxu0 0.0
    %2124 = vmatprep.subr.mxu0 0.0
    %2125 = vmatpush2.msra.mxu0 0.0
    %2126 = vmatprep.subr.mxu0 0.0
    %2127 = vmatpush2.msra.mxu0 0.0
    %2128 = vmatprep.subr.mxu0 0.0
    %2129 = vmatpush2.msra.mxu0 0.0
    %2130 = vmatprep.subr.mxu0 0.0
    %2131 = vmatpush2.msra.mxu0 0.0
    %2132 = vmatprep.subr.mxu0 0.0
    %2133 = vmatpush2.msra.mxu0 0.0
    %2134 = vmatprep.subr.mxu0 0.0
    %2135 = vmatpush2.msra.mxu0 0.0
    %2136 = vmatprep.subr.mxu0 0.0
    %2137 = vmatpush2.msra.mxu0 0.0
    %2138 = vmatprep.subr.mxu0 0.0
    %2139 = vmatpush2.msra.mxu0 0.0
    %2140 = vmatprep.subr.mxu0 0.0
    %2141 = vmatpush2.msra.mxu0 0.0
    %2142 = vmatprep.subr.mxu0 0.0
    %2143 = vmatpush2.msra.mxu0 0.0
    %2144 = vmatprep.subr.mxu0 0.0
    %2145 = vmatpush2.msra.mxu0 0.0
    %2146 = vmatprep.subr.mxu0 0.0
    %2147 = vmatpush2.msra.mxu0 0.0
    %2148 = vmatprep.subr.mxu0 0.0
    %2149 = vmatpush2.msra.mxu0 0.0
    %2150 = vmatprep.mubr.f32.mxu0 0.0
    %2151 = vmatmul.mubr.f32.gmra.mxu0 %v2081
    %v2152 = vpop.f32.mrf.mxu0
    %v2153 = vadd.f32 %v2068, %v2152
    %v2154 = vpop.f32.mrf.mxu0
    %2155 = vmatprep.mubr.f32.mxu0 0.0
    %2156 = vmatmul.mubr.f32.gmra.mxu0 %v2084
    %v2157 = vpop.f32.mrf.mxu0
    %v2158 = vadd.f32 %v2073, %v2157
    %v2159 = vpop.f32.mrf.mxu0
    %2160 = vdwg.mxu0
    %2161 = vrot.lane.b32.xlu0 %v1488, 112
    %v2162 = vpop.permute.xlu0 %2161
    %2163 = vrot.lane.b32.xlu0 %v1493, 112
    %v2164 = vpop.permute.xlu0 %2163
    %2165 = vrot.lane.b32.xlu0 %v1577, 112
    %v2166 = vpop.permute.xlu0 %2165
    %2167 = vrot.lane.b32.xlu0 %v1582, 112
    %v2168 = vpop.permute.xlu0 %2167
    %v2169 = vsel %vm208, %v2162, 0
    %v2171 = vsel %vm208, %v2164, 0
    %v2173 = vsel %vm208, %v2166, 0
    %v2175 = vsel %vm208, %v2168, 0
    %2177 = vmatprep.subr.mxu0 0.0
    %2178 = vmatpush1.xpose.msra.mxu0 0.0
    %2179 = vmatprep.subr.mxu0 0.0
    %2180 = vmatpush1.xpose.msra.mxu0 0.0
    %2181 = vmatprep.subr.mxu0 0.0
    %2182 = vmatpush1.xpose.msra.mxu0 0.0
    %2183 = vmatprep.subr.mxu0 0.0
    %2184 = vmatpush1.xpose.msra.mxu0 0.0
    %2185 = vmatprep.subr.mxu0 0.0
    %2186 = vmatpush1.xpose.msra.mxu0 0.0
    %2187 = vmatprep.subr.mxu0 0.0
    %2188 = vmatpush1.xpose.msra.mxu0 0.0
    %2189 = vmatprep.subr.mxu0 0.0
    %2190 = vmatpush1.xpose.msra.mxu0 0.0
    %2191 = vmatprep.subr.mxu0 0.0
    %2192 = vmatpush1.xpose.msra.mxu0 0.0
    %2193 = vmatprep.subr.mxu0 0.0
    %2194 = vmatpush1.xpose.msra.mxu0 0.0
    %2195 = vmatprep.subr.mxu0 0.0
    %2196 = vmatpush1.xpose.msra.mxu0 0.0
    %2197 = vmatprep.subr.mxu0 0.0
    %2198 = vmatpush1.xpose.msra.mxu0 0.0
    %2199 = vmatprep.subr.mxu0 0.0
    %2200 = vmatpush1.xpose.msra.mxu0 0.0
    %2201 = vmatprep.subr.mxu0 0.0
    %2202 = vmatpush1.xpose.msra.mxu0 0.0
    %2203 = vmatprep.subr.mxu0 0.0
    %2204 = vmatpush1.xpose.msra.mxu0 0.0
    %2205 = vmatprep.subr.mxu0 0.0
    %2206 = vmatpush1.xpose.msra.mxu0 %v2175
    %2207 = vmatprep.subr.mxu0 0.0
    %2208 = vmatpush1.xpose.msra.mxu0 %v2173
    %2209 = vmatprep.subr.mxu0 0.0
    %2210 = vmatpush2.xpose.msra.mxu0 0.0
    %2211 = vmatprep.subr.mxu0 0.0
    %2212 = vmatpush2.xpose.msra.mxu0 0.0
    %2213 = vmatprep.subr.mxu0 0.0
    %2214 = vmatpush2.xpose.msra.mxu0 0.0
    %2215 = vmatprep.subr.mxu0 0.0
    %2216 = vmatpush2.xpose.msra.mxu0 0.0
    %2217 = vmatprep.subr.mxu0 0.0
    %2218 = vmatpush2.xpose.msra.mxu0 0.0
    %2219 = vmatprep.subr.mxu0 0.0
    %2220 = vmatpush2.xpose.msra.mxu0 0.0
    %2221 = vmatprep.subr.mxu0 0.0
    %2222 = vmatpush2.xpose.msra.mxu0 0.0
    %2223 = vmatprep.subr.mxu0 0.0
    %2224 = vmatpush2.xpose.msra.mxu0 0.0
    %2225 = vmatprep.subr.mxu0 0.0
    %2226 = vmatpush2.xpose.msra.mxu0 0.0
    %2227 = vmatprep.subr.mxu0 0.0
    %2228 = vmatpush2.xpose.msra.mxu0 0.0
    %2229 = vmatprep.subr.mxu0 0.0
    %2230 = vmatpush2.xpose.msra.mxu0 0.0
    %2231 = vmatprep.subr.mxu0 0.0
    %2232 = vmatpush2.xpose.msra.mxu0 0.0
    %2233 = vmatprep.subr.mxu0 0.0
    %2234 = vmatpush2.xpose.msra.mxu0 0.0
    %2235 = vmatprep.subr.mxu0 0.0
    %2236 = vmatpush2.xpose.msra.mxu0 0.0
    %2237 = vmatprep.subr.mxu0 0.0
    %2238 = vmatpush2.xpose.msra.mxu0 0.0
    %2239 = vmatprep.subr.mxu0 0.0
    %2240 = vmatpush2.xpose.msra.mxu0 0.0
    %2241 = vmatprep.mubr.f32.mxu0 0.0
    %2242 = vmatmul.mubr.f32.gmra.mxu0 %v2169
    %v2243 = vpop.f32.mrf.mxu0
    %v2244 = vadd.f32 0.0, %v2243
    %v2245 = vpop.f32.mrf.mxu0
    %2246 = vmatprep.mubr.f32.mxu0 0.0
    %2247 = vmatmul.mubr.f32.gmra.mxu0 %v2171
    %v2248 = vpop.f32.mrf.mxu0
    %v2249 = vadd.f32 0.0, %v2248
    %v2250 = vpop.f32.mrf.mxu0
    %2251 = vdwg.mxu0
    %v2252 = vmul.f32 %v2244, 0.35355338
    %v2253 = vmul.f32 %v2249, 0.35355338
    %v2254 = vsel %vm1674, %v2252, -1e+30
    %v2255 = vsel %vm1675, %v2253, -1e+30
    %v2256 = vsel %vm298, %v2254, -inf
    %2257 = vmax.xlane.f32.xlu0 %v2256
    %v2258 = vpop.xlane.xlu0 %2257
    %v2259 = vsel %vm298, %v2255, -inf
    %2260 = vmax.xlane.f32.xlu0 %v2259
    %v2261 = vpop.xlane.xlu0 %2260
    %v2262 = vsub.f32 %v2254, %v2258
    %v2263 = vsub.f32 %v2255, %v2261
    %v2264 = vmul.f32 %v2262, 1.442695
    %v2265 = vpow.pop %v2264
    %v2266 = vmul.f32 %v2263, 1.442695
    %v2267 = vpow.pop %v2266
    %v2268 = vsel %vm298, %v2265, 0.0
    %2269 = vadd.xlane.f32.xlu0 %v2268
    %v2270 = vpop.xlane.xlu0 %2269
    %v2271 = vsel %vm298, %v2267, 0.0
    %2272 = vadd.xlane.f32.xlu0 %v2271
    %v2273 = vpop.xlane.xlu0 %2272
    %v2274 = vrcp.pop %v2270
    %v2275 = vrcp.pop %v2273
    %v2276 = vmul.f32 %v2265, %v2274
    %v2277 = vmul.f32 %v2267, %v2275
    %2278 = vrot.lane.b32.xlu0 %v1577, 80
    %v2279 = vpop.permute.xlu0 %2278
    %2280 = vrot.lane.b32.xlu0 %v1582, 80
    %v2281 = vpop.permute.xlu0 %2280
    %v2285 = vsel %vm298, %v2276, 0
    %v2288 = vsel %vm298, %v2277, 0
    %2290 = vmatprep.subr.mxu0 0.0
    %2291 = vmatpush1.msra.mxu0 0.0
    %2292 = vmatprep.subr.mxu0 0.0
    %2293 = vmatpush1.msra.mxu0 0.0
    %2294 = vmatprep.subr.mxu0 0.0
    %2295 = vmatpush1.msra.mxu0 0.0
    %2296 = vmatprep.subr.mxu0 0.0
    %2297 = vmatpush1.msra.mxu0 0.0
    %2298 = vmatprep.subr.mxu0 0.0
    %2299 = vmatpush1.msra.mxu0 0.0
    %2300 = vmatprep.subr.mxu0 0.0
    %2301 = vmatpush1.msra.mxu0 0.0
    %2302 = vmatprep.subr.mxu0 0.0
    %2303 = vmatpush1.msra.mxu0 0.0
    %2304 = vmatprep.subr.mxu0 0.0
    %2305 = vmatpush1.msra.mxu0 0.0
    %2306 = vmatprep.subr.mxu0 0.0
    %2307 = vmatpush1.msra.mxu0 0.0
    %2308 = vmatprep.subr.mxu0 0.0
    %2309 = vmatpush1.msra.mxu0 0.0
    %2310 = vmatprep.subr.mxu0 0.0
    %2311 = vmatpush1.msra.mxu0 0.0
    %2312 = vmatprep.subr.mxu0 0.0
    %2313 = vmatpush1.msra.mxu0 0.0
    %2314 = vmatprep.subr.mxu0 0.0
    %2315 = vmatpush1.msra.mxu0 0.0
    %2316 = vmatprep.subr.mxu0 0.0
    %2317 = vmatpush1.msra.mxu0 0.0
    %2318 = vmatprep.subr.mxu0 0.0
    %2319 = vmatpush1.msra.mxu0 %v2281
    %2320 = vmatprep.subr.mxu0 0.0
    %2321 = vmatpush1.msra.mxu0 %v2279
    %2322 = vmatprep.subr.mxu0 0.0
    %2323 = vmatpush2.msra.mxu0 0.0
    %2324 = vmatprep.subr.mxu0 0.0
    %2325 = vmatpush2.msra.mxu0 0.0
    %2326 = vmatprep.subr.mxu0 0.0
    %2327 = vmatpush2.msra.mxu0 0.0
    %2328 = vmatprep.subr.mxu0 0.0
    %2329 = vmatpush2.msra.mxu0 0.0
    %2330 = vmatprep.subr.mxu0 0.0
    %2331 = vmatpush2.msra.mxu0 0.0
    %2332 = vmatprep.subr.mxu0 0.0
    %2333 = vmatpush2.msra.mxu0 0.0
    %2334 = vmatprep.subr.mxu0 0.0
    %2335 = vmatpush2.msra.mxu0 0.0
    %2336 = vmatprep.subr.mxu0 0.0
    %2337 = vmatpush2.msra.mxu0 0.0
    %2338 = vmatprep.subr.mxu0 0.0
    %2339 = vmatpush2.msra.mxu0 0.0
    %2340 = vmatprep.subr.mxu0 0.0
    %2341 = vmatpush2.msra.mxu0 0.0
    %2342 = vmatprep.subr.mxu0 0.0
    %2343 = vmatpush2.msra.mxu0 0.0
    %2344 = vmatprep.subr.mxu0 0.0
    %2345 = vmatpush2.msra.mxu0 0.0
    %2346 = vmatprep.subr.mxu0 0.0
    %2347 = vmatpush2.msra.mxu0 0.0
    %2348 = vmatprep.subr.mxu0 0.0
    %2349 = vmatpush2.msra.mxu0 0.0
    %2350 = vmatprep.subr.mxu0 0.0
    %2351 = vmatpush2.msra.mxu0 0.0
    %2352 = vmatprep.subr.mxu0 0.0
    %2353 = vmatpush2.msra.mxu0 0.0
    %2354 = vmatprep.mubr.f32.mxu0 0.0
    %2355 = vmatmul.mubr.f32.gmra.mxu0 %v2285
    %v2356 = vpop.f32.mrf.mxu0
    %v2357 = vadd.f32 0.0, %v2356
    %v2358 = vpop.f32.mrf.mxu0
    %2359 = vmatprep.mubr.f32.mxu0 0.0
    %2360 = vmatmul.mubr.f32.gmra.mxu0 %v2288
    %v2361 = vpop.f32.mrf.mxu0
    %v2362 = vadd.f32 0.0, %v2361
    %v2363 = vpop.f32.mrf.mxu0
    %2364 = vdwg.mxu0
    %2366 = vrot.lane.b32.xlu0 %v111, 96
    %v2367 = vpop.permute.xlu0 %2366
    %v2370 = vsel %vm208, %v2357, 0
    %v2373 = vsel %vm208, %v2362, 0
    %2375 = vmatprep.subr.mxu0 0.0
    %2376 = vmatpush1.msra.mxu0 0.0
    %2377 = vmatprep.subr.mxu0 0.0
    %2378 = vmatpush1.msra.mxu0 0.0
    %2379 = vmatprep.subr.mxu0 0.0
    %2380 = vmatpush1.msra.mxu0 0.0
    %2381 = vmatprep.subr.mxu0 0.0
    %2382 = vmatpush1.msra.mxu0 0.0
    %2383 = vmatprep.subr.mxu0 0.0
    %2384 = vmatpush1.msra.mxu0 0.0
    %2385 = vmatprep.subr.mxu0 0.0
    %2386 = vmatpush1.msra.mxu0 0.0
    %2387 = vmatprep.subr.mxu0 0.0
    %2388 = vmatpush1.msra.mxu0 0.0
    %2389 = vmatprep.subr.mxu0 0.0
    %2390 = vmatpush1.msra.mxu0 0.0
    %2391 = vmatprep.subr.mxu0 0.0
    %2392 = vmatpush1.msra.mxu0 0.0
    %2393 = vmatprep.subr.mxu0 0.0
    %2394 = vmatpush1.msra.mxu0 0.0
    %2395 = vmatprep.subr.mxu0 0.0
    %2396 = vmatpush1.msra.mxu0 0.0
    %2397 = vmatprep.subr.mxu0 0.0
    %2398 = vmatpush1.msra.mxu0 0.0
    %2399 = vmatprep.subr.mxu0 0.0
    %2400 = vmatpush1.msra.mxu0 0.0
    %2401 = vmatprep.subr.mxu0 0.0
    %2402 = vmatpush1.msra.mxu0 0.0
    %2403 = vmatprep.subr.mxu0 0.0
    %2404 = vmatpush1.msra.mxu0 0.0
    %2405 = vmatprep.subr.mxu0 0.0
    %2406 = vmatpush1.msra.mxu0 %v2367
    %2407 = vmatprep.subr.mxu0 0.0
    %2408 = vmatpush2.msra.mxu0 0.0
    %2409 = vmatprep.subr.mxu0 0.0
    %2410 = vmatpush2.msra.mxu0 0.0
    %2411 = vmatprep.subr.mxu0 0.0
    %2412 = vmatpush2.msra.mxu0 0.0
    %2413 = vmatprep.subr.mxu0 0.0
    %2414 = vmatpush2.msra.mxu0 0.0
    %2415 = vmatprep.subr.mxu0 0.0
    %2416 = vmatpush2.msra.mxu0 0.0
    %2417 = vmatprep.subr.mxu0 0.0
    %2418 = vmatpush2.msra.mxu0 0.0
    %2419 = vmatprep.subr.mxu0 0.0
    %2420 = vmatpush2.msra.mxu0 0.0
    %2421 = vmatprep.subr.mxu0 0.0
    %2422 = vmatpush2.msra.mxu0 0.0
    %2423 = vmatprep.subr.mxu0 0.0
    %2424 = vmatpush2.msra.mxu0 0.0
    %2425 = vmatprep.subr.mxu0 0.0
    %2426 = vmatpush2.msra.mxu0 0.0
    %2427 = vmatprep.subr.mxu0 0.0
    %2428 = vmatpush2.msra.mxu0 0.0
    %2429 = vmatprep.subr.mxu0 0.0
    %2430 = vmatpush2.msra.mxu0 0.0
    %2431 = vmatprep.subr.mxu0 0.0
    %2432 = vmatpush2.msra.mxu0 0.0
    %2433 = vmatprep.subr.mxu0 0.0
    %2434 = vmatpush2.msra.mxu0 0.0
    %2435 = vmatprep.subr.mxu0 0.0
    %2436 = vmatpush2.msra.mxu0 0.0
    %2437 = vmatprep.subr.mxu0 0.0
    %2438 = vmatpush2.msra.mxu0 0.0
    %2439 = vmatprep.mubr.f32.mxu0 0.0
    %2440 = vmatmul.mubr.f32.gmra.mxu0 %v2370
    %v2441 = vpop.f32.mrf.mxu0
    %v2442 = vadd.f32 0.0, %v2441
    %v2443 = vpop.f32.mrf.mxu0
    %2444 = vmatprep.mubr.f32.mxu0 0.0
    %2445 = vmatmul.mubr.f32.gmra.mxu0 %v2373
    %v2446 = vpop.f32.mrf.mxu0
    %v2447 = vadd.f32 0.0, %v2446
    %v2448 = vpop.f32.mrf.mxu0
    %2449 = vdwg.mxu0
    %v2450 = vadd.f32 %v2153, %v2442
    %v2451 = vadd.f32 %v2158, %v2447
    %2452 = vrot.lane.b32.xlu0 %v1488, 104
    %v2453 = vpop.permute.xlu0 %2452
    %2454 = vrot.lane.b32.xlu0 %v1493, 104
    %v2455 = vpop.permute.xlu0 %2454
    %2456 = vrot.lane.b32.xlu0 %v1577, 104
    %v2457 = vpop.permute.xlu0 %2456
    %2458 = vrot.lane.b32.xlu0 %v1582, 104
    %v2459 = vpop.permute.xlu0 %2458
    %v2460 = vsel %vm208, %v2453, 0
    %v2462 = vsel %vm208, %v2455, 0
    %v2464 = vsel %vm208, %v2457, 0
    %v2466 = vsel %vm208, %v2459, 0
    %2468 = vmatprep.subr.mxu0 0.0
    %2469 = vmatpush1.xpose.msra.mxu0 0.0
    %2470 = vmatprep.subr.mxu0 0.0
    %2471 = vmatpush1.xpose.msra.mxu0 0.0
    %2472 = vmatprep.subr.mxu0 0.0
    %2473 = vmatpush1.xpose.msra.mxu0 0.0
    %2474 = vmatprep.subr.mxu0 0.0
    %2475 = vmatpush1.xpose.msra.mxu0 0.0
    %2476 = vmatprep.subr.mxu0 0.0
    %2477 = vmatpush1.xpose.msra.mxu0 0.0
    %2478 = vmatprep.subr.mxu0 0.0
    %2479 = vmatpush1.xpose.msra.mxu0 0.0
    %2480 = vmatprep.subr.mxu0 0.0
    %2481 = vmatpush1.xpose.msra.mxu0 0.0
    %2482 = vmatprep.subr.mxu0 0.0
    %2483 = vmatpush1.xpose.msra.mxu0 0.0
    %2484 = vmatprep.subr.mxu0 0.0
    %2485 = vmatpush1.xpose.msra.mxu0 0.0
    %2486 = vmatprep.subr.mxu0 0.0
    %2487 = vmatpush1.xpose.msra.mxu0 0.0
    %2488 = vmatprep.subr.mxu0 0.0
    %2489 = vmatpush1.xpose.msra.mxu0 0.0
    %2490 = vmatprep.subr.mxu0 0.0
    %2491 = vmatpush1.xpose.msra.mxu0 0.0
    %2492 = vmatprep.subr.mxu0 0.0
    %2493 = vmatpush1.xpose.msra.mxu0 0.0
    %2494 = vmatprep.subr.mxu0 0.0
    %2495 = vmatpush1.xpose.msra.mxu0 0.0
    %2496 = vmatprep.subr.mxu0 0.0
    %2497 = vmatpush1.xpose.msra.mxu0 %v2466
    %2498 = vmatprep.subr.mxu0 0.0
    %2499 = vmatpush1.xpose.msra.mxu0 %v2464
    %2500 = vmatprep.subr.mxu0 0.0
    %2501 = vmatpush2.xpose.msra.mxu0 0.0
    %2502 = vmatprep.subr.mxu0 0.0
    %2503 = vmatpush2.xpose.msra.mxu0 0.0
    %2504 = vmatprep.subr.mxu0 0.0
    %2505 = vmatpush2.xpose.msra.mxu0 0.0
    %2506 = vmatprep.subr.mxu0 0.0
    %2507 = vmatpush2.xpose.msra.mxu0 0.0
    %2508 = vmatprep.subr.mxu0 0.0
    %2509 = vmatpush2.xpose.msra.mxu0 0.0
    %2510 = vmatprep.subr.mxu0 0.0
    %2511 = vmatpush2.xpose.msra.mxu0 0.0
    %2512 = vmatprep.subr.mxu0 0.0
    %2513 = vmatpush2.xpose.msra.mxu0 0.0
    %2514 = vmatprep.subr.mxu0 0.0
    %2515 = vmatpush2.xpose.msra.mxu0 0.0
    %2516 = vmatprep.subr.mxu0 0.0
    %2517 = vmatpush2.xpose.msra.mxu0 0.0
    %2518 = vmatprep.subr.mxu0 0.0
    %2519 = vmatpush2.xpose.msra.mxu0 0.0
    %2520 = vmatprep.subr.mxu0 0.0
    %2521 = vmatpush2.xpose.msra.mxu0 0.0
    %2522 = vmatprep.subr.mxu0 0.0
    %2523 = vmatpush2.xpose.msra.mxu0 0.0
    %2524 = vmatprep.subr.mxu0 0.0
    %2525 = vmatpush2.xpose.msra.mxu0 0.0
    %2526 = vmatprep.subr.mxu0 0.0
    %2527 = vmatpush2.xpose.msra.mxu0 0.0
    %2528 = vmatprep.subr.mxu0 0.0
    %2529 = vmatpush2.xpose.msra.mxu0 0.0
    %2530 = vmatprep.subr.mxu0 0.0
    %2531 = vmatpush2.xpose.msra.mxu0 0.0
    %2532 = vmatprep.mubr.f32.mxu0 0.0
    %2533 = vmatmul.mubr.f32.gmra.mxu0 %v2460
    %v2534 = vpop.f32.mrf.mxu0
    %v2535 = vadd.f32 0.0, %v2534
    %v2536 = vpop.f32.mrf.mxu0
    %2537 = vmatprep.mubr.f32.mxu0 0.0
    %2538 = vmatmul.mubr.f32.gmra.mxu0 %v2462
    %v2539 = vpop.f32.mrf.mxu0
    %v2540 = vadd.f32 0.0, %v2539
    %v2541 = vpop.f32.mrf.mxu0
    %2542 = vdwg.mxu0
    %v2543 = vmul.f32 %v2535, 0.35355338
    %v2544 = vmul.f32 %v2540, 0.35355338
    %v2545 = vsel %vm1674, %v2543, -1e+30
    %v2546 = vsel %vm1675, %v2544, -1e+30
    %v2547 = vsel %vm298, %v2545, -inf
    %2548 = vmax.xlane.f32.xlu0 %v2547
    %v2549 = vpop.xlane.xlu0 %2548
    %v2550 = vsel %vm298, %v2546, -inf
    %2551 = vmax.xlane.f32.xlu0 %v2550
    %v2552 = vpop.xlane.xlu0 %2551
    %v2553 = vsub.f32 %v2545, %v2549
    %v2554 = vsub.f32 %v2546, %v2552
    %v2555 = vmul.f32 %v2553, 1.442695
    %v2556 = vpow.pop %v2555
    %v2557 = vmul.f32 %v2554, 1.442695
    %v2558 = vpow.pop %v2557
    %v2559 = vsel %vm298, %v2556, 0.0
    %2560 = vadd.xlane.f32.xlu0 %v2559
    %v2561 = vpop.xlane.xlu0 %2560
    %v2562 = vsel %vm298, %v2558, 0.0
    %2563 = vadd.xlane.f32.xlu0 %v2562
    %v2564 = vpop.xlane.xlu0 %2563
    %v2565 = vrcp.pop %v2561
    %v2566 = vrcp.pop %v2564
    %v2567 = vmul.f32 %v2556, %v2565
    %v2568 = vmul.f32 %v2558, %v2566
    %2569 = vrot.lane.b32.xlu0 %v1577, 72
    %v2570 = vpop.permute.xlu0 %2569
    %2571 = vrot.lane.b32.xlu0 %v1582, 72
    %v2572 = vpop.permute.xlu0 %2571
    %v2576 = vsel %vm298, %v2567, 0
    %v2579 = vsel %vm298, %v2568, 0
    %2581 = vmatprep.subr.mxu0 0.0
    %2582 = vmatpush1.msra.mxu0 0.0
    %2583 = vmatprep.subr.mxu0 0.0
    %2584 = vmatpush1.msra.mxu0 0.0
    %2585 = vmatprep.subr.mxu0 0.0
    %2586 = vmatpush1.msra.mxu0 0.0
    %2587 = vmatprep.subr.mxu0 0.0
    %2588 = vmatpush1.msra.mxu0 0.0
    %2589 = vmatprep.subr.mxu0 0.0
    %2590 = vmatpush1.msra.mxu0 0.0
    %2591 = vmatprep.subr.mxu0 0.0
    %2592 = vmatpush1.msra.mxu0 0.0
    %2593 = vmatprep.subr.mxu0 0.0
    %2594 = vmatpush1.msra.mxu0 0.0
    %2595 = vmatprep.subr.mxu0 0.0
    %2596 = vmatpush1.msra.mxu0 0.0
    %2597 = vmatprep.subr.mxu0 0.0
    %2598 = vmatpush1.msra.mxu0 0.0
    %2599 = vmatprep.subr.mxu0 0.0
    %2600 = vmatpush1.msra.mxu0 0.0
    %2601 = vmatprep.subr.mxu0 0.0
    %2602 = vmatpush1.msra.mxu0 0.0
    %2603 = vmatprep.subr.mxu0 0.0
    %2604 = vmatpush1.msra.mxu0 0.0
    %2605 = vmatprep.subr.mxu0 0.0
    %2606 = vmatpush1.msra.mxu0 0.0
    %2607 = vmatprep.subr.mxu0 0.0
    %2608 = vmatpush1.msra.mxu0 0.0
    %2609 = vmatprep.subr.mxu0 0.0
    %2610 = vmatpush1.msra.mxu0 %v2572
    %2611 = vmatprep.subr.mxu0 0.0
    %2612 = vmatpush1.msra.mxu0 %v2570
    %2613 = vmatprep.subr.mxu0 0.0
    %2614 = vmatpush2.msra.mxu0 0.0
    %2615 = vmatprep.subr.mxu0 0.0
    %2616 = vmatpush2.msra.mxu0 0.0
    %2617 = vmatprep.subr.mxu0 0.0
    %2618 = vmatpush2.msra.mxu0 0.0
    %2619 = vmatprep.subr.mxu0 0.0
    %2620 = vmatpush2.msra.mxu0 0.0
    %2621 = vmatprep.subr.mxu0 0.0
    %2622 = vmatpush2.msra.mxu0 0.0
    %2623 = vmatprep.subr.mxu0 0.0
    %2624 = vmatpush2.msra.mxu0 0.0
    %2625 = vmatprep.subr.mxu0 0.0
    %2626 = vmatpush2.msra.mxu0 0.0
    %2627 = vmatprep.subr.mxu0 0.0
    %2628 = vmatpush2.msra.mxu0 0.0
    %2629 = vmatprep.subr.mxu0 0.0
    %2630 = vmatpush2.msra.mxu0 0.0
    %2631 = vmatprep.subr.mxu0 0.0
    %2632 = vmatpush2.msra.mxu0 0.0
    %2633 = vmatprep.subr.mxu0 0.0
    %2634 = vmatpush2.msra.mxu0 0.0
    %2635 = vmatprep.subr.mxu0 0.0
    %2636 = vmatpush2.msra.mxu0 0.0
    %2637 = vmatprep.subr.mxu0 0.0
    %2638 = vmatpush2.msra.mxu0 0.0
    %2639 = vmatprep.subr.mxu0 0.0
    %2640 = vmatpush2.msra.mxu0 0.0
    %2641 = vmatprep.subr.mxu0 0.0
    %2642 = vmatpush2.msra.mxu0 0.0
    %2643 = vmatprep.subr.mxu0 0.0
    %2644 = vmatpush2.msra.mxu0 0.0
    %2645 = vmatprep.mubr.f32.mxu0 0.0
    %2646 = vmatmul.mubr.f32.gmra.mxu0 %v2576
    %v2647 = vpop.f32.mrf.mxu0
    %v2648 = vadd.f32 0.0, %v2647
    %v2649 = vpop.f32.mrf.mxu0
    %2650 = vmatprep.mubr.f32.mxu0 0.0
    %2651 = vmatmul.mubr.f32.gmra.mxu0 %v2579
    %v2652 = vpop.f32.mrf.mxu0
    %v2653 = vadd.f32 0.0, %v2652
    %v2654 = vpop.f32.mrf.mxu0
    %2655 = vdwg.mxu0
    %2657 = vrot.lane.b32.xlu0 %v113, 96
    %v2658 = vpop.permute.xlu0 %2657
    %v2661 = vsel %vm208, %v2648, 0
    %v2664 = vsel %vm208, %v2653, 0
    %2666 = vmatprep.subr.mxu0 0.0
    %2667 = vmatpush1.msra.mxu0 0.0
    %2668 = vmatprep.subr.mxu0 0.0
    %2669 = vmatpush1.msra.mxu0 0.0
    %2670 = vmatprep.subr.mxu0 0.0
    %2671 = vmatpush1.msra.mxu0 0.0
    %2672 = vmatprep.subr.mxu0 0.0
    %2673 = vmatpush1.msra.mxu0 0.0
    %2674 = vmatprep.subr.mxu0 0.0
    %2675 = vmatpush1.msra.mxu0 0.0
    %2676 = vmatprep.subr.mxu0 0.0
    %2677 = vmatpush1.msra.mxu0 0.0
    %2678 = vmatprep.subr.mxu0 0.0
    %2679 = vmatpush1.msra.mxu0 0.0
    %2680 = vmatprep.subr.mxu0 0.0
    %2681 = vmatpush1.msra.mxu0 0.0
    %2682 = vmatprep.subr.mxu0 0.0
    %2683 = vmatpush1.msra.mxu0 0.0
    %2684 = vmatprep.subr.mxu0 0.0
    %2685 = vmatpush1.msra.mxu0 0.0
    %2686 = vmatprep.subr.mxu0 0.0
    %2687 = vmatpush1.msra.mxu0 0.0
    %2688 = vmatprep.subr.mxu0 0.0
    %2689 = vmatpush1.msra.mxu0 0.0
    %2690 = vmatprep.subr.mxu0 0.0
    %2691 = vmatpush1.msra.mxu0 0.0
    %2692 = vmatprep.subr.mxu0 0.0
    %2693 = vmatpush1.msra.mxu0 0.0
    %2694 = vmatprep.subr.mxu0 0.0
    %2695 = vmatpush1.msra.mxu0 0.0
    %2696 = vmatprep.subr.mxu0 0.0
    %2697 = vmatpush1.msra.mxu0 %v2658
    %2698 = vmatprep.subr.mxu0 0.0
    %2699 = vmatpush2.msra.mxu0 0.0
    %2700 = vmatprep.subr.mxu0 0.0
    %2701 = vmatpush2.msra.mxu0 0.0
    %2702 = vmatprep.subr.mxu0 0.0
    %2703 = vmatpush2.msra.mxu0 0.0
    %2704 = vmatprep.subr.mxu0 0.0
    %2705 = vmatpush2.msra.mxu0 0.0
    %2706 = vmatprep.subr.mxu0 0.0
    %2707 = vmatpush2.msra.mxu0 0.0
    %2708 = vmatprep.subr.mxu0 0.0
    %2709 = vmatpush2.msra.mxu0 0.0
    %2710 = vmatprep.subr.mxu0 0.0
    %2711 = vmatpush2.msra.mxu0 0.0
    %2712 = vmatprep.subr.mxu0 0.0
    %2713 = vmatpush2.msra.mxu0 0.0
    %2714 = vmatprep.subr.mxu0 0.0
    %2715 = vmatpush2.msra.mxu0 0.0
    %2716 = vmatprep.subr.mxu0 0.0
    %2717 = vmatpush2.msra.mxu0 0.0
    %2718 = vmatprep.subr.mxu0 0.0
    %2719 = vmatpush2.msra.mxu0 0.0
    %2720 = vmatprep.subr.mxu0 0.0
    %2721 = vmatpush2.msra.mxu0 0.0
    %2722 = vmatprep.subr.mxu0 0.0
    %2723 = vmatpush2.msra.mxu0 0.0
    %2724 = vmatprep.subr.mxu0 0.0
    %2725 = vmatpush2.msra.mxu0 0.0
    %2726 = vmatprep.subr.mxu0 0.0
    %2727 = vmatpush2.msra.mxu0 0.0
    %2728 = vmatprep.subr.mxu0 0.0
    %2729 = vmatpush2.msra.mxu0 0.0
    %2730 = vmatprep.mubr.f32.mxu0 0.0
    %2731 = vmatmul.mubr.f32.gmra.mxu0 %v2661
    %v2732 = vpop.f32.mrf.mxu0
    %v2733 = vadd.f32 0.0, %v2732
    %v2734 = vpop.f32.mrf.mxu0
    %2735 = vmatprep.mubr.f32.mxu0 0.0
    %2736 = vmatmul.mubr.f32.gmra.mxu0 %v2664
    %v2737 = vpop.f32.mrf.mxu0
    %v2738 = vadd.f32 0.0, %v2737
    %v2739 = vpop.f32.mrf.mxu0
    %2740 = vdwg.mxu0
    %v2741 = vadd.f32 %v2450, %v2733
    %v2742 = vadd.f32 %v2451, %v2738
    %v2743 = vlaneseq
    %v2744 = vshrl.u32 %v2743, 7
    %v2745 = vsub.s32 4, %v2744
    %v2746 = vrot.slane %v114, %v2745
    %v2747 = vadd.f32 %v2741, %v2746
    %v2748 = vadd.f32 %v2742, %v2746
    %v2749 = vadd.f32 %v2747, %v1409
    %v2750 = vadd.f32 %v2748, %v1410
    %v2751 = vsel %vm120, %v2749, 0.0
    %2752 = vadd.xlane.f32.xlu0 %v2751
    %v2753 = vpop.xlane.xlu0 %2752
    %v2754 = vsel %vm120, %v2750, 0.0
    %2755 = vadd.xlane.f32.xlu0 %v2754
    %v2756 = vpop.xlane.xlu0 %2755
    %v2757 = vmul.f32 %v2753, %v1378
    %v2758 = vmul.f32 %v2756, %v1378
    %v2759 = vsub.f32 %v2749, %v2757
    %v2760 = vsub.f32 %v2750, %v2758
    %v2761 = vmul.f32 %v2759, %v2759
    %v2762 = vmul.f32 %v2760, %v2760
    %v2763 = vsel %vm120, %v2761, 0.0
    %2764 = vadd.xlane.f32.xlu0 %v2763
    %v2765 = vpop.xlane.xlu0 %2764
    %v2766 = vsel %vm120, %v2762, 0.0
    %2767 = vadd.xlane.f32.xlu0 %v2766
    %v2768 = vpop.xlane.xlu0 %2767
    %v2769 = vmul.f32 %v2765, %v1378
    %v2770 = vmul.f32 %v2768, %v1378
    %v2771 = vadd.f32 %v2769, 1e-05
    %v2772 = vadd.f32 %v2770, 1e-05
    %v2773 = vrsqrt.pop %v2771
    %v2774 = vrsqrt.pop %v2772
    %v2775 = vmul.f32 %v2759, %v2773
    %v2776 = vmul.f32 %v2760, %v2774
    %v2777 = vlaneseq
    %v2778 = vshrl.u32 %v2777, 7
    %v2779 = vsub.s32 1, %v2778
    %v2780 = vrot.slane %v115, %v2779
    %v2781 = vmul.f32 %v2775, %v2780
    %v2782 = vmul.f32 %v2776, %v2780
    %v2783 = vlaneseq
    %v2784 = vshrl.u32 %v2783, 7
    %v2785 = vsub.s32 2, %v2784
    %v2786 = vrot.slane %v115, %v2785
    %v2787 = vadd.f32 %v2781, %v2786
    %v2788 = vadd.f32 %v2782, %v2786
    %v2789 = vlaneseq
    %v2790 = vshrl.u32 %v2789, 7
    %v2791 = vsub.s32 5, %v2790
    %v2792 = vrot.slane %v114, %v2791
    %2793 = vrot.lane.b32.xlu0 %v107, 64
    %v2794 = vpop.permute.xlu0 %2793
    %2795 = vrot.lane.b32.xlu0 %v109, 64
    %v2796 = vpop.permute.xlu0 %2795
    %2797 = vrot.lane.b32.xlu0 %v111, 64
    %v2798 = vpop.permute.xlu0 %2797
    %2799 = vrot.lane.b32.xlu0 %v113, 64
    %v2800 = vpop.permute.xlu0 %2799
    %v2806 = vsel %vm120, %v2787, 0
    %v2809 = vsel %vm120, %v2788, 0
    %2811 = vmatprep.subr.mxu0 0.0
    %2812 = vmatpush1.msra.mxu0 0.0
    %2813 = vmatprep.subr.mxu0 0.0
    %2814 = vmatpush1.msra.mxu0 0.0
    %2815 = vmatprep.subr.mxu0 0.0
    %2816 = vmatpush1.msra.mxu0 0.0
    %2817 = vmatprep.subr.mxu0 0.0
    %2818 = vmatpush1.msra.mxu0 0.0
    %2819 = vmatprep.subr.mxu0 0.0
    %2820 = vmatpush1.msra.mxu0 0.0
    %2821 = vmatprep.subr.mxu0 0.0
    %2822 = vmatpush1.msra.mxu0 0.0
    %2823 = vmatprep.subr.mxu0 0.0
    %2824 = vmatpush1.msra.mxu0 0.0
    %2825 = vmatprep.subr.mxu0 0.0
    %2826 = vmatpush1.msra.mxu0 0.0
    %2827 = vmatprep.subr.mxu0 0.0
    %2828 = vmatpush1.msra.mxu0 0.0
    %2829 = vmatprep.subr.mxu0 0.0
    %2830 = vmatpush1.msra.mxu0 0.0
    %2831 = vmatprep.subr.mxu0 0.0
    %2832 = vmatpush1.msra.mxu0 0.0
    %2833 = vmatprep.subr.mxu0 0.0
    %2834 = vmatpush1.msra.mxu0 0.0
    %2835 = vmatprep.subr.mxu0 0.0
    %2836 = vmatpush1.msra.mxu0 %v2800
    %2837 = vmatprep.subr.mxu0 0.0
    %2838 = vmatpush1.msra.mxu0 %v2798
    %2839 = vmatprep.subr.mxu0 0.0
    %2840 = vmatpush1.msra.mxu0 %v2796
    %2841 = vmatprep.subr.mxu0 0.0
    %2842 = vmatpush1.msra.mxu0 %v2794
    %2843 = vmatprep.subr.mxu0 0.0
    %2844 = vmatpush2.msra.mxu0 0.0
    %2845 = vmatprep.subr.mxu0 0.0
    %2846 = vmatpush2.msra.mxu0 0.0
    %2847 = vmatprep.subr.mxu0 0.0
    %2848 = vmatpush2.msra.mxu0 0.0
    %2849 = vmatprep.subr.mxu0 0.0
    %2850 = vmatpush2.msra.mxu0 0.0
    %2851 = vmatprep.subr.mxu0 0.0
    %2852 = vmatpush2.msra.mxu0 0.0
    %2853 = vmatprep.subr.mxu0 0.0
    %2854 = vmatpush2.msra.mxu0 0.0
    %2855 = vmatprep.subr.mxu0 0.0
    %2856 = vmatpush2.msra.mxu0 0.0
    %2857 = vmatprep.subr.mxu0 0.0
    %2858 = vmatpush2.msra.mxu0 0.0
    %2859 = vmatprep.subr.mxu0 0.0
    %2860 = vmatpush2.msra.mxu0 0.0
    %2861 = vmatprep.subr.mxu0 0.0
    %2862 = vmatpush2.msra.mxu0 0.0
    %2863 = vmatprep.subr.mxu0 0.0
    %2864 = vmatpush2.msra.mxu0 0.0
    %2865 = vmatprep.subr.mxu0 0.0
    %2866 = vmatpush2.msra.mxu0 0.0
    %2867 = vmatprep.subr.mxu0 0.0
    %2868 = vmatpush2.msra.mxu0 0.0
    %2869 = vmatprep.subr.mxu0 0.0
    %2870 = vmatpush2.msra.mxu0 0.0
    %2871 = vmatprep.subr.mxu0 0.0
    %2872 = vmatpush2.msra.mxu0 0.0
    %2873 = vmatprep.subr.mxu0 0.0
    %2874 = vmatpush2.msra.mxu0 0.0
    %2875 = vmatprep.mubr.f32.mxu0 0.0
    %2876 = vmatmul.mubr.f32.gmra.mxu0 %v2806
    %v2877 = vpop.f32.mrf.mxu0
    %v2878 = vadd.f32 %v2792, %v2877
    %v2879 = vpop.f32.mrf.mxu0
    %2880 = vmatprep.mubr.f32.mxu0 0.0
    %2881 = vmatmul.mubr.f32.gmra.mxu0 %v2809
    %v2882 = vpop.f32.mrf.mxu0
    %v2883 = vadd.f32 %v2792, %v2882
    %v2884 = vpop.f32.mrf.mxu0
    %2885 = vdwg.mxu0
    %v2886 = vmax.f32 %v2878, 0.0
    %v2887 = vmax.f32 %v2883, 0.0
    %v2888 = vld [vmem:[%s6] sm:$0xff]
    %v2889 = vld [vmem:[%s6 + $0x8] sm:$0xff]
    %v2890 = vld [vmem:[%s6 + $0x10] sm:$0xff]
    %v2891 = vld [vmem:[%s6 + $0x18] sm:$0xff]
    %v2892 = vld [vmem:[%s6 + $0x20] sm:$0xff]
    %v2893 = vld [vmem:[%s6 + $0x28] sm:$0xff]
    %v2894 = vld [vmem:[%s6 + $0x30] sm:$0xff]
    %v2895 = vld [vmem:[%s6 + $0x38] sm:$0xff]
    %v2896 = vlaneseq
    %v2897 = vshrl.u32 %v2896, 7
    %v2898 = vsub.s32 6, %v2897
    %v2899 = vrot.slane %v114, %v2898
    %vm2900 = vcmask 523264
    %v2902 = vsel %vm2900, %v2886, 0
    %v2905 = vsel %vm2900, %v2887, 0
    %2907 = vmatprep.subr.mxu0 0.0
    %2908 = vmatpush1.msra.mxu0 0.0
    %2909 = vmatprep.subr.mxu0 0.0
    %2910 = vmatpush1.msra.mxu0 0.0
    %2911 = vmatprep.subr.mxu0 0.0
    %2912 = vmatpush1.msra.mxu0 0.0
    %2913 = vmatprep.subr.mxu0 0.0
    %2914 = vmatpush1.msra.mxu0 0.0
    %2915 = vmatprep.subr.mxu0 0.0
    %2916 = vmatpush1.msra.mxu0 0.0
    %2917 = vmatprep.subr.mxu0 0.0
    %2918 = vmatpush1.msra.mxu0 0.0
    %2919 = vmatprep.subr.mxu0 0.0
    %2920 = vmatpush1.msra.mxu0 0.0
    %2921 = vmatprep.subr.mxu0 0.0
    %2922 = vmatpush1.msra.mxu0 0.0
    %2923 = vmatprep.subr.mxu0 0.0
    %2924 = vmatpush1.msra.mxu0 %v2895
    %2925 = vmatprep.subr.mxu0 0.0
    %2926 = vmatpush1.msra.mxu0 %v2894
    %2927 = vmatprep.subr.mxu0 0.0
    %2928 = vmatpush1.msra.mxu0 %v2893
    %2929 = vmatprep.subr.mxu0 0.0
    %2930 = vmatpush1.msra.mxu0 %v2892
    %2931 = vmatprep.subr.mxu0 0.0
    %2932 = vmatpush1.msra.mxu0 %v2891
    %2933 = vmatprep.subr.mxu0 0.0
    %2934 = vmatpush1.msra.mxu0 %v2890
    %2935 = vmatprep.subr.mxu0 0.0
    %2936 = vmatpush1.msra.mxu0 %v2889
    %2937 = vmatprep.subr.mxu0 0.0
    %2938 = vmatpush1.msra.mxu0 %v2888
    %2939 = vmatprep.subr.mxu0 0.0
    %2940 = vmatpush2.msra.mxu0 0.0
    %2941 = vmatprep.subr.mxu0 0.0
    %2942 = vmatpush2.msra.mxu0 0.0
    %2943 = vmatprep.subr.mxu0 0.0
    %2944 = vmatpush2.msra.mxu0 0.0
    %2945 = vmatprep.subr.mxu0 0.0
    %2946 = vmatpush2.msra.mxu0 0.0
    %2947 = vmatprep.subr.mxu0 0.0
    %2948 = vmatpush2.msra.mxu0 0.0
    %2949 = vmatprep.subr.mxu0 0.0
    %2950 = vmatpush2.msra.mxu0 0.0
    %2951 = vmatprep.subr.mxu0 0.0
    %2952 = vmatpush2.msra.mxu0 0.0
    %2953 = vmatprep.subr.mxu0 0.0
    %2954 = vmatpush2.msra.mxu0 0.0
    %2955 = vmatprep.subr.mxu0 0.0
    %2956 = vmatpush2.msra.mxu0 0.0
    %2957 = vmatprep.subr.mxu0 0.0
    %2958 = vmatpush2.msra.mxu0 0.0
    %2959 = vmatprep.subr.mxu0 0.0
    %2960 = vmatpush2.msra.mxu0 0.0
    %2961 = vmatprep.subr.mxu0 0.0
    %2962 = vmatpush2.msra.mxu0 0.0
    %2963 = vmatprep.subr.mxu0 0.0
    %2964 = vmatpush2.msra.mxu0 0.0
    %2965 = vmatprep.subr.mxu0 0.0
    %2966 = vmatpush2.msra.mxu0 0.0
    %2967 = vmatprep.subr.mxu0 0.0
    %2968 = vmatpush2.msra.mxu0 0.0
    %2969 = vmatprep.subr.mxu0 0.0
    %2970 = vmatpush2.msra.mxu0 0.0
    %2971 = vmatprep.mubr.f32.mxu0 0.0
    %2972 = vmatmul.mubr.f32.gmra.mxu0 %v2902
    %v2973 = vpop.f32.mrf.mxu0
    %v2974 = vadd.f32 %v2899, %v2973
    %v2975 = vpop.f32.mrf.mxu0
    %2976 = vmatprep.mubr.f32.mxu0 0.0
    %2977 = vmatmul.mubr.f32.gmra.mxu0 %v2905
    %v2978 = vpop.f32.mrf.mxu0
    %v2979 = vadd.f32 %v2899, %v2978
    %v2980 = vpop.f32.mrf.mxu0
    %2981 = vdwg.mxu0
    %v2982 = vadd.f32 %v2974, %v2787
    %v2983 = vadd.f32 %v2979, %v2788
    %v2984 = vsel %vm120, %v2982, 0.0
    %2985 = vadd.xlane.f32.xlu0 %v2984
    %v2986 = vpop.xlane.xlu0 %2985
    %v2987 = vsel %vm120, %v2983, 0.0
    %2988 = vadd.xlane.f32.xlu0 %v2987
    %v2989 = vpop.xlane.xlu0 %2988
    %v2990 = vmul.f32 %v2986, %v1378
    %v2991 = vmul.f32 %v2989, %v1378
    %v2992 = vsub.f32 %v2982, %v2990
    %v2993 = vsub.f32 %v2983, %v2991
    %v2994 = vmul.f32 %v2992, %v2992
    %v2995 = vmul.f32 %v2993, %v2993
    %v2996 = vsel %vm120, %v2994, 0.0
    %2997 = vadd.xlane.f32.xlu0 %v2996
    %v2998 = vpop.xlane.xlu0 %2997
    %v2999 = vsel %vm120, %v2995, 0.0
    %3000 = vadd.xlane.f32.xlu0 %v2999
    %v3001 = vpop.xlane.xlu0 %3000
    %v3002 = vmul.f32 %v2998, %v1378
    %v3003 = vmul.f32 %v3001, %v1378
    %v3004 = vadd.f32 %v3002, 1e-05
    %v3005 = vadd.f32 %v3003, 1e-05
    %v3006 = vrsqrt.pop %v3004
    %v3007 = vrsqrt.pop %v3005
    %v3008 = vmul.f32 %v2992, %v3006
    %v3009 = vmul.f32 %v2993, %v3007
    %v3010 = vlaneseq
    %v3011 = vshrl.u32 %v3010, 7
    %v3012 = vsub.s32 3, %v3011
    %v3013 = vrot.slane %v115, %v3012
    %v3014 = vmul.f32 %v3008, %v3013
    %v3015 = vmul.f32 %v3009, %v3013
    %v3016 = vlaneseq
    %v3017 = vshrl.u32 %v3016, 7
    %v3018 = vsub.s32 4, %v3017
    %v3019 = vrot.slane %v115, %v3018
    %v3020 = vadd.f32 %v3014, %v3019
    %v3021 = vadd.f32 %v3015, %v3019
    %3022 = vst.msk [vmem:[#allocation11] sm:$0xff] %vm120, %v3020
    %3023 = vst.msk [vmem:[#allocation11 + $0x8] sm:$0xff] %vm120, %v3021
    // Predicated region
    $region54: #{tpu_custom_call.1} parent=1 // pred_check
      _
    $region55: #{tpu_custom_call.1} parent=1 // pred_check_branch
      %3025 = sbr.rel (0) target = $region57
    $region56: #{tpu_custom_call.1} parent=1 // pred_region
      %s3027 = ssub.s32 256, 256
      %3028 = vsyncadd [#allocation4], %s3027
      %s3029 = sshll.u32 [#allocation11], 4
      %s3030 = int_to_ptr.vmem [resolvable:$true] %s3029
      %3035 = dma.vmem_to_hbm [thread:$0]  %s3030, 256, %s8, [#allocation4], 128, 128, 8
    $region57: #{tpu_custom_call.1} parent=1 // pred_fallthru
      _
    // Predicated region
    $region58: #{tpu_custom_call.1} parent=1 // pred_check
      _
    $region59: #{tpu_custom_call.1} parent=1 // pred_check_branch
      %3037 = sbr.rel (0) target = $region61
    $region60: #{tpu_custom_call.1} parent=1 // pred_region
      %3038 = dma.done [#allocation4], 256
    $region61: #{tpu_custom_call.1} parent=1 // pred_fallthru
      _
    %3039 = vsyncpa [#allocation3], 1
    %3040 = vsyncpa [#allocation6], 1
    %3041 = vsyncpa [#allocation9], 1
    %3042 = vsyncpa [#allocation4], 1

</llo_original>
